<compile_context>
chip_gen: v5e
topology: v5e:2x2
jax: 0.10.0
libtpu: 0.0.40
codegen_flags: <defaults>
</compile_context>

<pallas_src>
import jax
import jax.numpy as jnp
from jax import lax
from jax.experimental import pallas as pl
from jax.experimental.pallas import tpu as pltpu


# ----------------------------------------------------------------------------
# Kernels
# ----------------------------------------------------------------------------
def _conv_relu_pool_kernel(p_ref, w_ref, b_ref, o_ref, row_ref):
    """Fused conv-as-GEMM + bias + ReLU + 2x2 stride-2 maxpool for one sample.

    p_ref  : (OH, OW, K)        bf16  im2col patches (K = C*kh*kw, (c,ki,kj) order)
    w_ref  : (K, OC)            bf16  flattened conv weight
    b_ref  : (1, OC)            f32   bias
    o_ref  : (OH//2, OW//2, OC) bf16  pooled output (NHWC layout per sample)
    row_ref: (OW, OC)           f32   VMEM scratch for one y-pooled conv row
    """
    oh, ow, _ = p_ref.shape
    ph, pw = oh // 2, ow // 2
    w = w_ref[...]
    bias = b_ref[...]
    # Bias-add and ReLU commute with max, so pool the raw accumulators first.
    for y2 in range(ph):  # static, fully unrolled
        a = jnp.dot(p_ref[2 * y2], w, preferred_element_type=jnp.float32)
        b = jnp.dot(p_ref[2 * y2 + 1], w, preferred_element_type=jnp.float32)
        row_ref[...] = jnp.maximum(a, b)                    # pool over y (f32)
        m = jnp.maximum(row_ref[pl.ds(0, pw, 2), :],        # pool over x via
                        row_ref[pl.ds(1, pw, 2), :])        # strided sublane loads
        o_ref[y2] = jnp.maximum(m + bias, 0.0).astype(o_ref.dtype)


def _mlp_kernel(x_ref, w1_ref, b1_ref, w2_ref, b2_ref, w3_ref, b3_ref, o_ref):
    """fc1 + sigmoid + fc2 + sigmoid + fc3, all weights resident in VMEM."""
    def sigmoid(v):  # divide goes to the EUP; epilogue stays f32
        return pl.reciprocal(1.0 + jnp.exp(-v), approx=True)

    x = x_ref[...]                                                # (TM, 400) bf16
    h = jnp.dot(x, w1_ref[...], preferred_element_type=jnp.float32) + b1_ref[...]
    h = sigmoid(h)
    h = jnp.dot(h.astype(jnp.bfloat16), w2_ref[...],
                preferred_element_type=jnp.float32) + b2_ref[...]
    h = sigmoid(h)
    h = jnp.dot(h.astype(jnp.bfloat16), w3_ref[...],
                preferred_element_type=jnp.float32) + b3_ref[...]
    o_ref[...] = h.astype(o_ref.dtype)


# ----------------------------------------------------------------------------
# Pallas wrappers
# ----------------------------------------------------------------------------
def conv_relu_pool(patches, w2d, bias):
    """patches [B, OH, OW, K] bf16, w2d [K, OC] bf16, bias [1, OC] f32
    -> pooled activations [B, OH//2, OW//2, OC] bf16 (NHWC)."""
    B, OH, OW, K = patches.shape
    OC = w2d.shape[1]
    PH, PW = OH // 2, OW // 2
    cost = pl.CostEstimate(
        flops=2 * B * OH * OW * K * OC,
        transcendentals=0,
        bytes_accessed=(B * OH * OW * K * 2 + K * OC * 2 + OC * 4
                        + B * PH * PW * OC * 2),
    )
    return pl.pallas_call(
        _conv_relu_pool_kernel,
        out_shape=jax.ShapeDtypeStruct((B, PH, PW, OC), jnp.bfloat16),
        grid=(B,),
        in_specs=[
            pl.BlockSpec((None, OH, OW, K), lambda b: (b, 0, 0, 0)),
            pl.BlockSpec((K, OC), lambda b: (0, 0)),
            pl.BlockSpec((1, OC), lambda b: (0, 0)),
        ],
        out_specs=pl.BlockSpec((None, PH, PW, OC), lambda b: (b, 0, 0, 0)),
        scratch_shapes=[pltpu.VMEM((OW, OC), jnp.float32)],
        compiler_params=pltpu.CompilerParams(
            dimension_semantics=("parallel",)),
        cost_estimate=cost,
    )(patches, w2d, bias)


def mlp_head(x, p):
    """x [B, 400] bf16 -> logits [B, 10] f32 (fc1+sigmoid+fc2+sigmoid+fc3)."""
    B, K = x.shape
    TM = B if B <= 256 else 256          # row tile; bounds per-step VMEM
    Bp = -(-B // TM) * TM
    if Bp != B:
        x = jnp.pad(x, ((0, Bp - B), (0, 0)))
    w1, b1 = p["fc1_w"], p["fc1_b"]
    w2, b2 = p["fc2_w"], p["fc2_b"]
    w3, b3 = p["fc3_w"], p["fc3_b"]
    N = w3.shape[1]
    cost = pl.CostEstimate(
        flops=2 * Bp * (w1.shape[0] * w1.shape[1] + w2.shape[0] * w2.shape[1]
                        + w3.shape[0] * w3.shape[1]),
        transcendentals=Bp * (w1.shape[1] + w2.shape[1]),
        bytes_accessed=(x.size * 2 + (w1.size + w2.size + w3.size) * 2
                        + (b1.size + b2.size + b3.size) * 4 + Bp * N * 4),
    )
    out = pl.pallas_call(
        _mlp_kernel,
        out_shape=jax.ShapeDtypeStruct((Bp, N), jnp.float32),
        grid=(Bp // TM,),
        in_specs=[
            pl.BlockSpec((TM, K), lambda i: (i, 0)),
            pl.BlockSpec(w1.shape, lambda i: (0, 0)),
            pl.BlockSpec(b1.shape, lambda i: (0, 0)),
            pl.BlockSpec(w2.shape, lambda i: (0, 0)),
            pl.BlockSpec(b2.shape, lambda i: (0, 0)),
            pl.BlockSpec(w3.shape, lambda i: (0, 0)),
            pl.BlockSpec(b3.shape, lambda i: (0, 0)),
        ],
        out_specs=pl.BlockSpec((TM, N), lambda i: (i, 0)),
        compiler_params=pltpu.CompilerParams(
            dimension_semantics=("parallel",)),
        cost_estimate=cost,
    )(x, w1, b1, w2, b2, w3, b3)
    return out[:B]


# ----------------------------------------------------------------------------
# Parameters
# ----------------------------------------------------------------------------
def init_params(key):
    """LeNet5 parameters, PyTorch-default-style uniform init (OIHW / [out,in])."""
    def uniform(k, shape, fan_in):
        bound = 1.0 / jnp.sqrt(jnp.float32(fan_in))
        return jax.random.uniform(k, shape, jnp.float32, -bound, bound)

    ks = jax.random.split(key, 10)
    return {
        "conv1_w": uniform(ks[0], (6, 1, 5, 5), 25),
        "conv1_b": uniform(ks[1], (6,), 25),
        "conv2_w": uniform(ks[2], (16, 6, 5, 5), 150),
        "conv2_b": uniform(ks[3], (16,), 150),
        "fc1_w": uniform(ks[4], (120, 400), 400),
        "fc1_b": uniform(ks[5], (120,), 400),
        "fc2_w": uniform(ks[6], (84, 120), 120),
        "fc2_b": uniform(ks[7], (84,), 120),
        "fc3_w": uniform(ks[8], (10, 84), 84),
        "fc3_b": uniform(ks[9], (10,), 84),
    }


def prepare_params(p):
    """One-time weight re-layout (outside the jitted forward):
       * conv weights -> [C*kh*kw, OC], matching the (c, ki, kj) feature order
         produced by lax.conv_general_dilated_patches,
       * fc weights -> [in, out]; PyTorch's (c, y, x) flatten order is folded
         into fc1's columns (our activations flatten as (y, x, c)),
       * matmul operands cast to bf16, biases kept in f32 as [1, N]."""
    bf16, f32 = jnp.bfloat16, jnp.float32
    fc1 = (p["fc1_w"].reshape(120, 16, 5, 5)   # [out, c, y, x]
           .transpose(2, 3, 1, 0)              # [y, x, c, out]
           .reshape(400, 120))
    return {
        "conv1_w": p["conv1_w"].reshape(6, 25).T.astype(bf16),      # (25, 6)
        "conv1_b": p["conv1_b"].reshape(1, 6).astype(f32),
        "conv2_w": p["conv2_w"].reshape(16, 150).T.astype(bf16),    # (150, 16)
        "conv2_b": p["conv2_b"].reshape(1, 16).astype(f32),
        "fc1_w": fc1.astype(bf16),                                  # (400, 120)
        "fc1_b": p["fc1_b"].reshape(1, 120).astype(f32),
        "fc2_w": p["fc2_w"].T.astype(bf16),                         # (120, 84)
        "fc2_b": p["fc2_b"].reshape(1, 84).astype(f32),
        "fc3_w": p["fc3_w"].T.astype(bf16),                         # (84, 10)
        "fc3_b": p["fc3_b"].reshape(1, 10).astype(f32),
    }


# ----------------------------------------------------------------------------
# LeNet5 forward
# ----------------------------------------------------------------------------
def lenet5_forward(prep, x):
    """x: [B, 1, 28, 28] f32 (NCHW, like PyTorch). Returns [B, 10] f32 logits."""
    B = x.shape[0]
    # C == 1, so NCHW -> NHWC is a pure reshape (no transpose).
    x = x.astype(jnp.bfloat16).reshape(B, 28, 28, 1)

    # conv1 block: one-op patch extraction + fused GEMM/bias/ReLU/pool kernel.
    patches = lax.conv_general_dilated_patches(
        x, filter_shape=(5, 5), window_strides=(1, 1),
        padding=((2, 2), (2, 2)),
        dimension_numbers=("NHWC", "HWIO", "NHWC"))              # [B, 28, 28, 25]
    h = conv_relu_pool(patches, prep["conv1_w"], prep["conv1_b"])  # [B, 14, 14, 6]

    # conv2 block.
    patches = lax.conv_general_dilated_patches(
        h, filter_shape=(5, 5), window_strides=(1, 1), padding="VALID",
        dimension_numbers=("NHWC", "HWIO", "NHWC"))              # [B, 10, 10, 150]
    h = conv_relu_pool(patches, prep["conv2_w"], prep["conv2_b"])  # [B, 5, 5, 16]

    # Flatten in (y, x, c) order; fc1's columns were permuted at init so this is
    # equivalent to PyTorch's x.view(B, C*H*W) flatten.
    h = h.reshape(B, 400)

    # fc1 + sigmoid + fc2 + sigmoid + fc3 fused.
    return mlp_head(h, prep)


if __name__ == "__main__":
    key = jax.random.PRNGKey(0)
    pkey, xkey = jax.random.split(key)
    params = init_params(pkey)
    prep = prepare_params(params)        # one-time re-layout, outside jit
    # LeNet5's fc1 (400 = 16*5*5) implies a 28x28 single-channel input.
    x = jax.random.normal(xkey, (2, 1, 28, 28), jnp.float32)

    fwd = jax.jit(lenet5_forward)
    out = jax.block_until_ready(fwd(prep, x))
    assert out.shape == (2, 10), out.shape
    assert bool(jnp.all(jnp.isfinite(out)))
    print("KERNEL_OK")
</pallas_src>

<mosaic_0001>
module attributes {stable_mosaic.version = 11 : i64} {
  func.func @_conv_relu_pool_kernel(%arg0: i32, %arg1: memref<1x28x28x25xbf16, #tpu.memory_space<vmem>>, %arg2: memref<25x6xbf16, #tpu.memory_space<vmem>>, %arg3: memref<1x6xf32, #tpu.memory_space<vmem>>, %arg4: memref<1x14x14x6xbf16, #tpu.memory_space<vmem>>, %arg5: memref<28x6xf32, #tpu.memory_space<vmem>>) attributes {dimension_semantics = [#tpu.dimension_semantics<parallel>], iteration_bounds = array<i64: 2>, scalar_prefetch = 0 : i64, scratch_operands = 1 : i64, tpu.core_type = #tpu.core_type<tc>, window_params = [{transform_indices = @transform_0, window_bounds = array<i64: 1, 28, 28, 25>}, {pipeline_mode = #tpu.pipeline_mode<synchronous>, transform_indices = @transform_1, window_bounds = array<i64: 25, 6>}, {pipeline_mode = #tpu.pipeline_mode<synchronous>, transform_indices = @transform_2, window_bounds = array<i64: 1, 6>}, {transform_indices = @transform_3, window_bounds = array<i64: 1, 14, 14, 6>}]} {
    %c0 = arith.constant 0 : index
    %c0_0 = arith.constant 0 : index
    %0 = vector.load %arg2[%c0, %c0_0] : memref<25x6xbf16, #tpu.memory_space<vmem>>, vector<25x6xbf16>
    %c0_1 = arith.constant 0 : index
    %c0_2 = arith.constant 0 : index
    %1 = vector.load %arg3[%c0_1, %c0_2] : memref<1x6xf32, #tpu.memory_space<vmem>>, vector<1x6xf32>
    %c0_3 = arith.constant 0 : index
    %c0_4 = arith.constant 0 : index
    %c0_5 = arith.constant 0 : index
    %c0_6 = arith.constant 0 : index
    %2 = vector.load %arg1[%c0_3, %c0_4, %c0_5, %c0_6] : memref<1x28x28x25xbf16, #tpu.memory_space<vmem>>, vector<1x1x28x25xbf16>
    %3 = vector.shape_cast %2 : vector<1x1x28x25xbf16> to vector<28x25xbf16>
    %cst = arith.constant dense<0.000000e+00> : vector<28x6xf32>
    %4 = tpu.matmul %3, %0, %cst {dimension_numbers = #tpu.dot_dimension_numbers<[1], [0], [0], [1], [0, 0, 1, 1], [], []>} : vector<28x25xbf16>, vector<25x6xbf16>, vector<28x6xf32> -> vector<28x6xf32>
    %c0_7 = arith.constant 0 : index
    %c1 = arith.constant 1 : index
    %c0_8 = arith.constant 0 : index
    %c0_9 = arith.constant 0 : index
    %5 = vector.load %arg1[%c0_7, %c1, %c0_8, %c0_9] : memref<1x28x28x25xbf16, #tpu.memory_space<vmem>>, vector<1x1x28x25xbf16>
    %6 = vector.shape_cast %5 : vector<1x1x28x25xbf16> to vector<28x25xbf16>
    %cst_10 = arith.constant dense<0.000000e+00> : vector<28x6xf32>
    %7 = tpu.matmul %6, %0, %cst_10 {dimension_numbers = #tpu.dot_dimension_numbers<[1], [0], [0], [1], [0, 0, 1, 1], [], []>} : vector<28x25xbf16>, vector<25x6xbf16>, vector<28x6xf32> -> vector<28x6xf32>
    %8 = arith.maximumf %4, %7 : vector<28x6xf32>
    %c0_11 = arith.constant 0 : index
    %c0_12 = arith.constant 0 : index
    %9 = vector.load %arg5[%c0_11, %c0_12] : memref<28x6xf32, #tpu.memory_space<vmem>>, vector<28x6xf32>
    tpu.vector_store %arg5[%c0_11, %c0_12], %8 {strides = array<i32>} : memref<28x6xf32, #tpu.memory_space<vmem>>, vector<28x6xf32>,
    %c0_13 = arith.constant 0 : index
    %c0_14 = arith.constant 0 : index
    %10 = tpu.strided_load %arg5[%c0_13, %c0_14] {strides = array<i32: 2, 1>} : memref<28x6xf32, #tpu.memory_space<vmem>>, vector<14x6xf32>
    %c1_15 = arith.constant 1 : index
    %c0_16 = arith.constant 0 : index
    %11 = tpu.strided_load %arg5[%c1_15, %c0_16] {strides = array<i32: 2, 1>} : memref<28x6xf32, #tpu.memory_space<vmem>>, vector<14x6xf32>
    %12 = arith.maximumf %10, %11 : vector<14x6xf32>
    %13 = vector.broadcast %1 : vector<1x6xf32> to vector<14x6xf32>
    %14 = arith.addf %12, %13 : vector<14x6xf32>
    %cst_17 = arith.constant 0.000000e+00 : f32
    %15 = vector.broadcast %cst_17 : f32 to vector<14x6xf32>
    %16 = arith.maximumf %14, %15 : vector<14x6xf32>
    %17 = arith.truncf %16 : vector<14x6xf32> to vector<14x6xbf16>
    %c0_18 = arith.constant 0 : index
    %c0_19 = arith.constant 0 : index
    %c0_20 = arith.constant 0 : index
    %c0_21 = arith.constant 0 : index
    %18 = vector.load %arg4[%c0_18, %c0_19, %c0_20, %c0_21] : memref<1x14x14x6xbf16, #tpu.memory_space<vmem>>, vector<1x1x14x6xbf16>
    %19 = vector.shape_cast %18 : vector<1x1x14x6xbf16> to vector<14x6xbf16>
    %20 = vector.shape_cast %17 : vector<14x6xbf16> to vector<1x1x14x6xbf16>
    tpu.vector_store %arg4[%c0_18, %c0_19, %c0_20, %c0_21], %20 {strides = array<i32>} : memref<1x14x14x6xbf16, #tpu.memory_space<vmem>>, vector<1x1x14x6xbf16>,
    %c0_22 = arith.constant 0 : index
    %c2 = arith.constant 2 : index
    %c0_23 = arith.constant 0 : index
    %c0_24 = arith.constant 0 : index
    %21 = vector.load %arg1[%c0_22, %c2, %c0_23, %c0_24] : memref<1x28x28x25xbf16, #tpu.memory_space<vmem>>, vector<1x1x28x25xbf16>
    %22 = vector.shape_cast %21 : vector<1x1x28x25xbf16> to vector<28x25xbf16>
    %cst_25 = arith.constant dense<0.000000e+00> : vector<28x6xf32>
    %23 = tpu.matmul %22, %0, %cst_25 {dimension_numbers = #tpu.dot_dimension_numbers<[1], [0], [0], [1], [0, 0, 1, 1], [], []>} : vector<28x25xbf16>, vector<25x6xbf16>, vector<28x6xf32> -> vector<28x6xf32>
    %c0_26 = arith.constant 0 : index
    %c3 = arith.constant 3 : index
    %c0_27 = arith.constant 0 : index
    %c0_28 = arith.constant 0 : index
    %24 = vector.load %arg1[%c0_26, %c3, %c0_27, %c0_28] : memref<1x28x28x25xbf16, #tpu.memory_space<vmem>>, vector<1x1x28x25xbf16>
    %25 = vector.shape_cast %24 : vector<1x1x28x25xbf16> to vector<28x25xbf16>
    %cst_29 = arith.constant dense<0.000000e+00> : vector<28x6xf32>
    %26 = tpu.matmul %25, %0, %cst_29 {dimension_numbers = #tpu.dot_dimension_numbers<[1], [0], [0], [1], [0, 0, 1, 1], [], []>} : vector<28x25xbf16>, vector<25x6xbf16>, vector<28x6xf32> -> vector<28x6xf32>
    %27 = arith.maximumf %23, %26 : vector<28x6xf32>
    %c0_30 = arith.constant 0 : index
    %c0_31 = arith.constant 0 : index
    %28 = vector.load %arg5[%c0_30, %c0_31] : memref<28x6xf32, #tpu.memory_space<vmem>>, vector<28x6xf32>
    tpu.vector_store %arg5[%c0_30, %c0_31], %27 {strides = array<i32>} : memref<28x6xf32, #tpu.memory_space<vmem>>, vector<28x6xf32>,
    %c0_32 = arith.constant 0 : index
    %c0_33 = arith.constant 0 : index
    %29 = tpu.strided_load %arg5[%c0_32, %c0_33] {strides = array<i32: 2, 1>} : memref<28x6xf32, #tpu.memory_space<vmem>>, vector<14x6xf32>
    %c1_34 = arith.constant 1 : index
    %c0_35 = arith.constant 0 : index
    %30 = tpu.strided_load %arg5[%c1_34, %c0_35] {strides = array<i32: 2, 1>} : memref<28x6xf32, #tpu.memory_space<vmem>>, vector<14x6xf32>
    %31 = arith.maximumf %29, %30 : vector<14x6xf32>
    %32 = vector.broadcast %1 : vector<1x6xf32> to vector<14x6xf32>
    %33 = arith.addf %31, %32 : vector<14x6xf32>
    %cst_36 = arith.constant 0.000000e+00 : f32
    %34 = vector.broadcast %cst_36 : f32 to vector<14x6xf32>
    %35 = arith.maximumf %33, %34 : vector<14x6xf32>
    %36 = arith.truncf %35 : vector<14x6xf32> to vector<14x6xbf16>
    %c0_37 = arith.constant 0 : index
    %c1_38 = arith.constant 1 : index
    %c0_39 = arith.constant 0 : index
    %c0_40 = arith.constant 0 : index
    %37 = vector.load %arg4[%c0_37, %c1_38, %c0_39, %c0_40] : memref<1x14x14x6xbf16, #tpu.memory_space<vmem>>, vector<1x1x14x6xbf16>
    %38 = vector.shape_cast %37 : vector<1x1x14x6xbf16> to vector<14x6xbf16>
    %39 = vector.shape_cast %36 : vector<14x6xbf16> to vector<1x1x14x6xbf16>
    tpu.vector_store %arg4[%c0_37, %c1_38, %c0_39, %c0_40], %39 {strides = array<i32>} : memref<1x14x14x6xbf16, #tpu.memory_space<vmem>>, vector<1x1x14x6xbf16>,
    %c0_41 = arith.constant 0 : index
    %c4 = arith.constant 4 : index
    %c0_42 = arith.constant 0 : index
    %c0_43 = arith.constant 0 : index
    %40 = vector.load %arg1[%c0_41, %c4, %c0_42, %c0_43] : memref<1x28x28x25xbf16, #tpu.memory_space<vmem>>, vector<1x1x28x25xbf16>
    %41 = vector.shape_cast %40 : vector<1x1x28x25xbf16> to vector<28x25xbf16>
    %cst_44 = arith.constant dense<0.000000e+00> : vector<28x6xf32>
    %42 = tpu.matmul %41, %0, %cst_44 {dimension_numbers = #tpu.dot_dimension_numbers<[1], [0], [0], [1], [0, 0, 1, 1], [], []>} : vector<28x25xbf16>, vector<25x6xbf16>, vector<28x6xf32> -> vector<28x6xf32>
    %c0_45 = arith.constant 0 : index
    %c5 = arith.constant 5 : index
    %c0_46 = arith.constant 0 : index
    %c0_47 = arith.constant 0 : index
    %43 = vector.load %arg1[%c0_45, %c5, %c0_46, %c0_47] : memref<1x28x28x25xbf16, #tpu.memory_space<vmem>>, vector<1x1x28x25xbf16>
    %44 = vector.shape_cast %43 : vector<1x1x28x25xbf16> to vector<28x25xbf16>
    %cst_48 = arith.constant dense<0.000000e+00> : vector<28x6xf32>
    %45 = tpu.matmul %44, %0, %cst_48 {dimension_numbers = #tpu.dot_dimension_numbers<[1], [0], [0], [1], [0, 0, 1, 1], [], []>} : vector<28x25xbf16>, vector<25x6xbf16>, vector<28x6xf32> -> vector<28x6xf32>
    %46 = arith.maximumf %42, %45 : vector<28x6xf32>
    %c0_49 = arith.constant 0 : index
    %c0_50 = arith.constant 0 : index
    %47 = vector.load %arg5[%c0_49, %c0_50] : memref<28x6xf32, #tpu.memory_space<vmem>>, vector<28x6xf32>
    tpu.vector_store %arg5[%c0_49, %c0_50], %46 {strides = array<i32>} : memref<28x6xf32, #tpu.memory_space<vmem>>, vector<28x6xf32>,
    %c0_51 = arith.constant 0 : index
    %c0_52 = arith.constant 0 : index
    %48 = tpu.strided_load %arg5[%c0_51, %c0_52] {strides = array<i32: 2, 1>} : memref<28x6xf32, #tpu.memory_space<vmem>>, vector<14x6xf32>
    %c1_53 = arith.constant 1 : index
    %c0_54 = arith.constant 0 : index
    %49 = tpu.strided_load %arg5[%c1_53, %c0_54] {strides = array<i32: 2, 1>} : memref<28x6xf32, #tpu.memory_space<vmem>>, vector<14x6xf32>
    %50 = arith.maximumf %48, %49 : vector<14x6xf32>
    %51 = vector.broadcast %1 : vector<1x6xf32> to vector<14x6xf32>
    %52 = arith.addf %50, %51 : vector<14x6xf32>
    %cst_55 = arith.constant 0.000000e+00 : f32
    %53 = vector.broadcast %cst_55 : f32 to vector<14x6xf32>
    %54 = arith.maximumf %52, %53 : vector<14x6xf32>
    %55 = arith.truncf %54 : vector<14x6xf32> to vector<14x6xbf16>
    %c0_56 = arith.constant 0 : index
    %c2_57 = arith.constant 2 : index
    %c0_58 = arith.constant 0 : index
    %c0_59 = arith.constant 0 : index
    %56 = vector.load %arg4[%c0_56, %c2_57, %c0_58, %c0_59] : memref<1x14x14x6xbf16, #tpu.memory_space<vmem>>, vector<1x1x14x6xbf16>
    %57 = vector.shape_cast %56 : vector<1x1x14x6xbf16> to vector<14x6xbf16>
    %58 = vector.shape_cast %55 : vector<14x6xbf16> to vector<1x1x14x6xbf16>
    tpu.vector_store %arg4[%c0_56, %c2_57, %c0_58, %c0_59], %58 {strides = array<i32>} : memref<1x14x14x6xbf16, #tpu.memory_space<vmem>>, vector<1x1x14x6xbf16>,
    %c0_60 = arith.constant 0 : index
    %c6 = arith.constant 6 : index
    %c0_61 = arith.constant 0 : index
    %c0_62 = arith.constant 0 : index
    %59 = vector.load %arg1[%c0_60, %c6, %c0_61, %c0_62] : memref<1x28x28x25xbf16, #tpu.memory_space<vmem>>, vector<1x1x28x25xbf16>
    %60 = vector.shape_cast %59 : vector<1x1x28x25xbf16> to vector<28x25xbf16>
    %cst_63 = arith.constant dense<0.000000e+00> : vector<28x6xf32>
    %61 = tpu.matmul %60, %0, %cst_63 {dimension_numbers = #tpu.dot_dimension_numbers<[1], [0], [0], [1], [0, 0, 1, 1], [], []>} : vector<28x25xbf16>, vector<25x6xbf16>, vector<28x6xf32> -> vector<28x6xf32>
    %c0_64 = arith.constant 0 : index
    %c7 = arith.constant 7 : index
    %c0_65 = arith.constant 0 : index
    %c0_66 = arith.constant 0 : index
    %62 = vector.load %arg1[%c0_64, %c7, %c0_65, %c0_66] : memref<1x28x28x25xbf16, #tpu.memory_space<vmem>>, vector<1x1x28x25xbf16>
    %63 = vector.shape_cast %62 : vector<1x1x28x25xbf16> to vector<28x25xbf16>
    %cst_67 = arith.constant dense<0.000000e+00> : vector<28x6xf32>
    %64 = tpu.matmul %63, %0, %cst_67 {dimension_numbers = #tpu.dot_dimension_numbers<[1], [0], [0], [1], [0, 0, 1, 1], [], []>} : vector<28x25xbf16>, vector<25x6xbf16>, vector<28x6xf32> -> vector<28x6xf32>
    %65 = arith.maximumf %61, %64 : vector<28x6xf32>
    %c0_68 = arith.constant 0 : index
    %c0_69 = arith.constant 0 : index
    %66 = vector.load %arg5[%c0_68, %c0_69] : memref<28x6xf32, #tpu.memory_space<vmem>>, vector<28x6xf32>
    tpu.vector_store %arg5[%c0_68, %c0_69], %65 {strides = array<i32>} : memref<28x6xf32, #tpu.memory_space<vmem>>, vector<28x6xf32>,
    %c0_70 = arith.constant 0 : index
    %c0_71 = arith.constant 0 : index
    %67 = tpu.strided_load %arg5[%c0_70, %c0_71] {strides = array<i32: 2, 1>} : memref<28x6xf32, #tpu.memory_space<vmem>>, vector<14x6xf32>
    %c1_72 = arith.constant 1 : index
    %c0_73 = arith.constant 0 : index
    %68 = tpu.strided_load %arg5[%c1_72, %c0_73] {strides = array<i32: 2, 1>} : memref<28x6xf32, #tpu.memory_space<vmem>>, vector<14x6xf32>
    %69 = arith.maximumf %67, %68 : vector<14x6xf32>
    %70 = vector.broadcast %1 : vector<1x6xf32> to vector<14x6xf32>
    %71 = arith.addf %69, %70 : vector<14x6xf32>
    %cst_74 = arith.constant 0.000000e+00 : f32
    %72 = vector.broadcast %cst_74 : f32 to vector<14x6xf32>
    %73 = arith.maximumf %71, %72 : vector<14x6xf32>
    %74 = arith.truncf %73 : vector<14x6xf32> to vector<14x6xbf16>
    %c0_75 = arith.constant 0 : index
    %c3_76 = arith.constant 3 : index
    %c0_77 = arith.constant 0 : index
    %c0_78 = arith.constant 0 : index
    %75 = vector.load %arg4[%c0_75, %c3_76, %c0_77, %c0_78] : memref<1x14x14x6xbf16, #tpu.memory_space<vmem>>, vector<1x1x14x6xbf16>
    %76 = vector.shape_cast %75 : vector<1x1x14x6xbf16> to vector<14x6xbf16>
    %77 = vector.shape_cast %74 : vector<14x6xbf16> to vector<1x1x14x6xbf16>
    tpu.vector_store %arg4[%c0_75, %c3_76, %c0_77, %c0_78], %77 {strides = array<i32>} : memref<1x14x14x6xbf16, #tpu.memory_space<vmem>>, vector<1x1x14x6xbf16>,
    %c0_79 = arith.constant 0 : index
    %c8 = arith.constant 8 : index
    %c0_80 = arith.constant 0 : index
    %c0_81 = arith.constant 0 : index
    %78 = vector.load %arg1[%c0_79, %c8, %c0_80, %c0_81] : memref<1x28x28x25xbf16, #tpu.memory_space<vmem>>, vector<1x1x28x25xbf16>
    %79 = vector.shape_cast %78 : vector<1x1x28x25xbf16> to vector<28x25xbf16>
    %cst_82 = arith.constant dense<0.000000e+00> : vector<28x6xf32>
    %80 = tpu.matmul %79, %0, %cst_82 {dimension_numbers = #tpu.dot_dimension_numbers<[1], [0], [0], [1], [0, 0, 1, 1], [], []>} : vector<28x25xbf16>, vector<25x6xbf16>, vector<28x6xf32> -> vector<28x6xf32>
    %c0_83 = arith.constant 0 : index
    %c9 = arith.constant 9 : index
    %c0_84 = arith.constant 0 : index
    %c0_85 = arith.constant 0 : index
    %81 = vector.load %arg1[%c0_83, %c9, %c0_84, %c0_85] : memref<1x28x28x25xbf16, #tpu.memory_space<vmem>>, vector<1x1x28x25xbf16>
    %82 = vector.shape_cast %81 : vector<1x1x28x25xbf16> to vector<28x25xbf16>
    %cst_86 = arith.constant dense<0.000000e+00> : vector<28x6xf32>
    %83 = tpu.matmul %82, %0, %cst_86 {dimension_numbers = #tpu.dot_dimension_numbers<[1], [0], [0], [1], [0, 0, 1, 1], [], []>} : vector<28x25xbf16>, vector<25x6xbf16>, vector<28x6xf32> -> vector<28x6xf32>
    %84 = arith.maximumf %80, %83 : vector<28x6xf32>
    %c0_87 = arith.constant 0 : index
    %c0_88 = arith.constant 0 : index
    %85 = vector.load %arg5[%c0_87, %c0_88] : memref<28x6xf32, #tpu.memory_space<vmem>>, vector<28x6xf32>
    tpu.vector_store %arg5[%c0_87, %c0_88], %84 {strides = array<i32>} : memref<28x6xf32, #tpu.memory_space<vmem>>, vector<28x6xf32>,
    %c0_89 = arith.constant 0 : index
    %c0_90 = arith.constant 0 : index
    %86 = tpu.strided_load %arg5[%c0_89, %c0_90] {strides = array<i32: 2, 1>} : memref<28x6xf32, #tpu.memory_space<vmem>>, vector<14x6xf32>
    %c1_91 = arith.constant 1 : index
    %c0_92 = arith.constant 0 : index
    %87 = tpu.strided_load %arg5[%c1_91, %c0_92] {strides = array<i32: 2, 1>} : memref<28x6xf32, #tpu.memory_space<vmem>>, vector<14x6xf32>
    %88 = arith.maximumf %86, %87 : vector<14x6xf32>
    %89 = vector.broadcast %1 : vector<1x6xf32> to vector<14x6xf32>
    %90 = arith.addf %88, %89 : vector<14x6xf32>
    %cst_93 = arith.constant 0.000000e+00 : f32
    %91 = vector.broadcast %cst_93 : f32 to vector<14x6xf32>
    %92 = arith.maximumf %90, %91 : vector<14x6xf32>
    %93 = arith.truncf %92 : vector<14x6xf32> to vector<14x6xbf16>
    %c0_94 = arith.constant 0 : index
    %c4_95 = arith.constant 4 : index
    %c0_96 = arith.constant 0 : index
    %c0_97 = arith.constant 0 : index
    %94 = vector.load %arg4[%c0_94, %c4_95, %c0_96, %c0_97] : memref<1x14x14x6xbf16, #tpu.memory_space<vmem>>, vector<1x1x14x6xbf16>
    %95 = vector.shape_cast %94 : vector<1x1x14x6xbf16> to vector<14x6xbf16>
    %96 = vector.shape_cast %93 : vector<14x6xbf16> to vector<1x1x14x6xbf16>
    tpu.vector_store %arg4[%c0_94, %c4_95, %c0_96, %c0_97], %96 {strides = array<i32>} : memref<1x14x14x6xbf16, #tpu.memory_space<vmem>>, vector<1x1x14x6xbf16>,
    %c0_98 = arith.constant 0 : index
    %c10 = arith.constant 10 : index
    %c0_99 = arith.constant 0 : index
    %c0_100 = arith.constant 0 : index
    %97 = vector.load %arg1[%c0_98, %c10, %c0_99, %c0_100] : memref<1x28x28x25xbf16, #tpu.memory_space<vmem>>, vector<1x1x28x25xbf16>
    %98 = vector.shape_cast %97 : vector<1x1x28x25xbf16> to vector<28x25xbf16>
    %cst_101 = arith.constant dense<0.000000e+00> : vector<28x6xf32>
    %99 = tpu.matmul %98, %0, %cst_101 {dimension_numbers = #tpu.dot_dimension_numbers<[1], [0], [0], [1], [0, 0, 1, 1], [], []>} : vector<28x25xbf16>, vector<25x6xbf16>, vector<28x6xf32> -> vector<28x6xf32>
    %c0_102 = arith.constant 0 : index
    %c11 = arith.constant 11 : index
    %c0_103 = arith.constant 0 : index
    %c0_104 = arith.constant 0 : index
    %100 = vector.load %arg1[%c0_102, %c11, %c0_103, %c0_104] : memref<1x28x28x25xbf16, #tpu.memory_space<vmem>>, vector<1x1x28x25xbf16>
    %101 = vector.shape_cast %100 : vector<1x1x28x25xbf16> to vector<28x25xbf16>
    %cst_105 = arith.constant dense<0.000000e+00> : vector<28x6xf32>
    %102 = tpu.matmul %101, %0, %cst_105 {dimension_numbers = #tpu.dot_dimension_numbers<[1], [0], [0], [1], [0, 0, 1, 1], [], []>} : vector<28x25xbf16>, vector<25x6xbf16>, vector<28x6xf32> -> vector<28x6xf32>
    %103 = arith.maximumf %99, %102 : vector<28x6xf32>
    %c0_106 = arith.constant 0 : index
    %c0_107 = arith.constant 0 : index
    %104 = vector.load %arg5[%c0_106, %c0_107] : memref<28x6xf32, #tpu.memory_space<vmem>>, vector<28x6xf32>
    tpu.vector_store %arg5[%c0_106, %c0_107], %103 {strides = array<i32>} : memref<28x6xf32, #tpu.memory_space<vmem>>, vector<28x6xf32>,
    %c0_108 = arith.constant 0 : index
    %c0_109 = arith.constant 0 : index
    %105 = tpu.strided_load %arg5[%c0_108, %c0_109] {strides = array<i32: 2, 1>} : memref<28x6xf32, #tpu.memory_space<vmem>>, vector<14x6xf32>
    %c1_110 = arith.constant 1 : index
    %c0_111 = arith.constant 0 : index
    %106 = tpu.strided_load %arg5[%c1_110, %c0_111] {strides = array<i32: 2, 1>} : memref<28x6xf32, #tpu.memory_space<vmem>>, vector<14x6xf32>
    %107 = arith.maximumf %105, %106 : vector<14x6xf32>
    %108 = vector.broadcast %1 : vector<1x6xf32> to vector<14x6xf32>
    %109 = arith.addf %107, %108 : vector<14x6xf32>
    %cst_112 = arith.constant 0.000000e+00 : f32
    %110 = vector.broadcast %cst_112 : f32 to vector<14x6xf32>
    %111 = arith.maximumf %109, %110 : vector<14x6xf32>
    %112 = arith.truncf %111 : vector<14x6xf32> to vector<14x6xbf16>
    %c0_113 = arith.constant 0 : index
    %c5_114 = arith.constant 5 : index
    %c0_115 = arith.constant 0 : index
    %c0_116 = arith.constant 0 : index
    %113 = vector.load %arg4[%c0_113, %c5_114, %c0_115, %c0_116] : memref<1x14x14x6xbf16, #tpu.memory_space<vmem>>, vector<1x1x14x6xbf16>
    %114 = vector.shape_cast %113 : vector<1x1x14x6xbf16> to vector<14x6xbf16>
    %115 = vector.shape_cast %112 : vector<14x6xbf16> to vector<1x1x14x6xbf16>
    tpu.vector_store %arg4[%c0_113, %c5_114, %c0_115, %c0_116], %115 {strides = array<i32>} : memref<1x14x14x6xbf16, #tpu.memory_space<vmem>>, vector<1x1x14x6xbf16>,
    %c0_117 = arith.constant 0 : index
    %c12 = arith.constant 12 : index
    %c0_118 = arith.constant 0 : index
    %c0_119 = arith.constant 0 : index
    %116 = vector.load %arg1[%c0_117, %c12, %c0_118, %c0_119] : memref<1x28x28x25xbf16, #tpu.memory_space<vmem>>, vector<1x1x28x25xbf16>
    %117 = vector.shape_cast %116 : vector<1x1x28x25xbf16> to vector<28x25xbf16>
    %cst_120 = arith.constant dense<0.000000e+00> : vector<28x6xf32>
    %118 = tpu.matmul %117, %0, %cst_120 {dimension_numbers = #tpu.dot_dimension_numbers<[1], [0], [0], [1], [0, 0, 1, 1], [], []>} : vector<28x25xbf16>, vector<25x6xbf16>, vector<28x6xf32> -> vector<28x6xf32>
    %c0_121 = arith.constant 0 : index
    %c13 = arith.constant 13 : index
    %c0_122 = arith.constant 0 : index
    %c0_123 = arith.constant 0 : index
    %119 = vector.load %arg1[%c0_121, %c13, %c0_122, %c0_123] : memref<1x28x28x25xbf16, #tpu.memory_space<vmem>>, vector<1x1x28x25xbf16>
    %120 = vector.shape_cast %119 : vector<1x1x28x25xbf16> to vector<28x25xbf16>
    %cst_124 = arith.constant dense<0.000000e+00> : vector<28x6xf32>
    %121 = tpu.matmul %120, %0, %cst_124 {dimension_numbers = #tpu.dot_dimension_numbers<[1], [0], [0], [1], [0, 0, 1, 1], [], []>} : vector<28x25xbf16>, vector<25x6xbf16>, vector<28x6xf32> -> vector<28x6xf32>
    %122 = arith.maximumf %118, %121 : vector<28x6xf32>
    %c0_125 = arith.constant 0 : index
    %c0_126 = arith.constant 0 : index
    %123 = vector.load %arg5[%c0_125, %c0_126] : memref<28x6xf32, #tpu.memory_space<vmem>>, vector<28x6xf32>
    tpu.vector_store %arg5[%c0_125, %c0_126], %122 {strides = array<i32>} : memref<28x6xf32, #tpu.memory_space<vmem>>, vector<28x6xf32>,
    %c0_127 = arith.constant 0 : index
    %c0_128 = arith.constant 0 : index
    %124 = tpu.strided_load %arg5[%c0_127, %c0_128] {strides = array<i32: 2, 1>} : memref<28x6xf32, #tpu.memory_space<vmem>>, vector<14x6xf32>
    %c1_129 = arith.constant 1 : index
    %c0_130 = arith.constant 0 : index
    %125 = tpu.strided_load %arg5[%c1_129, %c0_130] {strides = array<i32: 2, 1>} : memref<28x6xf32, #tpu.memory_space<vmem>>, vector<14x6xf32>
    %126 = arith.maximumf %124, %125 : vector<14x6xf32>
    %127 = vector.broadcast %1 : vector<1x6xf32> to vector<14x6xf32>
    %128 = arith.addf %126, %127 : vector<14x6xf32>
    %cst_131 = arith.constant 0.000000e+00 : f32
    %129 = vector.broadcast %cst_131 : f32 to vector<14x6xf32>
    %130 = arith.maximumf %128, %129 : vector<14x6xf32>
    %131 = arith.truncf %130 : vector<14x6xf32> to vector<14x6xbf16>
    %c0_132 = arith.constant 0 : index
    %c6_133 = arith.constant 6 : index
    %c0_134 = arith.constant 0 : index
    %c0_135 = arith.constant 0 : index
    %132 = vector.load %arg4[%c0_132, %c6_133, %c0_134, %c0_135] : memref<1x14x14x6xbf16, #tpu.memory_space<vmem>>, vector<1x1x14x6xbf16>
    %133 = vector.shape_cast %132 : vector<1x1x14x6xbf16> to vector<14x6xbf16>
    %134 = vector.shape_cast %131 : vector<14x6xbf16> to vector<1x1x14x6xbf16>
    tpu.vector_store %arg4[%c0_132, %c6_133, %c0_134, %c0_135], %134 {strides = array<i32>} : memref<1x14x14x6xbf16, #tpu.memory_space<vmem>>, vector<1x1x14x6xbf16>,
    %c0_136 = arith.constant 0 : index
    %c14 = arith.constant 14 : index
    %c0_137 = arith.constant 0 : index
    %c0_138 = arith.constant 0 : index
    %135 = vector.load %arg1[%c0_136, %c14, %c0_137, %c0_138] : memref<1x28x28x25xbf16, #tpu.memory_space<vmem>>, vector<1x1x28x25xbf16>
    %136 = vector.shape_cast %135 : vector<1x1x28x25xbf16> to vector<28x25xbf16>
    %cst_139 = arith.constant dense<0.000000e+00> : vector<28x6xf32>
    %137 = tpu.matmul %136, %0, %cst_139 {dimension_numbers = #tpu.dot_dimension_numbers<[1], [0], [0], [1], [0, 0, 1, 1], [], []>} : vector<28x25xbf16>, vector<25x6xbf16>, vector<28x6xf32> -> vector<28x6xf32>
    %c0_140 = arith.constant 0 : index
    %c15 = arith.constant 15 : index
    %c0_141 = arith.constant 0 : index
    %c0_142 = arith.constant 0 : index
    %138 = vector.load %arg1[%c0_140, %c15, %c0_141, %c0_142] : memref<1x28x28x25xbf16, #tpu.memory_space<vmem>>, vector<1x1x28x25xbf16>
    %139 = vector.shape_cast %138 : vector<1x1x28x25xbf16> to vector<28x25xbf16>
    %cst_143 = arith.constant dense<0.000000e+00> : vector<28x6xf32>
    %140 = tpu.matmul %139, %0, %cst_143 {dimension_numbers = #tpu.dot_dimension_numbers<[1], [0], [0], [1], [0, 0, 1, 1], [], []>} : vector<28x25xbf16>, vector<25x6xbf16>, vector<28x6xf32> -> vector<28x6xf32>
    %141 = arith.maximumf %137, %140 : vector<28x6xf32>
    %c0_144 = arith.constant 0 : index
    %c0_145 = arith.constant 0 : index
    %142 = vector.load %arg5[%c0_144, %c0_145] : memref<28x6xf32, #tpu.memory_space<vmem>>, vector<28x6xf32>
    tpu.vector_store %arg5[%c0_144, %c0_145], %141 {strides = array<i32>} : memref<28x6xf32, #tpu.memory_space<vmem>>, vector<28x6xf32>,
    %c0_146 = arith.constant 0 : index
    %c0_147 = arith.constant 0 : index
    %143 = tpu.strided_load %arg5[%c0_146, %c0_147] {strides = array<i32: 2, 1>} : memref<28x6xf32, #tpu.memory_space<vmem>>, vector<14x6xf32>
    %c1_148 = arith.constant 1 : index
    %c0_149 = arith.constant 0 : index
    %144 = tpu.strided_load %arg5[%c1_148, %c0_149] {strides = array<i32: 2, 1>} : memref<28x6xf32, #tpu.memory_space<vmem>>, vector<14x6xf32>
    %145 = arith.maximumf %143, %144 : vector<14x6xf32>
    %146 = vector.broadcast %1 : vector<1x6xf32> to vector<14x6xf32>
    %147 = arith.addf %145, %146 : vector<14x6xf32>
    %cst_150 = arith.constant 0.000000e+00 : f32
    %148 = vector.broadcast %cst_150 : f32 to vector<14x6xf32>
    %149 = arith.maximumf %147, %148 : vector<14x6xf32>
    %150 = arith.truncf %149 : vector<14x6xf32> to vector<14x6xbf16>
    %c0_151 = arith.constant 0 : index
    %c7_152 = arith.constant 7 : index
    %c0_153 = arith.constant 0 : index
    %c0_154 = arith.constant 0 : index
    %151 = vector.load %arg4[%c0_151, %c7_152, %c0_153, %c0_154] : memref<1x14x14x6xbf16, #tpu.memory_space<vmem>>, vector<1x1x14x6xbf16>
    %152 = vector.shape_cast %151 : vector<1x1x14x6xbf16> to vector<14x6xbf16>
    %153 = vector.shape_cast %150 : vector<14x6xbf16> to vector<1x1x14x6xbf16>
    tpu.vector_store %arg4[%c0_151, %c7_152, %c0_153, %c0_154], %153 {strides = array<i32>} : memref<1x14x14x6xbf16, #tpu.memory_space<vmem>>, vector<1x1x14x6xbf16>,
    %c0_155 = arith.constant 0 : index
    %c16 = arith.constant 16 : index
    %c0_156 = arith.constant 0 : index
    %c0_157 = arith.constant 0 : index
    %154 = vector.load %arg1[%c0_155, %c16, %c0_156, %c0_157] : memref<1x28x28x25xbf16, #tpu.memory_space<vmem>>, vector<1x1x28x25xbf16>
    %155 = vector.shape_cast %154 : vector<1x1x28x25xbf16> to vector<28x25xbf16>
    %cst_158 = arith.constant dense<0.000000e+00> : vector<28x6xf32>
    %156 = tpu.matmul %155, %0, %cst_158 {dimension_numbers = #tpu.dot_dimension_numbers<[1], [0], [0], [1], [0, 0, 1, 1], [], []>} : vector<28x25xbf16>, vector<25x6xbf16>, vector<28x6xf32> -> vector<28x6xf32>
    %c0_159 = arith.constant 0 : index
    %c17 = arith.constant 17 : index
    %c0_160 = arith.constant 0 : index
    %c0_161 = arith.constant 0 : index
    %157 = vector.load %arg1[%c0_159, %c17, %c0_160, %c0_161] : memref<1x28x28x25xbf16, #tpu.memory_space<vmem>>, vector<1x1x28x25xbf16>
    %158 = vector.shape_cast %157 : vector<1x1x28x25xbf16> to vector<28x25xbf16>
    %cst_162 = arith.constant dense<0.000000e+00> : vector<28x6xf32>
    %159 = tpu.matmul %158, %0, %cst_162 {dimension_numbers = #tpu.dot_dimension_numbers<[1], [0], [0], [1], [0, 0, 1, 1], [], []>} : vector<28x25xbf16>, vector<25x6xbf16>, vector<28x6xf32> -> vector<28x6xf32>
    %160 = arith.maximumf %156, %159 : vector<28x6xf32>
    %c0_163 = arith.constant 0 : index
    %c0_164 = arith.constant 0 : index
    %161 = vector.load %arg5[%c0_163, %c0_164] : memref<28x6xf32, #tpu.memory_space<vmem>>, vector<28x6xf32>
    tpu.vector_store %arg5[%c0_163, %c0_164], %160 {strides = array<i32>} : memref<28x6xf32, #tpu.memory_space<vmem>>, vector<28x6xf32>,
    %c0_165 = arith.constant 0 : index
    %c0_166 = arith.constant 0 : index
    %162 = tpu.strided_load %arg5[%c0_165, %c0_166] {strides = array<i32: 2, 1>} : memref<28x6xf32, #tpu.memory_space<vmem>>, vector<14x6xf32>
    %c1_167 = arith.constant 1 : index
    %c0_168 = arith.constant 0 : index
    %163 = tpu.strided_load %arg5[%c1_167, %c0_168] {strides = array<i32: 2, 1>} : memref<28x6xf32, #tpu.memory_space<vmem>>, vector<14x6xf32>
    %164 = arith.maximumf %162, %163 : vector<14x6xf32>
    %165 = vector.broadcast %1 : vector<1x6xf32> to vector<14x6xf32>
    %166 = arith.addf %164, %165 : vector<14x6xf32>
    %cst_169 = arith.constant 0.000000e+00 : f32
    %167 = vector.broadcast %cst_169 : f32 to vector<14x6xf32>
    %168 = arith.maximumf %166, %167 : vector<14x6xf32>
    %169 = arith.truncf %168 : vector<14x6xf32> to vector<14x6xbf16>
    %c0_170 = arith.constant 0 : index
    %c8_171 = arith.constant 8 : index
    %c0_172 = arith.constant 0 : index
    %c0_173 = arith.constant 0 : index
    %170 = vector.load %arg4[%c0_170, %c8_171, %c0_172, %c0_173] : memref<1x14x14x6xbf16, #tpu.memory_space<vmem>>, vector<1x1x14x6xbf16>
    %171 = vector.shape_cast %170 : vector<1x1x14x6xbf16> to vector<14x6xbf16>
    %172 = vector.shape_cast %169 : vector<14x6xbf16> to vector<1x1x14x6xbf16>
    tpu.vector_store %arg4[%c0_170, %c8_171, %c0_172, %c0_173], %172 {strides = array<i32>} : memref<1x14x14x6xbf16, #tpu.memory_space<vmem>>, vector<1x1x14x6xbf16>,
    %c0_174 = arith.constant 0 : index
    %c18 = arith.constant 18 : index
    %c0_175 = arith.constant 0 : index
    %c0_176 = arith.constant 0 : index
    %173 = vector.load %arg1[%c0_174, %c18, %c0_175, %c0_176] : memref<1x28x28x25xbf16, #tpu.memory_space<vmem>>, vector<1x1x28x25xbf16>
    %174 = vector.shape_cast %173 : vector<1x1x28x25xbf16> to vector<28x25xbf16>
    %cst_177 = arith.constant dense<0.000000e+00> : vector<28x6xf32>
    %175 = tpu.matmul %174, %0, %cst_177 {dimension_numbers = #tpu.dot_dimension_numbers<[1], [0], [0], [1], [0, 0, 1, 1], [], []>} : vector<28x25xbf16>, vector<25x6xbf16>, vector<28x6xf32> -> vector<28x6xf32>
    %c0_178 = arith.constant 0 : index
    %c19 = arith.constant 19 : index
    %c0_179 = arith.constant 0 : index
    %c0_180 = arith.constant 0 : index
    %176 = vector.load %arg1[%c0_178, %c19, %c0_179, %c0_180] : memref<1x28x28x25xbf16, #tpu.memory_space<vmem>>, vector<1x1x28x25xbf16>
    %177 = vector.shape_cast %176 : vector<1x1x28x25xbf16> to vector<28x25xbf16>
    %cst_181 = arith.constant dense<0.000000e+00> : vector<28x6xf32>
    %178 = tpu.matmul %177, %0, %cst_181 {dimension_numbers = #tpu.dot_dimension_numbers<[1], [0], [0], [1], [0, 0, 1, 1], [], []>} : vector<28x25xbf16>, vector<25x6xbf16>, vector<28x6xf32> -> vector<28x6xf32>
    %179 = arith.maximumf %175, %178 : vector<28x6xf32>
    %c0_182 = arith.constant 0 : index
    %c0_183 = arith.constant 0 : index
    %180 = vector.load %arg5[%c0_182, %c0_183] : memref<28x6xf32, #tpu.memory_space<vmem>>, vector<28x6xf32>
    tpu.vector_store %arg5[%c0_182, %c0_183], %179 {strides = array<i32>} : memref<28x6xf32, #tpu.memory_space<vmem>>, vector<28x6xf32>,
    %c0_184 = arith.constant 0 : index
    %c0_185 = arith.constant 0 : index
    %181 = tpu.strided_load %arg5[%c0_184, %c0_185] {strides = array<i32: 2, 1>} : memref<28x6xf32, #tpu.memory_space<vmem>>, vector<14x6xf32>
    %c1_186 = arith.constant 1 : index
    %c0_187 = arith.constant 0 : index
    %182 = tpu.strided_load %arg5[%c1_186, %c0_187] {strides = array<i32: 2, 1>} : memref<28x6xf32, #tpu.memory_space<vmem>>, vector<14x6xf32>
    %183 = arith.maximumf %181, %182 : vector<14x6xf32>
    %184 = vector.broadcast %1 : vector<1x6xf32> to vector<14x6xf32>
    %185 = arith.addf %183, %184 : vector<14x6xf32>
    %cst_188 = arith.constant 0.000000e+00 : f32
    %186 = vector.broadcast %cst_188 : f32 to vector<14x6xf32>
    %187 = arith.maximumf %185, %186 : vector<14x6xf32>
    %188 = arith.truncf %187 : vector<14x6xf32> to vector<14x6xbf16>
    %c0_189 = arith.constant 0 : index
    %c9_190 = arith.constant 9 : index
    %c0_191 = arith.constant 0 : index
    %c0_192 = arith.constant 0 : index
    %189 = vector.load %arg4[%c0_189, %c9_190, %c0_191, %c0_192] : memref<1x14x14x6xbf16, #tpu.memory_space<vmem>>, vector<1x1x14x6xbf16>
    %190 = vector.shape_cast %189 : vector<1x1x14x6xbf16> to vector<14x6xbf16>
    %191 = vector.shape_cast %188 : vector<14x6xbf16> to vector<1x1x14x6xbf16>
    tpu.vector_store %arg4[%c0_189, %c9_190, %c0_191, %c0_192], %191 {strides = array<i32>} : memref<1x14x14x6xbf16, #tpu.memory_space<vmem>>, vector<1x1x14x6xbf16>,
    %c0_193 = arith.constant 0 : index
    %c20 = arith.constant 20 : index
    %c0_194 = arith.constant 0 : index
    %c0_195 = arith.constant 0 : index
    %192 = vector.load %arg1[%c0_193, %c20, %c0_194, %c0_195] : memref<1x28x28x25xbf16, #tpu.memory_space<vmem>>, vector<1x1x28x25xbf16>
    %193 = vector.shape_cast %192 : vector<1x1x28x25xbf16> to vector<28x25xbf16>
    %cst_196 = arith.constant dense<0.000000e+00> : vector<28x6xf32>
    %194 = tpu.matmul %193, %0, %cst_196 {dimension_numbers = #tpu.dot_dimension_numbers<[1], [0], [0], [1], [0, 0, 1, 1], [], []>} : vector<28x25xbf16>, vector<25x6xbf16>, vector<28x6xf32> -> vector<28x6xf32>
    %c0_197 = arith.constant 0 : index
    %c21 = arith.constant 21 : index
    %c0_198 = arith.constant 0 : index
    %c0_199 = arith.constant 0 : index
    %195 = vector.load %arg1[%c0_197, %c21, %c0_198, %c0_199] : memref<1x28x28x25xbf16, #tpu.memory_space<vmem>>, vector<1x1x28x25xbf16>
    %196 = vector.shape_cast %195 : vector<1x1x28x25xbf16> to vector<28x25xbf16>
    %cst_200 = arith.constant dense<0.000000e+00> : vector<28x6xf32>
    %197 = tpu.matmul %196, %0, %cst_200 {dimension_numbers = #tpu.dot_dimension_numbers<[1], [0], [0], [1], [0, 0, 1, 1], [], []>} : vector<28x25xbf16>, vector<25x6xbf16>, vector<28x6xf32> -> vector<28x6xf32>
    %198 = arith.maximumf %194, %197 : vector<28x6xf32>
    %c0_201 = arith.constant 0 : index
    %c0_202 = arith.constant 0 : index
    %199 = vector.load %arg5[%c0_201, %c0_202] : memref<28x6xf32, #tpu.memory_space<vmem>>, vector<28x6xf32>
    tpu.vector_store %arg5[%c0_201, %c0_202], %198 {strides = array<i32>} : memref<28x6xf32, #tpu.memory_space<vmem>>, vector<28x6xf32>,
    %c0_203 = arith.constant 0 : index
    %c0_204 = arith.constant 0 : index
    %200 = tpu.strided_load %arg5[%c0_203, %c0_204] {strides = array<i32: 2, 1>} : memref<28x6xf32, #tpu.memory_space<vmem>>, vector<14x6xf32>
    %c1_205 = arith.constant 1 : index
    %c0_206 = arith.constant 0 : index
    %201 = tpu.strided_load %arg5[%c1_205, %c0_206] {strides = array<i32: 2, 1>} : memref<28x6xf32, #tpu.memory_space<vmem>>, vector<14x6xf32>
    %202 = arith.maximumf %200, %201 : vector<14x6xf32>
    %203 = vector.broadcast %1 : vector<1x6xf32> to vector<14x6xf32>
    %204 = arith.addf %202, %203 : vector<14x6xf32>
    %cst_207 = arith.constant 0.000000e+00 : f32
    %205 = vector.broadcast %cst_207 : f32 to vector<14x6xf32>
    %206 = arith.maximumf %204, %205 : vector<14x6xf32>
    %207 = arith.truncf %206 : vector<14x6xf32> to vector<14x6xbf16>
    %c0_208 = arith.constant 0 : index
    %c10_209 = arith.constant 10 : index
    %c0_210 = arith.constant 0 : index
    %c0_211 = arith.constant 0 : index
    %208 = vector.load %arg4[%c0_208, %c10_209, %c0_210, %c0_211] : memref<1x14x14x6xbf16, #tpu.memory_space<vmem>>, vector<1x1x14x6xbf16>
    %209 = vector.shape_cast %208 : vector<1x1x14x6xbf16> to vector<14x6xbf16>
    %210 = vector.shape_cast %207 : vector<14x6xbf16> to vector<1x1x14x6xbf16>
    tpu.vector_store %arg4[%c0_208, %c10_209, %c0_210, %c0_211], %210 {strides = array<i32>} : memref<1x14x14x6xbf16, #tpu.memory_space<vmem>>, vector<1x1x14x6xbf16>,
    %c0_212 = arith.constant 0 : index
    %c22 = arith.constant 22 : index
    %c0_213 = arith.constant 0 : index
    %c0_214 = arith.constant 0 : index
    %211 = vector.load %arg1[%c0_212, %c22, %c0_213, %c0_214] : memref<1x28x28x25xbf16, #tpu.memory_space<vmem>>, vector<1x1x28x25xbf16>
    %212 = vector.shape_cast %211 : vector<1x1x28x25xbf16> to vector<28x25xbf16>
    %cst_215 = arith.constant dense<0.000000e+00> : vector<28x6xf32>
    %213 = tpu.matmul %212, %0, %cst_215 {dimension_numbers = #tpu.dot_dimension_numbers<[1], [0], [0], [1], [0, 0, 1, 1], [], []>} : vector<28x25xbf16>, vector<25x6xbf16>, vector<28x6xf32> -> vector<28x6xf32>
    %c0_216 = arith.constant 0 : index
    %c23 = arith.constant 23 : index
    %c0_217 = arith.constant 0 : index
    %c0_218 = arith.constant 0 : index
    %214 = vector.load %arg1[%c0_216, %c23, %c0_217, %c0_218] : memref<1x28x28x25xbf16, #tpu.memory_space<vmem>>, vector<1x1x28x25xbf16>
    %215 = vector.shape_cast %214 : vector<1x1x28x25xbf16> to vector<28x25xbf16>
    %cst_219 = arith.constant dense<0.000000e+00> : vector<28x6xf32>
    %216 = tpu.matmul %215, %0, %cst_219 {dimension_numbers = #tpu.dot_dimension_numbers<[1], [0], [0], [1], [0, 0, 1, 1], [], []>} : vector<28x25xbf16>, vector<25x6xbf16>, vector<28x6xf32> -> vector<28x6xf32>
    %217 = arith.maximumf %213, %216 : vector<28x6xf32>
    %c0_220 = arith.constant 0 : index
    %c0_221 = arith.constant 0 : index
    %218 = vector.load %arg5[%c0_220, %c0_221] : memref<28x6xf32, #tpu.memory_space<vmem>>, vector<28x6xf32>
    tpu.vector_store %arg5[%c0_220, %c0_221], %217 {strides = array<i32>} : memref<28x6xf32, #tpu.memory_space<vmem>>, vector<28x6xf32>,
    %c0_222 = arith.constant 0 : index
    %c0_223 = arith.constant 0 : index
    %219 = tpu.strided_load %arg5[%c0_222, %c0_223] {strides = array<i32: 2, 1>} : memref<28x6xf32, #tpu.memory_space<vmem>>, vector<14x6xf32>
    %c1_224 = arith.constant 1 : index
    %c0_225 = arith.constant 0 : index
    %220 = tpu.strided_load %arg5[%c1_224, %c0_225] {strides = array<i32: 2, 1>} : memref<28x6xf32, #tpu.memory_space<vmem>>, vector<14x6xf32>
    %221 = arith.maximumf %219, %220 : vector<14x6xf32>
    %222 = vector.broadcast %1 : vector<1x6xf32> to vector<14x6xf32>
    %223 = arith.addf %221, %222 : vector<14x6xf32>
    %cst_226 = arith.constant 0.000000e+00 : f32
    %224 = vector.broadcast %cst_226 : f32 to vector<14x6xf32>
    %225 = arith.maximumf %223, %224 : vector<14x6xf32>
    %226 = arith.truncf %225 : vector<14x6xf32> to vector<14x6xbf16>
    %c0_227 = arith.constant 0 : index
    %c11_228 = arith.constant 11 : index
    %c0_229 = arith.constant 0 : index
    %c0_230 = arith.constant 0 : index
    %227 = vector.load %arg4[%c0_227, %c11_228, %c0_229, %c0_230] : memref<1x14x14x6xbf16, #tpu.memory_space<vmem>>, vector<1x1x14x6xbf16>
    %228 = vector.shape_cast %227 : vector<1x1x14x6xbf16> to vector<14x6xbf16>
    %229 = vector.shape_cast %226 : vector<14x6xbf16> to vector<1x1x14x6xbf16>
    tpu.vector_store %arg4[%c0_227, %c11_228, %c0_229, %c0_230], %229 {strides = array<i32>} : memref<1x14x14x6xbf16, #tpu.memory_space<vmem>>, vector<1x1x14x6xbf16>,
    %c0_231 = arith.constant 0 : index
    %c24 = arith.constant 24 : index
    %c0_232 = arith.constant 0 : index
    %c0_233 = arith.constant 0 : index
    %230 = vector.load %arg1[%c0_231, %c24, %c0_232, %c0_233] : memref<1x28x28x25xbf16, #tpu.memory_space<vmem>>, vector<1x1x28x25xbf16>
    %231 = vector.shape_cast %230 : vector<1x1x28x25xbf16> to vector<28x25xbf16>
    %cst_234 = arith.constant dense<0.000000e+00> : vector<28x6xf32>
    %232 = tpu.matmul %231, %0, %cst_234 {dimension_numbers = #tpu.dot_dimension_numbers<[1], [0], [0], [1], [0, 0, 1, 1], [], []>} : vector<28x25xbf16>, vector<25x6xbf16>, vector<28x6xf32> -> vector<28x6xf32>
    %c0_235 = arith.constant 0 : index
    %c25 = arith.constant 25 : index
    %c0_236 = arith.constant 0 : index
    %c0_237 = arith.constant 0 : index
    %233 = vector.load %arg1[%c0_235, %c25, %c0_236, %c0_237] : memref<1x28x28x25xbf16, #tpu.memory_space<vmem>>, vector<1x1x28x25xbf16>
    %234 = vector.shape_cast %233 : vector<1x1x28x25xbf16> to vector<28x25xbf16>
    %cst_238 = arith.constant dense<0.000000e+00> : vector<28x6xf32>
    %235 = tpu.matmul %234, %0, %cst_238 {dimension_numbers = #tpu.dot_dimension_numbers<[1], [0], [0], [1], [0, 0, 1, 1], [], []>} : vector<28x25xbf16>, vector<25x6xbf16>, vector<28x6xf32> -> vector<28x6xf32>
    %236 = arith.maximumf %232, %235 : vector<28x6xf32>
    %c0_239 = arith.constant 0 : index
    %c0_240 = arith.constant 0 : index
    %237 = vector.load %arg5[%c0_239, %c0_240] : memref<28x6xf32, #tpu.memory_space<vmem>>, vector<28x6xf32>
    tpu.vector_store %arg5[%c0_239, %c0_240], %236 {strides = array<i32>} : memref<28x6xf32, #tpu.memory_space<vmem>>, vector<28x6xf32>,
    %c0_241 = arith.constant 0 : index
    %c0_242 = arith.constant 0 : index
    %238 = tpu.strided_load %arg5[%c0_241, %c0_242] {strides = array<i32: 2, 1>} : memref<28x6xf32, #tpu.memory_space<vmem>>, vector<14x6xf32>
    %c1_243 = arith.constant 1 : index
    %c0_244 = arith.constant 0 : index
    %239 = tpu.strided_load %arg5[%c1_243, %c0_244] {strides = array<i32: 2, 1>} : memref<28x6xf32, #tpu.memory_space<vmem>>, vector<14x6xf32>
    %240 = arith.maximumf %238, %239 : vector<14x6xf32>
    %241 = vector.broadcast %1 : vector<1x6xf32> to vector<14x6xf32>
    %242 = arith.addf %240, %241 : vector<14x6xf32>
    %cst_245 = arith.constant 0.000000e+00 : f32
    %243 = vector.broadcast %cst_245 : f32 to vector<14x6xf32>
    %244 = arith.maximumf %242, %243 : vector<14x6xf32>
    %245 = arith.truncf %244 : vector<14x6xf32> to vector<14x6xbf16>
    %c0_246 = arith.constant 0 : index
    %c12_247 = arith.constant 12 : index
    %c0_248 = arith.constant 0 : index
    %c0_249 = arith.constant 0 : index
    %246 = vector.load %arg4[%c0_246, %c12_247, %c0_248, %c0_249] : memref<1x14x14x6xbf16, #tpu.memory_space<vmem>>, vector<1x1x14x6xbf16>
    %247 = vector.shape_cast %246 : vector<1x1x14x6xbf16> to vector<14x6xbf16>
    %248 = vector.shape_cast %245 : vector<14x6xbf16> to vector<1x1x14x6xbf16>
    tpu.vector_store %arg4[%c0_246, %c12_247, %c0_248, %c0_249], %248 {strides = array<i32>} : memref<1x14x14x6xbf16, #tpu.memory_space<vmem>>, vector<1x1x14x6xbf16>,
    %c0_250 = arith.constant 0 : index
    %c26 = arith.constant 26 : index
    %c0_251 = arith.constant 0 : index
    %c0_252 = arith.constant 0 : index
    %249 = vector.load %arg1[%c0_250, %c26, %c0_251, %c0_252] : memref<1x28x28x25xbf16, #tpu.memory_space<vmem>>, vector<1x1x28x25xbf16>
    %250 = vector.shape_cast %249 : vector<1x1x28x25xbf16> to vector<28x25xbf16>
    %cst_253 = arith.constant dense<0.000000e+00> : vector<28x6xf32>
    %251 = tpu.matmul %250, %0, %cst_253 {dimension_numbers = #tpu.dot_dimension_numbers<[1], [0], [0], [1], [0, 0, 1, 1], [], []>} : vector<28x25xbf16>, vector<25x6xbf16>, vector<28x6xf32> -> vector<28x6xf32>
    %c0_254 = arith.constant 0 : index
    %c27 = arith.constant 27 : index
    %c0_255 = arith.constant 0 : index
    %c0_256 = arith.constant 0 : index
    %252 = vector.load %arg1[%c0_254, %c27, %c0_255, %c0_256] : memref<1x28x28x25xbf16, #tpu.memory_space<vmem>>, vector<1x1x28x25xbf16>
    %253 = vector.shape_cast %252 : vector<1x1x28x25xbf16> to vector<28x25xbf16>
    %cst_257 = arith.constant dense<0.000000e+00> : vector<28x6xf32>
    %254 = tpu.matmul %253, %0, %cst_257 {dimension_numbers = #tpu.dot_dimension_numbers<[1], [0], [0], [1], [0, 0, 1, 1], [], []>} : vector<28x25xbf16>, vector<25x6xbf16>, vector<28x6xf32> -> vector<28x6xf32>
    %255 = arith.maximumf %251, %254 : vector<28x6xf32>
    %c0_258 = arith.constant 0 : index
    %c0_259 = arith.constant 0 : index
    %256 = vector.load %arg5[%c0_258, %c0_259] : memref<28x6xf32, #tpu.memory_space<vmem>>, vector<28x6xf32>
    tpu.vector_store %arg5[%c0_258, %c0_259], %255 {strides = array<i32>} : memref<28x6xf32, #tpu.memory_space<vmem>>, vector<28x6xf32>,
    %c0_260 = arith.constant 0 : index
    %c0_261 = arith.constant 0 : index
    %257 = tpu.strided_load %arg5[%c0_260, %c0_261] {strides = array<i32: 2, 1>} : memref<28x6xf32, #tpu.memory_space<vmem>>, vector<14x6xf32>
    %c1_262 = arith.constant 1 : index
    %c0_263 = arith.constant 0 : index
    %258 = tpu.strided_load %arg5[%c1_262, %c0_263] {strides = array<i32: 2, 1>} : memref<28x6xf32, #tpu.memory_space<vmem>>, vector<14x6xf32>
    %259 = arith.maximumf %257, %258 : vector<14x6xf32>
    %260 = vector.broadcast %1 : vector<1x6xf32> to vector<14x6xf32>
    %261 = arith.addf %259, %260 : vector<14x6xf32>
    %cst_264 = arith.constant 0.000000e+00 : f32
    %262 = vector.broadcast %cst_264 : f32 to vector<14x6xf32>
    %263 = arith.maximumf %261, %262 : vector<14x6xf32>
    %264 = arith.truncf %263 : vector<14x6xf32> to vector<14x6xbf16>
    %c0_265 = arith.constant 0 : index
    %c13_266 = arith.constant 13 : index
    %c0_267 = arith.constant 0 : index
    %c0_268 = arith.constant 0 : index
    %265 = vector.load %arg4[%c0_265, %c13_266, %c0_267, %c0_268] : memref<1x14x14x6xbf16, #tpu.memory_space<vmem>>, vector<1x1x14x6xbf16>
    %266 = vector.shape_cast %265 : vector<1x1x14x6xbf16> to vector<14x6xbf16>
    %267 = vector.shape_cast %264 : vector<14x6xbf16> to vector<1x1x14x6xbf16>
    tpu.vector_store %arg4[%c0_265, %c13_266, %c0_267, %c0_268], %267 {strides = array<i32>} : memref<1x14x14x6xbf16, #tpu.memory_space<vmem>>, vector<1x1x14x6xbf16>,
    return
  }
  func.func @transform_0(%arg0: i32) -> (i32, i32, i32, i32) {
    %c0_i32 = arith.constant 0 : i32
    %c0_i32_0 = arith.constant 0 : i32
    %c0_i32_1 = arith.constant 0 : i32
    %c0_i32_2 = arith.constant 0 : i32
    return %arg0, %c0_i32, %c0_i32_0, %c0_i32_1 : i32, i32, i32, i32
  }
  func.func @transform_1(%arg0: i32) -> (i32, i32) {
    %c0_i32 = arith.constant 0 : i32
    %c0_i32_0 = arith.constant 0 : i32
    %c0_i32_1 = arith.constant 0 : i32
    return %c0_i32, %c0_i32_0 : i32, i32
  }
  func.func @transform_2(%arg0: i32) -> (i32, i32) {
    %c0_i32 = arith.constant 0 : i32
    %c0_i32_0 = arith.constant 0 : i32
    %c0_i32_1 = arith.constant 0 : i32
    return %c0_i32, %c0_i32_0 : i32, i32
  }
  func.func @transform_3(%arg0: i32) -> (i32, i32, i32, i32) {
    %c0_i32 = arith.constant 0 : i32
    %c0_i32_0 = arith.constant 0 : i32
    %c0_i32_1 = arith.constant 0 : i32
    %c0_i32_2 = arith.constant 0 : i32
    return %arg0, %c0_i32, %c0_i32_0, %c0_i32_1 : i32, i32, i32, i32
  }
}

module attributes {stable_mosaic.version = 11 : i64} {
  func.func @_conv_relu_pool_kernel(%arg0: i32, %arg1: memref<1x10x10x150xbf16, #tpu.memory_space<vmem>>, %arg2: memref<150x16xbf16, #tpu.memory_space<vmem>>, %arg3: memref<1x16xf32, #tpu.memory_space<vmem>>, %arg4: memref<1x5x5x16xbf16, #tpu.memory_space<vmem>>, %arg5: memref<10x16xf32, #tpu.memory_space<vmem>>) attributes {dimension_semantics = [#tpu.dimension_semantics<parallel>], iteration_bounds = array<i64: 2>, scalar_prefetch = 0 : i64, scratch_operands = 1 : i64, tpu.core_type = #tpu.core_type<tc>, window_params = [{transform_indices = @transform_0, window_bounds = array<i64: 1, 10, 10, 150>}, {pipeline_mode = #tpu.pipeline_mode<synchronous>, transform_indices = @transform_1, window_bounds = array<i64: 150, 16>}, {pipeline_mode = #tpu.pipeline_mode<synchronous>, transform_indices = @transform_2, window_bounds = array<i64: 1, 16>}, {transform_indices = @transform_3, window_bounds = array<i64: 1, 5, 5, 16>}]} {
    %c0 = arith.constant 0 : index
    %c0_0 = arith.constant 0 : index
    %0 = vector.load %arg2[%c0, %c0_0] : memref<150x16xbf16, #tpu.memory_space<vmem>>, vector<150x16xbf16>
    %c0_1 = arith.constant 0 : index
    %c0_2 = arith.constant 0 : index
    %1 = vector.load %arg3[%c0_1, %c0_2] : memref<1x16xf32, #tpu.memory_space<vmem>>, vector<1x16xf32>
    %c0_3 = arith.constant 0 : index
    %c0_4 = arith.constant 0 : index
    %c0_5 = arith.constant 0 : index
    %c0_6 = arith.constant 0 : index
    %2 = vector.load %arg1[%c0_3, %c0_4, %c0_5, %c0_6] : memref<1x10x10x150xbf16, #tpu.memory_space<vmem>>, vector<1x1x10x150xbf16>
    %3 = vector.shape_cast %2 : vector<1x1x10x150xbf16> to vector<10x150xbf16>
    %cst = arith.constant dense<0.000000e+00> : vector<10x16xf32>
    %4 = tpu.matmul %3, %0, %cst {dimension_numbers = #tpu.dot_dimension_numbers<[1], [0], [0], [1], [0, 0, 1, 1], [], []>} : vector<10x150xbf16>, vector<150x16xbf16>, vector<10x16xf32> -> vector<10x16xf32>
    %c0_7 = arith.constant 0 : index
    %c1 = arith.constant 1 : index
    %c0_8 = arith.constant 0 : index
    %c0_9 = arith.constant 0 : index
    %5 = vector.load %arg1[%c0_7, %c1, %c0_8, %c0_9] : memref<1x10x10x150xbf16, #tpu.memory_space<vmem>>, vector<1x1x10x150xbf16>
    %6 = vector.shape_cast %5 : vector<1x1x10x150xbf16> to vector<10x150xbf16>
    %cst_10 = arith.constant dense<0.000000e+00> : vector<10x16xf32>
    %7 = tpu.matmul %6, %0, %cst_10 {dimension_numbers = #tpu.dot_dimension_numbers<[1], [0], [0], [1], [0, 0, 1, 1], [], []>} : vector<10x150xbf16>, vector<150x16xbf16>, vector<10x16xf32> -> vector<10x16xf32>
    %8 = arith.maximumf %4, %7 : vector<10x16xf32>
    %c0_11 = arith.constant 0 : index
    %c0_12 = arith.constant 0 : index
    %9 = vector.load %arg5[%c0_11, %c0_12] : memref<10x16xf32, #tpu.memory_space<vmem>>, vector<10x16xf32>
    tpu.vector_store %arg5[%c0_11, %c0_12], %8 {strides = array<i32>} : memref<10x16xf32, #tpu.memory_space<vmem>>, vector<10x16xf32>,
    %c0_13 = arith.constant 0 : index
    %c0_14 = arith.constant 0 : index
    %10 = tpu.strided_load %arg5[%c0_13, %c0_14] {strides = array<i32: 2, 1>} : memref<10x16xf32, #tpu.memory_space<vmem>>, vector<5x16xf32>
    %c1_15 = arith.constant 1 : index
    %c0_16 = arith.constant 0 : index
    %11 = tpu.strided_load %arg5[%c1_15, %c0_16] {strides = array<i32: 2, 1>} : memref<10x16xf32, #tpu.memory_space<vmem>>, vector<5x16xf32>
    %12 = arith.maximumf %10, %11 : vector<5x16xf32>
    %13 = vector.broadcast %1 : vector<1x16xf32> to vector<5x16xf32>
    %14 = arith.addf %12, %13 : vector<5x16xf32>
    %cst_17 = arith.constant 0.000000e+00 : f32
    %15 = vector.broadcast %cst_17 : f32 to vector<5x16xf32>
    %16 = arith.maximumf %14, %15 : vector<5x16xf32>
    %17 = arith.truncf %16 : vector<5x16xf32> to vector<5x16xbf16>
    %c0_18 = arith.constant 0 : index
    %c0_19 = arith.constant 0 : index
    %c0_20 = arith.constant 0 : index
    %c0_21 = arith.constant 0 : index
    %18 = vector.load %arg4[%c0_18, %c0_19, %c0_20, %c0_21] : memref<1x5x5x16xbf16, #tpu.memory_space<vmem>>, vector<1x1x5x16xbf16>
    %19 = vector.shape_cast %18 : vector<1x1x5x16xbf16> to vector<5x16xbf16>
    %20 = vector.shape_cast %17 : vector<5x16xbf16> to vector<1x1x5x16xbf16>
    tpu.vector_store %arg4[%c0_18, %c0_19, %c0_20, %c0_21], %20 {strides = array<i32>} : memref<1x5x5x16xbf16, #tpu.memory_space<vmem>>, vector<1x1x5x16xbf16>,
    %c0_22 = arith.constant 0 : index
    %c2 = arith.constant 2 : index
    %c0_23 = arith.constant 0 : index
    %c0_24 = arith.constant 0 : index
    %21 = vector.load %arg1[%c0_22, %c2, %c0_23, %c0_24] : memref<1x10x10x150xbf16, #tpu.memory_space<vmem>>, vector<1x1x10x150xbf16>
    %22 = vector.shape_cast %21 : vector<1x1x10x150xbf16> to vector<10x150xbf16>
    %cst_25 = arith.constant dense<0.000000e+00> : vector<10x16xf32>
    %23 = tpu.matmul %22, %0, %cst_25 {dimension_numbers = #tpu.dot_dimension_numbers<[1], [0], [0], [1], [0, 0, 1, 1], [], []>} : vector<10x150xbf16>, vector<150x16xbf16>, vector<10x16xf32> -> vector<10x16xf32>
    %c0_26 = arith.constant 0 : index
    %c3 = arith.constant 3 : index
    %c0_27 = arith.constant 0 : index
    %c0_28 = arith.constant 0 : index
    %24 = vector.load %arg1[%c0_26, %c3, %c0_27, %c0_28] : memref<1x10x10x150xbf16, #tpu.memory_space<vmem>>, vector<1x1x10x150xbf16>
    %25 = vector.shape_cast %24 : vector<1x1x10x150xbf16> to vector<10x150xbf16>
    %cst_29 = arith.constant dense<0.000000e+00> : vector<10x16xf32>
    %26 = tpu.matmul %25, %0, %cst_29 {dimension_numbers = #tpu.dot_dimension_numbers<[1], [0], [0], [1], [0, 0, 1, 1], [], []>} : vector<10x150xbf16>, vector<150x16xbf16>, vector<10x16xf32> -> vector<10x16xf32>
    %27 = arith.maximumf %23, %26 : vector<10x16xf32>
    %c0_30 = arith.constant 0 : index
    %c0_31 = arith.constant 0 : index
    %28 = vector.load %arg5[%c0_30, %c0_31] : memref<10x16xf32, #tpu.memory_space<vmem>>, vector<10x16xf32>
    tpu.vector_store %arg5[%c0_30, %c0_31], %27 {strides = array<i32>} : memref<10x16xf32, #tpu.memory_space<vmem>>, vector<10x16xf32>,
    %c0_32 = arith.constant 0 : index
    %c0_33 = arith.constant 0 : index
    %29 = tpu.strided_load %arg5[%c0_32, %c0_33] {strides = array<i32: 2, 1>} : memref<10x16xf32, #tpu.memory_space<vmem>>, vector<5x16xf32>
    %c1_34 = arith.constant 1 : index
    %c0_35 = arith.constant 0 : index
    %30 = tpu.strided_load %arg5[%c1_34, %c0_35] {strides = array<i32: 2, 1>} : memref<10x16xf32, #tpu.memory_space<vmem>>, vector<5x16xf32>
    %31 = arith.maximumf %29, %30 : vector<5x16xf32>
    %32 = vector.broadcast %1 : vector<1x16xf32> to vector<5x16xf32>
    %33 = arith.addf %31, %32 : vector<5x16xf32>
    %cst_36 = arith.constant 0.000000e+00 : f32
    %34 = vector.broadcast %cst_36 : f32 to vector<5x16xf32>
    %35 = arith.maximumf %33, %34 : vector<5x16xf32>
    %36 = arith.truncf %35 : vector<5x16xf32> to vector<5x16xbf16>
    %c0_37 = arith.constant 0 : index
    %c1_38 = arith.constant 1 : index
    %c0_39 = arith.constant 0 : index
    %c0_40 = arith.constant 0 : index
    %37 = vector.load %arg4[%c0_37, %c1_38, %c0_39, %c0_40] : memref<1x5x5x16xbf16, #tpu.memory_space<vmem>>, vector<1x1x5x16xbf16>
    %38 = vector.shape_cast %37 : vector<1x1x5x16xbf16> to vector<5x16xbf16>
    %39 = vector.shape_cast %36 : vector<5x16xbf16> to vector<1x1x5x16xbf16>
    tpu.vector_store %arg4[%c0_37, %c1_38, %c0_39, %c0_40], %39 {strides = array<i32>} : memref<1x5x5x16xbf16, #tpu.memory_space<vmem>>, vector<1x1x5x16xbf16>,
    %c0_41 = arith.constant 0 : index
    %c4 = arith.constant 4 : index
    %c0_42 = arith.constant 0 : index
    %c0_43 = arith.constant 0 : index
    %40 = vector.load %arg1[%c0_41, %c4, %c0_42, %c0_43] : memref<1x10x10x150xbf16, #tpu.memory_space<vmem>>, vector<1x1x10x150xbf16>
    %41 = vector.shape_cast %40 : vector<1x1x10x150xbf16> to vector<10x150xbf16>
    %cst_44 = arith.constant dense<0.000000e+00> : vector<10x16xf32>
    %42 = tpu.matmul %41, %0, %cst_44 {dimension_numbers = #tpu.dot_dimension_numbers<[1], [0], [0], [1], [0, 0, 1, 1], [], []>} : vector<10x150xbf16>, vector<150x16xbf16>, vector<10x16xf32> -> vector<10x16xf32>
    %c0_45 = arith.constant 0 : index
    %c5 = arith.constant 5 : index
    %c0_46 = arith.constant 0 : index
    %c0_47 = arith.constant 0 : index
    %43 = vector.load %arg1[%c0_45, %c5, %c0_46, %c0_47] : memref<1x10x10x150xbf16, #tpu.memory_space<vmem>>, vector<1x1x10x150xbf16>
    %44 = vector.shape_cast %43 : vector<1x1x10x150xbf16> to vector<10x150xbf16>
    %cst_48 = arith.constant dense<0.000000e+00> : vector<10x16xf32>
    %45 = tpu.matmul %44, %0, %cst_48 {dimension_numbers = #tpu.dot_dimension_numbers<[1], [0], [0], [1], [0, 0, 1, 1], [], []>} : vector<10x150xbf16>, vector<150x16xbf16>, vector<10x16xf32> -> vector<10x16xf32>
    %46 = arith.maximumf %42, %45 : vector<10x16xf32>
    %c0_49 = arith.constant 0 : index
    %c0_50 = arith.constant 0 : index
    %47 = vector.load %arg5[%c0_49, %c0_50] : memref<10x16xf32, #tpu.memory_space<vmem>>, vector<10x16xf32>
    tpu.vector_store %arg5[%c0_49, %c0_50], %46 {strides = array<i32>} : memref<10x16xf32, #tpu.memory_space<vmem>>, vector<10x16xf32>,
    %c0_51 = arith.constant 0 : index
    %c0_52 = arith.constant 0 : index
    %48 = tpu.strided_load %arg5[%c0_51, %c0_52] {strides = array<i32: 2, 1>} : memref<10x16xf32, #tpu.memory_space<vmem>>, vector<5x16xf32>
    %c1_53 = arith.constant 1 : index
    %c0_54 = arith.constant 0 : index
    %49 = tpu.strided_load %arg5[%c1_53, %c0_54] {strides = array<i32: 2, 1>} : memref<10x16xf32, #tpu.memory_space<vmem>>, vector<5x16xf32>
    %50 = arith.maximumf %48, %49 : vector<5x16xf32>
    %51 = vector.broadcast %1 : vector<1x16xf32> to vector<5x16xf32>
    %52 = arith.addf %50, %51 : vector<5x16xf32>
    %cst_55 = arith.constant 0.000000e+00 : f32
    %53 = vector.broadcast %cst_55 : f32 to vector<5x16xf32>
    %54 = arith.maximumf %52, %53 : vector<5x16xf32>
    %55 = arith.truncf %54 : vector<5x16xf32> to vector<5x16xbf16>
    %c0_56 = arith.constant 0 : index
    %c2_57 = arith.constant 2 : index
    %c0_58 = arith.constant 0 : index
    %c0_59 = arith.constant 0 : index
    %56 = vector.load %arg4[%c0_56, %c2_57, %c0_58, %c0_59] : memref<1x5x5x16xbf16, #tpu.memory_space<vmem>>, vector<1x1x5x16xbf16>
    %57 = vector.shape_cast %56 : vector<1x1x5x16xbf16> to vector<5x16xbf16>
    %58 = vector.shape_cast %55 : vector<5x16xbf16> to vector<1x1x5x16xbf16>
    tpu.vector_store %arg4[%c0_56, %c2_57, %c0_58, %c0_59], %58 {strides = array<i32>} : memref<1x5x5x16xbf16, #tpu.memory_space<vmem>>, vector<1x1x5x16xbf16>,
    %c0_60 = arith.constant 0 : index
    %c6 = arith.constant 6 : index
    %c0_61 = arith.constant 0 : index
    %c0_62 = arith.constant 0 : index
    %59 = vector.load %arg1[%c0_60, %c6, %c0_61, %c0_62] : memref<1x10x10x150xbf16, #tpu.memory_space<vmem>>, vector<1x1x10x150xbf16>
    %60 = vector.shape_cast %59 : vector<1x1x10x150xbf16> to vector<10x150xbf16>
    %cst_63 = arith.constant dense<0.000000e+00> : vector<10x16xf32>
    %61 = tpu.matmul %60, %0, %cst_63 {dimension_numbers = #tpu.dot_dimension_numbers<[1], [0], [0], [1], [0, 0, 1, 1], [], []>} : vector<10x150xbf16>, vector<150x16xbf16>, vector<10x16xf32> -> vector<10x16xf32>
    %c0_64 = arith.constant 0 : index
    %c7 = arith.constant 7 : index
    %c0_65 = arith.constant 0 : index
    %c0_66 = arith.constant 0 : index
    %62 = vector.load %arg1[%c0_64, %c7, %c0_65, %c0_66] : memref<1x10x10x150xbf16, #tpu.memory_space<vmem>>, vector<1x1x10x150xbf16>
    %63 = vector.shape_cast %62 : vector<1x1x10x150xbf16> to vector<10x150xbf16>
    %cst_67 = arith.constant dense<0.000000e+00> : vector<10x16xf32>
    %64 = tpu.matmul %63, %0, %cst_67 {dimension_numbers = #tpu.dot_dimension_numbers<[1], [0], [0], [1], [0, 0, 1, 1], [], []>} : vector<10x150xbf16>, vector<150x16xbf16>, vector<10x16xf32> -> vector<10x16xf32>
    %65 = arith.maximumf %61, %64 : vector<10x16xf32>
    %c0_68 = arith.constant 0 : index
    %c0_69 = arith.constant 0 : index
    %66 = vector.load %arg5[%c0_68, %c0_69] : memref<10x16xf32, #tpu.memory_space<vmem>>, vector<10x16xf32>
    tpu.vector_store %arg5[%c0_68, %c0_69], %65 {strides = array<i32>} : memref<10x16xf32, #tpu.memory_space<vmem>>, vector<10x16xf32>,
    %c0_70 = arith.constant 0 : index
    %c0_71 = arith.constant 0 : index
    %67 = tpu.strided_load %arg5[%c0_70, %c0_71] {strides = array<i32: 2, 1>} : memref<10x16xf32, #tpu.memory_space<vmem>>, vector<5x16xf32>
    %c1_72 = arith.constant 1 : index
    %c0_73 = arith.constant 0 : index
    %68 = tpu.strided_load %arg5[%c1_72, %c0_73] {strides = array<i32: 2, 1>} : memref<10x16xf32, #tpu.memory_space<vmem>>, vector<5x16xf32>
    %69 = arith.maximumf %67, %68 : vector<5x16xf32>
    %70 = vector.broadcast %1 : vector<1x16xf32> to vector<5x16xf32>
    %71 = arith.addf %69, %70 : vector<5x16xf32>
    %cst_74 = arith.constant 0.000000e+00 : f32
    %72 = vector.broadcast %cst_74 : f32 to vector<5x16xf32>
    %73 = arith.maximumf %71, %72 : vector<5x16xf32>
    %74 = arith.truncf %73 : vector<5x16xf32> to vector<5x16xbf16>
    %c0_75 = arith.constant 0 : index
    %c3_76 = arith.constant 3 : index
    %c0_77 = arith.constant 0 : index
    %c0_78 = arith.constant 0 : index
    %75 = vector.load %arg4[%c0_75, %c3_76, %c0_77, %c0_78] : memref<1x5x5x16xbf16, #tpu.memory_space<vmem>>, vector<1x1x5x16xbf16>
    %76 = vector.shape_cast %75 : vector<1x1x5x16xbf16> to vector<5x16xbf16>
    %77 = vector.shape_cast %74 : vector<5x16xbf16> to vector<1x1x5x16xbf16>
    tpu.vector_store %arg4[%c0_75, %c3_76, %c0_77, %c0_78], %77 {strides = array<i32>} : memref<1x5x5x16xbf16, #tpu.memory_space<vmem>>, vector<1x1x5x16xbf16>,
    %c0_79 = arith.constant 0 : index
    %c8 = arith.constant 8 : index
    %c0_80 = arith.constant 0 : index
    %c0_81 = arith.constant 0 : index
    %78 = vector.load %arg1[%c0_79, %c8, %c0_80, %c0_81] : memref<1x10x10x150xbf16, #tpu.memory_space<vmem>>, vector<1x1x10x150xbf16>
    %79 = vector.shape_cast %78 : vector<1x1x10x150xbf16> to vector<10x150xbf16>
    %cst_82 = arith.constant dense<0.000000e+00> : vector<10x16xf32>
    %80 = tpu.matmul %79, %0, %cst_82 {dimension_numbers = #tpu.dot_dimension_numbers<[1], [0], [0], [1], [0, 0, 1, 1], [], []>} : vector<10x150xbf16>, vector<150x16xbf16>, vector<10x16xf32> -> vector<10x16xf32>
    %c0_83 = arith.constant 0 : index
    %c9 = arith.constant 9 : index
    %c0_84 = arith.constant 0 : index
    %c0_85 = arith.constant 0 : index
    %81 = vector.load %arg1[%c0_83, %c9, %c0_84, %c0_85] : memref<1x10x10x150xbf16, #tpu.memory_space<vmem>>, vector<1x1x10x150xbf16>
    %82 = vector.shape_cast %81 : vector<1x1x10x150xbf16> to vector<10x150xbf16>
    %cst_86 = arith.constant dense<0.000000e+00> : vector<10x16xf32>
    %83 = tpu.matmul %82, %0, %cst_86 {dimension_numbers = #tpu.dot_dimension_numbers<[1], [0], [0], [1], [0, 0, 1, 1], [], []>} : vector<10x150xbf16>, vector<150x16xbf16>, vector<10x16xf32> -> vector<10x16xf32>
    %84 = arith.maximumf %80, %83 : vector<10x16xf32>
    %c0_87 = arith.constant 0 : index
    %c0_88 = arith.constant 0 : index
    %85 = vector.load %arg5[%c0_87, %c0_88] : memref<10x16xf32, #tpu.memory_space<vmem>>, vector<10x16xf32>
    tpu.vector_store %arg5[%c0_87, %c0_88], %84 {strides = array<i32>} : memref<10x16xf32, #tpu.memory_space<vmem>>, vector<10x16xf32>,
    %c0_89 = arith.constant 0 : index
    %c0_90 = arith.constant 0 : index
    %86 = tpu.strided_load %arg5[%c0_89, %c0_90] {strides = array<i32: 2, 1>} : memref<10x16xf32, #tpu.memory_space<vmem>>, vector<5x16xf32>
    %c1_91 = arith.constant 1 : index
    %c0_92 = arith.constant 0 : index
    %87 = tpu.strided_load %arg5[%c1_91, %c0_92] {strides = array<i32: 2, 1>} : memref<10x16xf32, #tpu.memory_space<vmem>>, vector<5x16xf32>
    %88 = arith.maximumf %86, %87 : vector<5x16xf32>
    %89 = vector.broadcast %1 : vector<1x16xf32> to vector<5x16xf32>
    %90 = arith.addf %88, %89 : vector<5x16xf32>
    %cst_93 = arith.constant 0.000000e+00 : f32
    %91 = vector.broadcast %cst_93 : f32 to vector<5x16xf32>
    %92 = arith.maximumf %90, %91 : vector<5x16xf32>
    %93 = arith.truncf %92 : vector<5x16xf32> to vector<5x16xbf16>
    %c0_94 = arith.constant 0 : index
    %c4_95 = arith.constant 4 : index
    %c0_96 = arith.constant 0 : index
    %c0_97 = arith.constant 0 : index
    %94 = vector.load %arg4[%c0_94, %c4_95, %c0_96, %c0_97] : memref<1x5x5x16xbf16, #tpu.memory_space<vmem>>, vector<1x1x5x16xbf16>
    %95 = vector.shape_cast %94 : vector<1x1x5x16xbf16> to vector<5x16xbf16>
    %96 = vector.shape_cast %93 : vector<5x16xbf16> to vector<1x1x5x16xbf16>
    tpu.vector_store %arg4[%c0_94, %c4_95, %c0_96, %c0_97], %96 {strides = array<i32>} : memref<1x5x5x16xbf16, #tpu.memory_space<vmem>>, vector<1x1x5x16xbf16>,
    return
  }
  func.func @transform_0(%arg0: i32) -> (i32, i32, i32, i32) {
    %c0_i32 = arith.constant 0 : i32
    %c0_i32_0 = arith.constant 0 : i32
    %c0_i32_1 = arith.constant 0 : i32
    %c0_i32_2 = arith.constant 0 : i32
    return %arg0, %c0_i32, %c0_i32_0, %c0_i32_1 : i32, i32, i32, i32
  }
  func.func @transform_1(%arg0: i32) -> (i32, i32) {
    %c0_i32 = arith.constant 0 : i32
    %c0_i32_0 = arith.constant 0 : i32
    %c0_i32_1 = arith.constant 0 : i32
    return %c0_i32, %c0_i32_0 : i32, i32
  }
  func.func @transform_2(%arg0: i32) -> (i32, i32) {
    %c0_i32 = arith.constant 0 : i32
    %c0_i32_0 = arith.constant 0 : i32
    %c0_i32_1 = arith.constant 0 : i32
    return %c0_i32, %c0_i32_0 : i32, i32
  }
  func.func @transform_3(%arg0: i32) -> (i32, i32, i32, i32) {
    %c0_i32 = arith.constant 0 : i32
    %c0_i32_0 = arith.constant 0 : i32
    %c0_i32_1 = arith.constant 0 : i32
    %c0_i32_2 = arith.constant 0 : i32
    return %arg0, %c0_i32, %c0_i32_0, %c0_i32_1 : i32, i32, i32, i32
  }
}

module attributes {stable_mosaic.version = 11 : i64} {
  func.func @_mlp_kernel(%arg0: i32, %arg1: memref<2x400xbf16, #tpu.memory_space<vmem>>, %arg2: memref<400x120xbf16, #tpu.memory_space<vmem>>, %arg3: memref<1x120xf32, #tpu.memory_space<vmem>>, %arg4: memref<120x84xbf16, #tpu.memory_space<vmem>>, %arg5: memref<1x84xf32, #tpu.memory_space<vmem>>, %arg6: memref<84x10xbf16, #tpu.memory_space<vmem>>, %arg7: memref<1x10xf32, #tpu.memory_space<vmem>>, %arg8: memref<2x10xf32, #tpu.memory_space<vmem>>) attributes {dimension_semantics = [#tpu.dimension_semantics<parallel>], iteration_bounds = array<i64: 1>, scalar_prefetch = 0 : i64, scratch_operands = 0 : i64, tpu.core_type = #tpu.core_type<tc>, window_params = [{transform_indices = @transform_0, window_bounds = array<i64: 2, 400>}, {pipeline_mode = #tpu.pipeline_mode<synchronous>, transform_indices = @transform_1, window_bounds = array<i64: 400, 120>}, {pipeline_mode = #tpu.pipeline_mode<synchronous>, transform_indices = @transform_2, window_bounds = array<i64: 1, 120>}, {pipeline_mode = #tpu.pipeline_mode<synchronous>, transform_indices = @transform_3, window_bounds = array<i64: 120, 84>}, {pipeline_mode = #tpu.pipeline_mode<synchronous>, transform_indices = @transform_4, window_bounds = array<i64: 1, 84>}, {pipeline_mode = #tpu.pipeline_mode<synchronous>, transform_indices = @transform_5, window_bounds = array<i64: 84, 10>}, {pipeline_mode = #tpu.pipeline_mode<synchronous>, transform_indices = @transform_6, window_bounds = array<i64: 1, 10>}, {transform_indices = @transform_7, window_bounds = array<i64: 2, 10>}]} {
    %c0 = arith.constant 0 : index
    %c0_0 = arith.constant 0 : index
    %0 = vector.load %arg1[%c0, %c0_0] : memref<2x400xbf16, #tpu.memory_space<vmem>>, vector<2x400xbf16>
    %c0_1 = arith.constant 0 : index
    %c0_2 = arith.constant 0 : index
    %1 = vector.load %arg2[%c0_1, %c0_2] : memref<400x120xbf16, #tpu.memory_space<vmem>>, vector<400x120xbf16>
    %cst = arith.constant dense<0.000000e+00> : vector<2x120xf32>
    %2 = tpu.matmul %0, %1, %cst {dimension_numbers = #tpu.dot_dimension_numbers<[1], [0], [0], [1], [0, 0, 1, 1], [], []>} : vector<2x400xbf16>, vector<400x120xbf16>, vector<2x120xf32> -> vector<2x120xf32>
    %c0_3 = arith.constant 0 : index
    %c0_4 = arith.constant 0 : index
    %3 = vector.load %arg3[%c0_3, %c0_4] : memref<1x120xf32, #tpu.memory_space<vmem>>, vector<1x120xf32>
    %4 = vector.broadcast %3 : vector<1x120xf32> to vector<2x120xf32>
    %5 = arith.addf %2, %4 : vector<2x120xf32>
    %cst_5 = arith.constant 0.000000e+00 : f32
    %6 = vector.broadcast %cst_5 : f32 to vector<2x120xf32>
    %7 = arith.subf %6, %5 : vector<2x120xf32>
    %8 = math.exp %7 : vector<2x120xf32>
    %cst_6 = arith.constant 1.000000e+00 : f32
    %9 = vector.broadcast %cst_6 : f32 to vector<2x120xf32>
    %10 = arith.addf %9, %8 : vector<2x120xf32>
    %11 = tpu.reciprocal %10 {approx = true} : vector<2x120xf32> -> vector<2x120xf32>
    %12 = arith.truncf %11 : vector<2x120xf32> to vector<2x120xbf16>
    %c0_7 = arith.constant 0 : index
    %c0_8 = arith.constant 0 : index
    %13 = vector.load %arg4[%c0_7, %c0_8] : memref<120x84xbf16, #tpu.memory_space<vmem>>, vector<120x84xbf16>
    %cst_9 = arith.constant dense<0.000000e+00> : vector<2x84xf32>
    %14 = tpu.matmul %12, %13, %cst_9 {dimension_numbers = #tpu.dot_dimension_numbers<[1], [0], [0], [1], [0, 0, 1, 1], [], []>} : vector<2x120xbf16>, vector<120x84xbf16>, vector<2x84xf32> -> vector<2x84xf32>
    %c0_10 = arith.constant 0 : index
    %c0_11 = arith.constant 0 : index
    %15 = vector.load %arg5[%c0_10, %c0_11] : memref<1x84xf32, #tpu.memory_space<vmem>>, vector<1x84xf32>
    %16 = vector.broadcast %15 : vector<1x84xf32> to vector<2x84xf32>
    %17 = arith.addf %14, %16 : vector<2x84xf32>
    %cst_12 = arith.constant 0.000000e+00 : f32
    %18 = vector.broadcast %cst_12 : f32 to vector<2x84xf32>
    %19 = arith.subf %18, %17 : vector<2x84xf32>
    %20 = math.exp %19 : vector<2x84xf32>
    %cst_13 = arith.constant 1.000000e+00 : f32
    %21 = vector.broadcast %cst_13 : f32 to vector<2x84xf32>
    %22 = arith.addf %21, %20 : vector<2x84xf32>
    %23 = tpu.reciprocal %22 {approx = true} : vector<2x84xf32> -> vector<2x84xf32>
    %24 = arith.truncf %23 : vector<2x84xf32> to vector<2x84xbf16>
    %c0_14 = arith.constant 0 : index
    %c0_15 = arith.constant 0 : index
    %25 = vector.load %arg6[%c0_14, %c0_15] : memref<84x10xbf16, #tpu.memory_space<vmem>>, vector<84x10xbf16>
    %cst_16 = arith.constant dense<0.000000e+00> : vector<2x10xf32>
    %26 = tpu.matmul %24, %25, %cst_16 {dimension_numbers = #tpu.dot_dimension_numbers<[1], [0], [0], [1], [0, 0, 1, 1], [], []>} : vector<2x84xbf16>, vector<84x10xbf16>, vector<2x10xf32> -> vector<2x10xf32>
    %c0_17 = arith.constant 0 : index
    %c0_18 = arith.constant 0 : index
    %27 = vector.load %arg7[%c0_17, %c0_18] : memref<1x10xf32, #tpu.memory_space<vmem>>, vector<1x10xf32>
    %28 = vector.broadcast %27 : vector<1x10xf32> to vector<2x10xf32>
    %29 = arith.addf %26, %28 : vector<2x10xf32>
    %c0_19 = arith.constant 0 : index
    %c0_20 = arith.constant 0 : index
    %30 = vector.load %arg8[%c0_19, %c0_20] : memref<2x10xf32, #tpu.memory_space<vmem>>, vector<2x10xf32>
    tpu.vector_store %arg8[%c0_19, %c0_20], %29 {strides = array<i32>} : memref<2x10xf32, #tpu.memory_space<vmem>>, vector<2x10xf32>,
    return
  }
  func.func @transform_0(%arg0: i32) -> (i32, i32) {
    %c0_i32 = arith.constant 0 : i32
    %c0_i32_0 = arith.constant 0 : i32
    return %arg0, %c0_i32 : i32, i32
  }
  func.func @transform_1(%arg0: i32) -> (i32, i32) {
    %c0_i32 = arith.constant 0 : i32
    %c0_i32_0 = arith.constant 0 : i32
    %c0_i32_1 = arith.constant 0 : i32
    return %c0_i32, %c0_i32_0 : i32, i32
  }
  func.func @transform_2(%arg0: i32) -> (i32, i32) {
    %c0_i32 = arith.constant 0 : i32
    %c0_i32_0 = arith.constant 0 : i32
    %c0_i32_1 = arith.constant 0 : i32
    return %c0_i32, %c0_i32_0 : i32, i32
  }
  func.func @transform_3(%arg0: i32) -> (i32, i32) {
    %c0_i32 = arith.constant 0 : i32
    %c0_i32_0 = arith.constant 0 : i32
    %c0_i32_1 = arith.constant 0 : i32
    return %c0_i32, %c0_i32_0 : i32, i32
  }
  func.func @transform_4(%arg0: i32) -> (i32, i32) {
    %c0_i32 = arith.constant 0 : i32
    %c0_i32_0 = arith.constant 0 : i32
    %c0_i32_1 = arith.constant 0 : i32
    return %c0_i32, %c0_i32_0 : i32, i32
  }
  func.func @transform_5(%arg0: i32) -> (i32, i32) {
    %c0_i32 = arith.constant 0 : i32
    %c0_i32_0 = arith.constant 0 : i32
    %c0_i32_1 = arith.constant 0 : i32
    return %c0_i32, %c0_i32_0 : i32, i32
  }
  func.func @transform_6(%arg0: i32) -> (i32, i32) {
    %c0_i32 = arith.constant 0 : i32
    %c0_i32_0 = arith.constant 0 : i32
    %c0_i32_1 = arith.constant 0 : i32
    return %c0_i32, %c0_i32_0 : i32, i32
  }
  func.func @transform_7(%arg0: i32) -> (i32, i32) {
    %c0_i32 = arith.constant 0 : i32
    %c0_i32_0 = arith.constant 0 : i32
    return %arg0, %c0_i32 : i32, i32
  }
}

</mosaic_0001>

<llo_original>
// kernel: lenet5_forward.4
$region0: #{lenet5_forward.4}
  #allocation0 [shape = 'u32[]', space=smem, size = 0x4, offset = 0x4, fixed_abs, tag = 'smem constant byte address 0x4 - core index']
  #allocation1 [shape = 'u32[72,128]{1,0:T(1,128)}', space=vmem, size = 0x9000, scoped, tag = 'internal scratch']
  #allocation2 [shape = 'f32[10,16]{1,0:T(8,128)}', space=vmem, size = 0x2000, scoped, tag = 'scratch operand']
  %s0 = inlined_call_operand.vmem [shape: bf16[2,10,10,150], index: 0, kind: input, shape index: {}]
  %s1 = inlined_call_operand.vmem [shape: bf16[150,16], index: 1, kind: input, shape index: {}]
  %s2 = inlined_call_operand.vmem [shape: f32[1,16], index: 2, kind: input, shape index: {}]
  %s3 = inlined_call_operand.vmem [shape: bf16[2,5,5,16], index: 3, kind: output, shape index: {}]
  %s4 = sld [smem:[#allocation0]]
  $region45: #{lenet5_forward.4} parent=0
    _
  %s6 = ssub.s32 1, %s4
  %s7 = scalar_select 0, %s6, %s4
  loop: start=0, step=1, limit=4
  $region2: #{lenet5_forward.4} parent=0 // loop_pre_header
    _
  $region3: #{lenet5_forward.4} parent=0 // loop_header
    %s9 = sphi 0, %s13
    %p10 = scmp.ge.s32.totalorder %s9, 4
    %s19 = sphi 0, %s21
    %s22 = sphi 0, %s19
    %s23 = sphi 0, %s22
    %s39 = sphi 0, %s23
    %s43 = sphi 0, %s43
    %s45 = sphi 0, %s43
    %s46 = sphi 0, %s45
    %s60 = sphi 0, %s46
    %s64 = sphi 0, %s64
    %s66 = sphi 0, %s64
    %s67 = sphi 0, %s66
    %s81 = sphi 0, %s67
    %s87 = sphi 0, %s89
    %s90 = sphi 0, %s87
    %s91 = sphi 0, %s90
    %s107 = sphi 0, %s91
  $region4: #{lenet5_forward.4} parent=0 // loop_header_branch
    %12 = sbr.rel (%p10) target = $region8
  $region5: #{lenet5_forward.4} parent=0 // loop_body
    %s14 = ssub.s32 %s9, 1
    %s15 = ssub.s32 %s9, 2
    %s16 = sadd.s32 %s9, 1
    %s17 = ssub.s32 %s9, %s16
    %p18 = scmp.eq.s32.totalorder %s17, 0
    %s20 = sadd.s32 %s19, 1
    %s21 = scalar_select %p18, %s19, %s20
    %p24 = pneg %p18
    %p25 = scmp.eq.s32.totalorder %s9, 1
    %p26 = por %p24, %p25
    %p27 = scmp.ne.s32.totalorder %s19, %s22
    %p28 = scmp.eq.s32.totalorder %s9, 0
    %p29 = por %p27, %p28
    %p30 = scmp.ne.s32.totalorder %s19, %s22
    %p31 = scmp.eq.s32.totalorder %s14, 1
    %p32 = por %p30, %p31
    %p33 = scmp.ne.s32.totalorder %s22, %s23
    %p34 = scmp.eq.s32.totalorder %s14, 0
    %p35 = por %p33, %p34
    %p36 = scmp.ne.s32.totalorder %s22, %s23
    %p37 = scmp.eq.s32.totalorder %s15, 1
    %p38 = por %p36, %p37
    %p40 = scmp.ne.s32.totalorder %s23, %s39
    %p41 = scmp.eq.s32.totalorder %s15, 0
    %p42 = por %p40, %p41
    %s44 = sadd.s32 %s43, 1
    %p47 = scmp.eq.s32.totalorder %s9, 1
    %p48 = scmp.ne.s32.totalorder %s43, %s45
    %p49 = scmp.eq.s32.totalorder %s9, 0
    %p50 = por %p48, %p49
    %p51 = scmp.ne.s32.totalorder %s43, %s45
    %p52 = scmp.eq.s32.totalorder %s14, 1
    %p53 = por %p51, %p52
    %p54 = scmp.ne.s32.totalorder %s45, %s46
    %p55 = scmp.eq.s32.totalorder %s14, 0
    %p56 = por %p54, %p55
    %p57 = scmp.ne.s32.totalorder %s45, %s46
    %p58 = scmp.eq.s32.totalorder %s15, 1
    %p59 = por %p57, %p58
    %p61 = scmp.ne.s32.totalorder %s46, %s60
    %p62 = scmp.eq.s32.totalorder %s15, 0
    %p63 = por %p61, %p62
    %s65 = sadd.s32 %s64, 1
    %p68 = scmp.eq.s32.totalorder %s9, 1
    %p69 = scmp.ne.s32.totalorder %s64, %s66
    %p70 = scmp.eq.s32.totalorder %s9, 0
    %p71 = por %p69, %p70
    %p72 = scmp.ne.s32.totalorder %s64, %s66
    %p73 = scmp.eq.s32.totalorder %s14, 1
    %p74 = por %p72, %p73
    %p75 = scmp.ne.s32.totalorder %s66, %s67
    %p76 = scmp.eq.s32.totalorder %s14, 0
    %p77 = por %p75, %p76
    %p78 = scmp.ne.s32.totalorder %s66, %s67
    %p79 = scmp.eq.s32.totalorder %s15, 1
    %p80 = por %p78, %p79
    %p82 = scmp.ne.s32.totalorder %s67, %s81
    %p83 = scmp.eq.s32.totalorder %s15, 0
    %p84 = por %p82, %p83
    %s85 = ssub.s32 %s9, %s16
    %p86 = scmp.eq.s32.totalorder %s85, 0
    %s88 = sadd.s32 %s87, 1
    %s89 = scalar_select %p86, %s87, %s88
    %p92 = pneg %p86
    %p93 = scmp.eq.s32.totalorder %s9, 1
    %p94 = por %p92, %p93
    %p95 = scmp.ne.s32.totalorder %s87, %s90
    %p96 = scmp.eq.s32.totalorder %s9, 0
    %p97 = por %p95, %p96
    %p98 = scmp.ne.s32.totalorder %s87, %s90
    %p99 = scmp.eq.s32.totalorder %s14, 1
    %p100 = por %p98, %p99
    %p101 = scmp.ne.s32.totalorder %s90, %s91
    %p102 = scmp.eq.s32.totalorder %s14, 0
    %p103 = por %p101, %p102
    %p104 = scmp.ne.s32.totalorder %s90, %s91
    %p105 = scmp.eq.s32.totalorder %s15, 1
    %p106 = por %p104, %p105
    %p108 = scmp.ne.s32.totalorder %s91, %s107
    %p109 = scmp.eq.s32.totalorder %s15, 0
    %p110 = por %p108, %p109
    %p111 = scmp.le.s32.totalorder 1, %s9
    %p112 = scmp.lt.s32.totalorder %s9, 3
    %p113 = pnand %p111, %p112
    %p114 = pneg %p113
    // Predicated region
    $region9: #{lenet5_forward.4} parent=5 // pred_check
      _
    $region10: #{lenet5_forward.4} parent=5 // pred_check_branch
      %116 = sbr.rel (%p113) target = $region12
    $region11: #{lenet5_forward.4} parent=5 // pred_region
      %s117 = ssub.s32 %s9, 1
      // Predicated region
      $region13: #{lenet5_forward.4} parent=11 // pred_check
        %p118 = pneg %p56
      $region14: #{lenet5_forward.4} parent=11 // pred_check_branch
        %120 = sbr.rel (%p118) target = $region16
      $region15: #{lenet5_forward.4} parent=11 // pred_region
        _
      $region16: #{lenet5_forward.4} parent=11 // pred_fallthru
        _
      // Predicated region
      $region17: #{lenet5_forward.4} parent=11 // pred_check
        %p121 = pneg %p77
      $region18: #{lenet5_forward.4} parent=11 // pred_check_branch
        %123 = sbr.rel (%p121) target = $region20
      $region19: #{lenet5_forward.4} parent=11 // pred_region
        _
      $region20: #{lenet5_forward.4} parent=11 // pred_fallthru
        _
    $region12: #{lenet5_forward.4} parent=5 // pred_fallthru
      _
    %p124 = scmp.lt.s32.totalorder %s9, 2
    // Predicated region
    $region21: #{lenet5_forward.4} parent=5 // pred_check
      %p125 = pneg %p124
    $region22: #{lenet5_forward.4} parent=5 // pred_check_branch
      %127 = sbr.rel (%p125) target = $region24
    $region23: #{lenet5_forward.4} parent=5 // pred_region
      // Predicated region
      $region25: #{lenet5_forward.4} parent=23 // pred_check
        %p128 = pneg %p29
      $region26: #{lenet5_forward.4} parent=23 // pred_check_branch
        %130 = sbr.rel (%p128) target = $region28
      $region27: #{lenet5_forward.4} parent=23 // pred_region
        %p131 = scmp.lt.s32.totalorder %s9, 1
        %s132 = scalar_select %p131, %s9, 1
        %s133 = smul.addr %s132, 40
        %s134 = smul.addr %s133, 4
        %s135 = scalar_lea.vmem %s0, %s134
      $region28: #{lenet5_forward.4} parent=23 // pred_fallthru
        _
    $region24: #{lenet5_forward.4} parent=5 // pred_fallthru
      _
    %p136 = scmp.le.s32.totalorder 1, %s9
    %p137 = scmp.lt.s32.totalorder %s9, 3
    %p138 = pnand %p136, %p137
    %p139 = pneg %p138
    // Predicated region
    $region29: #{lenet5_forward.4} parent=5 // pred_check
      _
    $region30: #{lenet5_forward.4} parent=5 // pred_check_branch
      %141 = sbr.rel (%p138) target = $region32
    $region31: #{lenet5_forward.4} parent=5 // pred_region
      %s142 = ssub.s32 %s9, 1
      %p143 = scmp.lt.s32.totalorder %s14, 1
      %s144 = scalar_select %p143, %s14, 1
      %s145 = smul.addr %s144, 40
      %s146 = smul.addr %s145, 4
      %s147 = scalar_lea.vmem %s0, %s146
      %p148 = pneg %p35
      %p149 = pneg %p32
      %p150 = pneg %p56
      %p151 = pneg %p53
      %p152 = pneg %p77
      %p153 = pneg %p74
      %p154 = pneg %p103
      %p155 = pneg %p100
      %p156 = scmp.lt.s32.totalorder %s14, 1
      %s157 = scalar_select %p156, %s14, 1
      %s158 = smul.addr %s157, 5
      %s159 = smul.addr %s158, 4
      %s160 = scalar_lea.vmem %s3, %s159
      %p161 = scmp.lt.s32.totalorder %s14, 1
      %s162 = scalar_select %p161, %s14, 1
      %s163 = smul.addr %s162, 40
      %s164 = smul.addr %s163, 4
      %s165 = scalar_lea.vmem %s0, %s164
      %p166 = scmp.lt.s32.totalorder %s14, 1
      %s167 = scalar_select %p166, %s14, 1
      %s168 = smul.addr %s167, 5
      %s169 = smul.addr %s168, 4
      %s170 = scalar_lea.vmem %s3, %s169
      %v172 = vld [vmem:[%s1] sm:$0xf]
      %v173 = vld [vmem:[%s1 + $0x4] sm:$0xf]
      %v174 = vld [vmem:[%s1 + $0x8] sm:$0xf]
      %v175 = vld [vmem:[%s1 + $0xc] sm:$0xf]
      %v176 = vld [vmem:[%s1 + $0x10] sm:$0xf]
      %v177 = vld [vmem:[%s1 + $0x14] sm:$0xf]
      %v178 = vld [vmem:[%s1 + $0x18] sm:$0xf]
      %v179 = vld [vmem:[%s1 + $0x1c] sm:$0xf]
      %v180 = vld [vmem:[%s1 + $0x20] sm:$0xf]
      %v181 = vld [vmem:[%s1 + $0x24] sm:$0xf]
      %v182 = vld [vmem:[%s1 + $0x28] sm:$0xf]
      %v183 = vld [vmem:[%s1 + $0x2c] sm:$0xf]
      %v184 = vld [vmem:[%s1 + $0x30] sm:$0xf]
      %v185 = vld [vmem:[%s1 + $0x34] sm:$0xf]
      %v186 = vld [vmem:[%s1 + $0x38] sm:$0xf]
      %v187 = vld [vmem:[%s1 + $0x3c] sm:$0xf]
      %v188 = vld [vmem:[%s1 + $0x40] sm:$0xf]
      %v189 = vld [vmem:[%s1 + $0x44] sm:$0xf]
      %v190 = vld [vmem:[%s1 + $0x48] sm:$0x7]
      %v191 = vld [vmem:[%s2] sm:$0x1]
      %v192 = vld [vmem:[%s165] sm:$0xff]
      %v193 = vld [vmem:[%s165 + $0x8] sm:$0x11]
      %v196 = vunpack.c.l.b16 %v192
      %v197 = vunpack.c.h.b16 %v192
      %v198 = vunpack.c.l.b16 %v193
      %v199 = vunpack.c.h.b16 %v193
      %v200 = vpack.c.b16 %v198, %v196
      %v201 = vpack.c.b16 %v199, %v197
      %v222 = vunpack.c.l.b16 %v172
      %v223 = vunpack.c.l.b16 %v173
      %v224 = vunpack.c.l.b16 %v174
      %v225 = vunpack.c.l.b16 %v175
      %v226 = vunpack.c.l.b16 %v176
      %v227 = vunpack.c.l.b16 %v177
      %v228 = vunpack.c.l.b16 %v178
      %v229 = vunpack.c.l.b16 %v179
      %v230 = vunpack.c.l.b16 %v180
      %v231 = vunpack.c.l.b16 %v181
      %v232 = vunpack.c.l.b16 %v182
      %v233 = vunpack.c.l.b16 %v183
      %v234 = vunpack.c.l.b16 %v184
      %v235 = vunpack.c.l.b16 %v185
      %v236 = vunpack.c.l.b16 %v186
      %v237 = vunpack.c.l.b16 %v187
      %v238 = vunpack.c.l.b16 %v188
      %v239 = vunpack.c.l.b16 %v189
      %v240 = vunpack.c.l.b16 %v190
      %v241 = vpack.c.b16 %v223, %v222
      %v242 = vpack.c.b16 %v225, %v224
      %v243 = vpack.c.b16 %v227, %v226
      %v244 = vpack.c.b16 %v229, %v228
      %v245 = vpack.c.b16 %v231, %v230
      %v246 = vpack.c.b16 %v233, %v232
      %v247 = vpack.c.b16 %v235, %v234
      %v248 = vpack.c.b16 %v237, %v236
      %v249 = vpack.c.b16 %v239, %v238
      %v250 = vpack.c.b16 %v240, %v240
      %vm260 = vcmask 179200
      %v262 = vsel %vm260, %v201, 0
      %vm264 = vcmask 1042432
      %v266 = vsel %vm264, %v250, 0
      %268 = vmatpush.bf16.msra.mxu0 %v248
      %269 = vmatpush.bf16.msra.mxu0 %v247
      %270 = vmatpush.bf16.msra.mxu0 %v246
      %271 = vmatpush.bf16.msra.mxu0 %v245
      %272 = vmatpush.bf16.msra.mxu0 %v244
      %273 = vmatpush.bf16.msra.mxu0 %v243
      %274 = vmatpush.bf16.msra.mxu0 %v242
      %275 = vmatpush.bf16.msra.mxu0 %v241
      %276 = vmatmul.bf16.gmra.mxu0 %v200
      %v277 = vpop.f32.mrf.mxu0
      %v278 = vadd.f32 0.0, %v277
      %v279 = vpop.f32.mrf.mxu0
      %v280 = vadd.f32 0.0, %v279
      %281 = vdwg.mxu0
      %282 = vmatpush.bf16.msra.mxu0 0
      %283 = vmatpush.bf16.msra.mxu0 0
      %284 = vmatpush.bf16.msra.mxu0 0
      %285 = vmatpush.bf16.msra.mxu0 0
      %286 = vmatpush.bf16.msra.mxu0 0
      %287 = vmatpush.bf16.msra.mxu0 0
      %288 = vmatpush.bf16.msra.mxu0 %v266
      %289 = vmatpush.bf16.msra.mxu0 %v249
      %290 = vmatmul.bf16.gmra.mxu0 %v262
      %v291 = vpop.f32.mrf.mxu0
      %v292 = vadd.f32 %v278, %v291
      %v293 = vpop.f32.mrf.mxu0
      %v294 = vadd.f32 %v280, %v293
      %295 = vdwg.mxu0
      %s296 = scalar_lea.vmem %s165, 16
      %v297 = vld [vmem:[%s296] sm:$0xff]
      %v298 = vld [vmem:[%s296 + $0x8] sm:$0x11]
      %v301 = vunpack.c.l.b16 %v297
      %v302 = vunpack.c.h.b16 %v297
      %v303 = vunpack.c.l.b16 %v298
      %v304 = vunpack.c.h.b16 %v298
      %v305 = vpack.c.b16 %v303, %v301
      %v306 = vpack.c.b16 %v304, %v302
      %v309 = vsel %vm260, %v306, 0
      %311 = vmatpush.bf16.msra.mxu0 %v248
      %312 = vmatpush.bf16.msra.mxu0 %v247
      %313 = vmatpush.bf16.msra.mxu0 %v246
      %314 = vmatpush.bf16.msra.mxu0 %v245
      %315 = vmatpush.bf16.msra.mxu0 %v244
      %316 = vmatpush.bf16.msra.mxu0 %v243
      %317 = vmatpush.bf16.msra.mxu0 %v242
      %318 = vmatpush.bf16.msra.mxu0 %v241
      %319 = vmatmul.bf16.gmra.mxu0 %v305
      %v320 = vpop.f32.mrf.mxu0
      %v321 = vadd.f32 0.0, %v320
      %v322 = vpop.f32.mrf.mxu0
      %v323 = vadd.f32 0.0, %v322
      %324 = vdwg.mxu0
      %325 = vmatpush.bf16.msra.mxu0 0
      %326 = vmatpush.bf16.msra.mxu0 0
      %327 = vmatpush.bf16.msra.mxu0 0
      %328 = vmatpush.bf16.msra.mxu0 0
      %329 = vmatpush.bf16.msra.mxu0 0
      %330 = vmatpush.bf16.msra.mxu0 0
      %331 = vmatpush.bf16.msra.mxu0 %v266
      %332 = vmatpush.bf16.msra.mxu0 %v249
      %333 = vmatmul.bf16.gmra.mxu0 %v309
      %v334 = vpop.f32.mrf.mxu0
      %v335 = vadd.f32 %v321, %v334
      %v336 = vpop.f32.mrf.mxu0
      %v337 = vadd.f32 %v323, %v336
      %338 = vdwg.mxu0
      %v339 = vmax.f32 %v292, %v335
      %v340 = vmax.f32 %v294, %v337
      %vm341 = vcmask 130048
      %342 = vst.msk [vmem:[#allocation2] sm:$0xff] %vm341, %v339
      %vm343 = vcmask 123904
      %344 = vst.msk [vmem:[#allocation2 + $0x8] sm:$0x3] %vm343, %v340
      %v345 = vld [vmem:[#allocation2] ss:$2 sm:$0x1f]
      %s346 = scalar_lea.vmem [#allocation2], 1
      %v347 = vld [vmem:[%s346] ss:$2 sm:$0x1f]
      %v348 = vmax.f32 %v345, %v347
      %v350 = vperm.slane %v191, 0
      %v352 = vadd.f32 %v348, %v350
      %v353 = vmax.f32 %v352, 0.0
      %v354 = vpack.c.bf16 %v353, %v353
      %vm355 = vcmask 124928
      %vm356 = vsmask.f32 2304
      %vm357 = vmand %vm355, %vm356
      %v358 = vld [vmem:[%s170] sm:$0x7]
      %v359 = vsel %vm357, %v354, %v358
      %360 = vst [vmem:[%s170] sm:$0x7] %v359
      %s361 = scalar_lea.vmem %s165, 32
      %v362 = vld [vmem:[%s361] sm:$0xff]
      %v363 = vld [vmem:[%s361 + $0x8] sm:$0x11]
      %v366 = vunpack.c.l.b16 %v362
      %v367 = vunpack.c.h.b16 %v362
      %v368 = vunpack.c.l.b16 %v363
      %v369 = vunpack.c.h.b16 %v363
      %v370 = vpack.c.b16 %v368, %v366
      %v371 = vpack.c.b16 %v369, %v367
      %v374 = vsel %vm260, %v371, 0
      %376 = vmatpush.bf16.msra.mxu0 %v248
      %377 = vmatpush.bf16.msra.mxu0 %v247
      %378 = vmatpush.bf16.msra.mxu0 %v246
      %379 = vmatpush.bf16.msra.mxu0 %v245
      %380 = vmatpush.bf16.msra.mxu0 %v244
      %381 = vmatpush.bf16.msra.mxu0 %v243
      %382 = vmatpush.bf16.msra.mxu0 %v242
      %383 = vmatpush.bf16.msra.mxu0 %v241
      %384 = vmatmul.bf16.gmra.mxu0 %v370
      %v385 = vpop.f32.mrf.mxu0
      %v386 = vadd.f32 0.0, %v385
      %v387 = vpop.f32.mrf.mxu0
      %v388 = vadd.f32 0.0, %v387
      %389 = vdwg.mxu0
      %390 = vmatpush.bf16.msra.mxu0 0
      %391 = vmatpush.bf16.msra.mxu0 0
      %392 = vmatpush.bf16.msra.mxu0 0
      %393 = vmatpush.bf16.msra.mxu0 0
      %394 = vmatpush.bf16.msra.mxu0 0
      %395 = vmatpush.bf16.msra.mxu0 0
      %396 = vmatpush.bf16.msra.mxu0 %v266
      %397 = vmatpush.bf16.msra.mxu0 %v249
      %398 = vmatmul.bf16.gmra.mxu0 %v374
      %v399 = vpop.f32.mrf.mxu0
      %v400 = vadd.f32 %v386, %v399
      %v401 = vpop.f32.mrf.mxu0
      %v402 = vadd.f32 %v388, %v401
      %403 = vdwg.mxu0
      %s404 = scalar_lea.vmem %s165, 48
      %v405 = vld [vmem:[%s404] sm:$0xff]
      %v406 = vld [vmem:[%s404 + $0x8] sm:$0x11]
      %v409 = vunpack.c.l.b16 %v405
      %v410 = vunpack.c.h.b16 %v405
      %v411 = vunpack.c.l.b16 %v406
      %v412 = vunpack.c.h.b16 %v406
      %v413 = vpack.c.b16 %v411, %v409
      %v414 = vpack.c.b16 %v412, %v410
      %v417 = vsel %vm260, %v414, 0
      %419 = vmatpush.bf16.msra.mxu0 %v248
      %420 = vmatpush.bf16.msra.mxu0 %v247
      %421 = vmatpush.bf16.msra.mxu0 %v246
      %422 = vmatpush.bf16.msra.mxu0 %v245
      %423 = vmatpush.bf16.msra.mxu0 %v244
      %424 = vmatpush.bf16.msra.mxu0 %v243
      %425 = vmatpush.bf16.msra.mxu0 %v242
      %426 = vmatpush.bf16.msra.mxu0 %v241
      %427 = vmatmul.bf16.gmra.mxu0 %v413
      %v428 = vpop.f32.mrf.mxu0
      %v429 = vadd.f32 0.0, %v428
      %v430 = vpop.f32.mrf.mxu0
      %v431 = vadd.f32 0.0, %v430
      %432 = vdwg.mxu0
      %433 = vmatpush.bf16.msra.mxu0 0
      %434 = vmatpush.bf16.msra.mxu0 0
      %435 = vmatpush.bf16.msra.mxu0 0
      %436 = vmatpush.bf16.msra.mxu0 0
      %437 = vmatpush.bf16.msra.mxu0 0
      %438 = vmatpush.bf16.msra.mxu0 0
      %439 = vmatpush.bf16.msra.mxu0 %v266
      %440 = vmatpush.bf16.msra.mxu0 %v249
      %441 = vmatmul.bf16.gmra.mxu0 %v417
      %v442 = vpop.f32.mrf.mxu0
      %v443 = vadd.f32 %v429, %v442
      %v444 = vpop.f32.mrf.mxu0
      %v445 = vadd.f32 %v431, %v444
      %446 = vdwg.mxu0
      %v447 = vmax.f32 %v400, %v443
      %v448 = vmax.f32 %v402, %v445
      %449 = vst.msk [vmem:[#allocation2] sm:$0xff] %vm341, %v447
      %450 = vst.msk [vmem:[#allocation2 + $0x8] sm:$0x3] %vm343, %v448
      %v451 = vld [vmem:[#allocation2] ss:$2 sm:$0x1f]
      %v452 = vld [vmem:[%s346] ss:$2 sm:$0x1f]
      %v453 = vmax.f32 %v451, %v452
      %v454 = vadd.f32 %v453, %v350
      %v455 = vmax.f32 %v454, 0.0
      %v456 = vpack.c.bf16 %v455, %v455
      %s457 = scalar_lea.vmem %s170, 4
      %v458 = vld [vmem:[%s457] sm:$0x7]
      %v459 = vsel %vm357, %v456, %v458
      %460 = vst [vmem:[%s457] sm:$0x7] %v459
      %s461 = scalar_lea.vmem %s165, 64
      %v462 = vld [vmem:[%s461] sm:$0xff]
      %v463 = vld [vmem:[%s461 + $0x8] sm:$0x11]
      %v466 = vunpack.c.l.b16 %v462
      %v467 = vunpack.c.h.b16 %v462
      %v468 = vunpack.c.l.b16 %v463
      %v469 = vunpack.c.h.b16 %v463
      %v470 = vpack.c.b16 %v468, %v466
      %v471 = vpack.c.b16 %v469, %v467
      %v474 = vsel %vm260, %v471, 0
      %476 = vmatpush.bf16.msra.mxu0 %v248
      %477 = vmatpush.bf16.msra.mxu0 %v247
      %478 = vmatpush.bf16.msra.mxu0 %v246
      %479 = vmatpush.bf16.msra.mxu0 %v245
      %480 = vmatpush.bf16.msra.mxu0 %v244
      %481 = vmatpush.bf16.msra.mxu0 %v243
      %482 = vmatpush.bf16.msra.mxu0 %v242
      %483 = vmatpush.bf16.msra.mxu0 %v241
      %484 = vmatmul.bf16.gmra.mxu0 %v470
      %v485 = vpop.f32.mrf.mxu0
      %v486 = vadd.f32 0.0, %v485
      %v487 = vpop.f32.mrf.mxu0
      %v488 = vadd.f32 0.0, %v487
      %489 = vdwg.mxu0
      %490 = vmatpush.bf16.msra.mxu0 0
      %491 = vmatpush.bf16.msra.mxu0 0
      %492 = vmatpush.bf16.msra.mxu0 0
      %493 = vmatpush.bf16.msra.mxu0 0
      %494 = vmatpush.bf16.msra.mxu0 0
      %495 = vmatpush.bf16.msra.mxu0 0
      %496 = vmatpush.bf16.msra.mxu0 %v266
      %497 = vmatpush.bf16.msra.mxu0 %v249
      %498 = vmatmul.bf16.gmra.mxu0 %v474
      %v499 = vpop.f32.mrf.mxu0
      %v500 = vadd.f32 %v486, %v499
      %v501 = vpop.f32.mrf.mxu0
      %v502 = vadd.f32 %v488, %v501
      %503 = vdwg.mxu0
      %s504 = scalar_lea.vmem %s165, 80
      %v505 = vld [vmem:[%s504] sm:$0xff]
      %v506 = vld [vmem:[%s504 + $0x8] sm:$0x11]
      %v509 = vunpack.c.l.b16 %v505
      %v510 = vunpack.c.h.b16 %v505
      %v511 = vunpack.c.l.b16 %v506
      %v512 = vunpack.c.h.b16 %v506
      %v513 = vpack.c.b16 %v511, %v509
      %v514 = vpack.c.b16 %v512, %v510
      %v517 = vsel %vm260, %v514, 0
      %519 = vmatpush.bf16.msra.mxu0 %v248
      %520 = vmatpush.bf16.msra.mxu0 %v247
      %521 = vmatpush.bf16.msra.mxu0 %v246
      %522 = vmatpush.bf16.msra.mxu0 %v245
      %523 = vmatpush.bf16.msra.mxu0 %v244
      %524 = vmatpush.bf16.msra.mxu0 %v243
      %525 = vmatpush.bf16.msra.mxu0 %v242
      %526 = vmatpush.bf16.msra.mxu0 %v241
      %527 = vmatmul.bf16.gmra.mxu0 %v513
      %v528 = vpop.f32.mrf.mxu0
      %v529 = vadd.f32 0.0, %v528
      %v530 = vpop.f32.mrf.mxu0
      %v531 = vadd.f32 0.0, %v530
      %532 = vdwg.mxu0
      %533 = vmatpush.bf16.msra.mxu0 0
      %534 = vmatpush.bf16.msra.mxu0 0
      %535 = vmatpush.bf16.msra.mxu0 0
      %536 = vmatpush.bf16.msra.mxu0 0
      %537 = vmatpush.bf16.msra.mxu0 0
      %538 = vmatpush.bf16.msra.mxu0 0
      %539 = vmatpush.bf16.msra.mxu0 %v266
      %540 = vmatpush.bf16.msra.mxu0 %v249
      %541 = vmatmul.bf16.gmra.mxu0 %v517
      %v542 = vpop.f32.mrf.mxu0
      %v543 = vadd.f32 %v529, %v542
      %v544 = vpop.f32.mrf.mxu0
      %v545 = vadd.f32 %v531, %v544
      %546 = vdwg.mxu0
      %v547 = vmax.f32 %v500, %v543
      %v548 = vmax.f32 %v502, %v545
      %549 = vst.msk [vmem:[#allocation2] sm:$0xff] %vm341, %v547
      %550 = vst.msk [vmem:[#allocation2 + $0x8] sm:$0x3] %vm343, %v548
      %v551 = vld [vmem:[#allocation2] ss:$2 sm:$0x1f]
      %v552 = vld [vmem:[%s346] ss:$2 sm:$0x1f]
      %v553 = vmax.f32 %v551, %v552
      %v554 = vadd.f32 %v553, %v350
      %v555 = vmax.f32 %v554, 0.0
      %v556 = vpack.c.bf16 %v555, %v555
      %s557 = scalar_lea.vmem %s170, 8
      %v558 = vld [vmem:[%s557] sm:$0x7]
      %v559 = vsel %vm357, %v556, %v558
      %560 = vst [vmem:[%s557] sm:$0x7] %v559
      %s561 = scalar_lea.vmem %s165, 96
      %v562 = vld [vmem:[%s561] sm:$0xff]
      %v563 = vld [vmem:[%s561 + $0x8] sm:$0x11]
      %v566 = vunpack.c.l.b16 %v562
      %v567 = vunpack.c.h.b16 %v562
      %v568 = vunpack.c.l.b16 %v563
      %v569 = vunpack.c.h.b16 %v563
      %v570 = vpack.c.b16 %v568, %v566
      %v571 = vpack.c.b16 %v569, %v567
      %v574 = vsel %vm260, %v571, 0
      %576 = vmatpush.bf16.msra.mxu0 %v248
      %577 = vmatpush.bf16.msra.mxu0 %v247
      %578 = vmatpush.bf16.msra.mxu0 %v246
      %579 = vmatpush.bf16.msra.mxu0 %v245
      %580 = vmatpush.bf16.msra.mxu0 %v244
      %581 = vmatpush.bf16.msra.mxu0 %v243
      %582 = vmatpush.bf16.msra.mxu0 %v242
      %583 = vmatpush.bf16.msra.mxu0 %v241
      %584 = vmatmul.bf16.gmra.mxu0 %v570
      %v585 = vpop.f32.mrf.mxu0
      %v586 = vadd.f32 0.0, %v585
      %v587 = vpop.f32.mrf.mxu0
      %v588 = vadd.f32 0.0, %v587
      %589 = vdwg.mxu0
      %590 = vmatpush.bf16.msra.mxu0 0
      %591 = vmatpush.bf16.msra.mxu0 0
      %592 = vmatpush.bf16.msra.mxu0 0
      %593 = vmatpush.bf16.msra.mxu0 0
      %594 = vmatpush.bf16.msra.mxu0 0
      %595 = vmatpush.bf16.msra.mxu0 0
      %596 = vmatpush.bf16.msra.mxu0 %v266
      %597 = vmatpush.bf16.msra.mxu0 %v249
      %598 = vmatmul.bf16.gmra.mxu0 %v574
      %v599 = vpop.f32.mrf.mxu0
      %v600 = vadd.f32 %v586, %v599
      %v601 = vpop.f32.mrf.mxu0
      %v602 = vadd.f32 %v588, %v601
      %603 = vdwg.mxu0
      %s604 = scalar_lea.vmem %s165, 112
      %v605 = vld [vmem:[%s604] sm:$0xff]
      %v606 = vld [vmem:[%s604 + $0x8] sm:$0x11]
      %v609 = vunpack.c.l.b16 %v605
      %v610 = vunpack.c.h.b16 %v605
      %v611 = vunpack.c.l.b16 %v606
      %v612 = vunpack.c.h.b16 %v606
      %v613 = vpack.c.b16 %v611, %v609
      %v614 = vpack.c.b16 %v612, %v610
      %v617 = vsel %vm260, %v614, 0
      %619 = vmatpush.bf16.msra.mxu0 %v248
      %620 = vmatpush.bf16.msra.mxu0 %v247
      %621 = vmatpush.bf16.msra.mxu0 %v246
      %622 = vmatpush.bf16.msra.mxu0 %v245
      %623 = vmatpush.bf16.msra.mxu0 %v244
      %624 = vmatpush.bf16.msra.mxu0 %v243
      %625 = vmatpush.bf16.msra.mxu0 %v242
      %626 = vmatpush.bf16.msra.mxu0 %v241
      %627 = vmatmul.bf16.gmra.mxu0 %v613
      %v628 = vpop.f32.mrf.mxu0
      %v629 = vadd.f32 0.0, %v628
      %v630 = vpop.f32.mrf.mxu0
      %v631 = vadd.f32 0.0, %v630
      %632 = vdwg.mxu0
      %633 = vmatpush.bf16.msra.mxu0 0
      %634 = vmatpush.bf16.msra.mxu0 0
      %635 = vmatpush.bf16.msra.mxu0 0
      %636 = vmatpush.bf16.msra.mxu0 0
      %637 = vmatpush.bf16.msra.mxu0 0
      %638 = vmatpush.bf16.msra.mxu0 0
      %639 = vmatpush.bf16.msra.mxu0 %v266
      %640 = vmatpush.bf16.msra.mxu0 %v249
      %641 = vmatmul.bf16.gmra.mxu0 %v617
      %v642 = vpop.f32.mrf.mxu0
      %v643 = vadd.f32 %v629, %v642
      %v644 = vpop.f32.mrf.mxu0
      %v645 = vadd.f32 %v631, %v644
      %646 = vdwg.mxu0
      %v647 = vmax.f32 %v600, %v643
      %v648 = vmax.f32 %v602, %v645
      %649 = vst.msk [vmem:[#allocation2] sm:$0xff] %vm341, %v647
      %650 = vst.msk [vmem:[#allocation2 + $0x8] sm:$0x3] %vm343, %v648
      %v651 = vld [vmem:[#allocation2] ss:$2 sm:$0x1f]
      %v652 = vld [vmem:[%s346] ss:$2 sm:$0x1f]
      %v653 = vmax.f32 %v651, %v652
      %v654 = vadd.f32 %v653, %v350
      %v655 = vmax.f32 %v654, 0.0
      %v656 = vpack.c.bf16 %v655, %v655
      %s657 = scalar_lea.vmem %s170, 12
      %v658 = vld [vmem:[%s657] sm:$0x7]
      %v659 = vsel %vm357, %v656, %v658
      %660 = vst [vmem:[%s657] sm:$0x7] %v659
      %s661 = scalar_lea.vmem %s165, 128
      %v662 = vld [vmem:[%s661] sm:$0xff]
      %v663 = vld [vmem:[%s661 + $0x8] sm:$0x11]
      %v666 = vunpack.c.l.b16 %v662
      %v667 = vunpack.c.h.b16 %v662
      %v668 = vunpack.c.l.b16 %v663
      %v669 = vunpack.c.h.b16 %v663
      %v670 = vpack.c.b16 %v668, %v666
      %v671 = vpack.c.b16 %v669, %v667
      %v674 = vsel %vm260, %v671, 0
      %676 = vmatpush.bf16.msra.mxu0 %v248
      %677 = vmatpush.bf16.msra.mxu0 %v247
      %678 = vmatpush.bf16.msra.mxu0 %v246
      %679 = vmatpush.bf16.msra.mxu0 %v245
      %680 = vmatpush.bf16.msra.mxu0 %v244
      %681 = vmatpush.bf16.msra.mxu0 %v243
      %682 = vmatpush.bf16.msra.mxu0 %v242
      %683 = vmatpush.bf16.msra.mxu0 %v241
      %684 = vmatmul.bf16.gmra.mxu0 %v670
      %v685 = vpop.f32.mrf.mxu0
      %v686 = vadd.f32 0.0, %v685
      %v687 = vpop.f32.mrf.mxu0
      %v688 = vadd.f32 0.0, %v687
      %689 = vdwg.mxu0
      %690 = vmatpush.bf16.msra.mxu0 0
      %691 = vmatpush.bf16.msra.mxu0 0
      %692 = vmatpush.bf16.msra.mxu0 0
      %693 = vmatpush.bf16.msra.mxu0 0
      %694 = vmatpush.bf16.msra.mxu0 0
      %695 = vmatpush.bf16.msra.mxu0 0
      %696 = vmatpush.bf16.msra.mxu0 %v266
      %697 = vmatpush.bf16.msra.mxu0 %v249
      %698 = vmatmul.bf16.gmra.mxu0 %v674
      %v699 = vpop.f32.mrf.mxu0
      %v700 = vadd.f32 %v686, %v699
      %v701 = vpop.f32.mrf.mxu0
      %v702 = vadd.f32 %v688, %v701
      %703 = vdwg.mxu0
      %s704 = scalar_lea.vmem %s165, 144
      %v705 = vld [vmem:[%s704] sm:$0xff]
      %v706 = vld [vmem:[%s704 + $0x8] sm:$0x11]
      %v709 = vunpack.c.l.b16 %v705
      %v710 = vunpack.c.h.b16 %v705
      %v711 = vunpack.c.l.b16 %v706
      %v712 = vunpack.c.h.b16 %v706
      %v713 = vpack.c.b16 %v711, %v709
      %v714 = vpack.c.b16 %v712, %v710
      %v717 = vsel %vm260, %v714, 0
      %719 = vmatpush.bf16.msra.mxu0 %v248
      %720 = vmatpush.bf16.msra.mxu0 %v247
      %721 = vmatpush.bf16.msra.mxu0 %v246
      %722 = vmatpush.bf16.msra.mxu0 %v245
      %723 = vmatpush.bf16.msra.mxu0 %v244
      %724 = vmatpush.bf16.msra.mxu0 %v243
      %725 = vmatpush.bf16.msra.mxu0 %v242
      %726 = vmatpush.bf16.msra.mxu0 %v241
      %727 = vmatmul.bf16.gmra.mxu0 %v713
      %v728 = vpop.f32.mrf.mxu0
      %v729 = vadd.f32 0.0, %v728
      %v730 = vpop.f32.mrf.mxu0
      %v731 = vadd.f32 0.0, %v730
      %732 = vdwg.mxu0
      %733 = vmatpush.bf16.msra.mxu0 0
      %734 = vmatpush.bf16.msra.mxu0 0
      %735 = vmatpush.bf16.msra.mxu0 0
      %736 = vmatpush.bf16.msra.mxu0 0
      %737 = vmatpush.bf16.msra.mxu0 0
      %738 = vmatpush.bf16.msra.mxu0 0
      %739 = vmatpush.bf16.msra.mxu0 %v266
      %740 = vmatpush.bf16.msra.mxu0 %v249
      %741 = vmatmul.bf16.gmra.mxu0 %v717
      %v742 = vpop.f32.mrf.mxu0
      %v743 = vadd.f32 %v729, %v742
      %v744 = vpop.f32.mrf.mxu0
      %v745 = vadd.f32 %v731, %v744
      %746 = vdwg.mxu0
      %v747 = vmax.f32 %v700, %v743
      %v748 = vmax.f32 %v702, %v745
      %749 = vst.msk [vmem:[#allocation2] sm:$0xff] %vm341, %v747
      %750 = vst.msk [vmem:[#allocation2 + $0x8] sm:$0x3] %vm343, %v748
      %v751 = vld [vmem:[#allocation2] ss:$2 sm:$0x1f]
      %v752 = vld [vmem:[%s346] ss:$2 sm:$0x1f]
      %v753 = vmax.f32 %v751, %v752
      %v754 = vadd.f32 %v753, %v350
      %v755 = vmax.f32 %v754, 0.0
      %v756 = vpack.c.bf16 %v755, %v755
      %s757 = scalar_lea.vmem %s170, 16
      %v758 = vld [vmem:[%s757] sm:$0x7]
      %v759 = vsel %vm357, %v756, %v758
      %760 = vst [vmem:[%s757] sm:$0x7] %v759
      %p761 = scmp.lt.s32.totalorder %s14, 1
      %s762 = scalar_select %p761, %s14, 1
      %s763 = smul.addr %s762, 5
      %s764 = smul.addr %s763, 4
      %s765 = scalar_lea.vmem %s3, %s764
      // Predicated region
      $region33: #{lenet5_forward.4} parent=31 // pred_check
        %p766 = pneg %p100
      $region34: #{lenet5_forward.4} parent=31 // pred_check_branch
        %768 = sbr.rel (%p766) target = $region36
      $region35: #{lenet5_forward.4} parent=31 // pred_region
        _
      $region36: #{lenet5_forward.4} parent=31 // pred_fallthru
        _
    $region32: #{lenet5_forward.4} parent=5 // pred_fallthru
      _
    %p769 = scmp.le.s32.totalorder 2, %s9
    // Predicated region
    $region37: #{lenet5_forward.4} parent=5 // pred_check
      %p770 = pneg %p769
    $region38: #{lenet5_forward.4} parent=5 // pred_check_branch
      %772 = sbr.rel (%p770) target = $region40
    $region39: #{lenet5_forward.4} parent=5 // pred_region
      %s773 = ssub.s32 %s9, 2
      // Predicated region
      $region41: #{lenet5_forward.4} parent=39 // pred_check
        %p774 = pneg %p106
      $region42: #{lenet5_forward.4} parent=39 // pred_check_branch
        %776 = sbr.rel (%p774) target = $region44
      $region43: #{lenet5_forward.4} parent=39 // pred_region
        %p777 = scmp.lt.s32.totalorder %s15, 1
        %s778 = scalar_select %p777, %s15, 1
        %s779 = smul.addr %s778, 5
        %s780 = smul.addr %s779, 4
        %s781 = scalar_lea.vmem %s3, %s780
      $region44: #{lenet5_forward.4} parent=39 // pred_fallthru
        _
    $region40: #{lenet5_forward.4} parent=5 // pred_fallthru
      _
  $region6: #{lenet5_forward.4} parent=0 // loop_footer
    %s13 = sadd.s32 1, %s9
  $region7: #{lenet5_forward.4} parent=0 // loop_footer_branch
    %8 = sbr.rel target = $region3
  $region8: #{lenet5_forward.4} parent=0 // loop_exit
    _

// kernel: lenet5_forward.3
$region0: #{lenet5_forward.3}
  #allocation0 [shape = 'u32[]', space=smem, size = 0x4, offset = 0x4, fixed_abs, tag = 'smem constant byte address 0x4 - core index']
  #allocation1 [shape = 'u32[72,128]{1,0:T(1,128)}', space=vmem, size = 0x9000, scoped, tag = 'internal scratch']
  #allocation2 [shape = 'f32[28,6]{1,0:T(8,128)}', space=vmem, size = 0x4000, scoped, tag = 'scratch operand']
  %s0 = inlined_call_operand.vmem [shape: bf16[2,28,28,25], index: 0, kind: input, shape index: {}]
  %s1 = inlined_call_operand.vmem [shape: bf16[25,6], index: 1, kind: input, shape index: {}]
  %s2 = inlined_call_operand.vmem [shape: f32[1,6], index: 2, kind: input, shape index: {}]
  %s3 = inlined_call_operand.vmem [shape: bf16[2,14,14,6], index: 3, kind: output, shape index: {}]
  %s4 = sld [smem:[#allocation0]]
  $region45: #{lenet5_forward.3} parent=0
    _
  %s6 = ssub.s32 1, %s4
  %s7 = scalar_select 0, %s6, %s4
  loop: start=0, step=1, limit=4
  $region2: #{lenet5_forward.3} parent=0 // loop_pre_header
    _
  $region3: #{lenet5_forward.3} parent=0 // loop_header
    %s9 = sphi 0, %s13
    %p10 = scmp.ge.s32.totalorder %s9, 4
    %s19 = sphi 0, %s21
    %s22 = sphi 0, %s19
    %s23 = sphi 0, %s22
    %s39 = sphi 0, %s23
    %s43 = sphi 0, %s43
    %s45 = sphi 0, %s43
    %s46 = sphi 0, %s45
    %s60 = sphi 0, %s46
    %s64 = sphi 0, %s64
    %s66 = sphi 0, %s64
    %s67 = sphi 0, %s66
    %s81 = sphi 0, %s67
    %s87 = sphi 0, %s89
    %s90 = sphi 0, %s87
    %s91 = sphi 0, %s90
    %s107 = sphi 0, %s91
  $region4: #{lenet5_forward.3} parent=0 // loop_header_branch
    %12 = sbr.rel (%p10) target = $region8
  $region5: #{lenet5_forward.3} parent=0 // loop_body
    %s14 = ssub.s32 %s9, 1
    %s15 = ssub.s32 %s9, 2
    %s16 = sadd.s32 %s9, 1
    %s17 = ssub.s32 %s9, %s16
    %p18 = scmp.eq.s32.totalorder %s17, 0
    %s20 = sadd.s32 %s19, 1
    %s21 = scalar_select %p18, %s19, %s20
    %p24 = pneg %p18
    %p25 = scmp.eq.s32.totalorder %s9, 1
    %p26 = por %p24, %p25
    %p27 = scmp.ne.s32.totalorder %s19, %s22
    %p28 = scmp.eq.s32.totalorder %s9, 0
    %p29 = por %p27, %p28
    %p30 = scmp.ne.s32.totalorder %s19, %s22
    %p31 = scmp.eq.s32.totalorder %s14, 1
    %p32 = por %p30, %p31
    %p33 = scmp.ne.s32.totalorder %s22, %s23
    %p34 = scmp.eq.s32.totalorder %s14, 0
    %p35 = por %p33, %p34
    %p36 = scmp.ne.s32.totalorder %s22, %s23
    %p37 = scmp.eq.s32.totalorder %s15, 1
    %p38 = por %p36, %p37
    %p40 = scmp.ne.s32.totalorder %s23, %s39
    %p41 = scmp.eq.s32.totalorder %s15, 0
    %p42 = por %p40, %p41
    %s44 = sadd.s32 %s43, 1
    %p47 = scmp.eq.s32.totalorder %s9, 1
    %p48 = scmp.ne.s32.totalorder %s43, %s45
    %p49 = scmp.eq.s32.totalorder %s9, 0
    %p50 = por %p48, %p49
    %p51 = scmp.ne.s32.totalorder %s43, %s45
    %p52 = scmp.eq.s32.totalorder %s14, 1
    %p53 = por %p51, %p52
    %p54 = scmp.ne.s32.totalorder %s45, %s46
    %p55 = scmp.eq.s32.totalorder %s14, 0
    %p56 = por %p54, %p55
    %p57 = scmp.ne.s32.totalorder %s45, %s46
    %p58 = scmp.eq.s32.totalorder %s15, 1
    %p59 = por %p57, %p58
    %p61 = scmp.ne.s32.totalorder %s46, %s60
    %p62 = scmp.eq.s32.totalorder %s15, 0
    %p63 = por %p61, %p62
    %s65 = sadd.s32 %s64, 1
    %p68 = scmp.eq.s32.totalorder %s9, 1
    %p69 = scmp.ne.s32.totalorder %s64, %s66
    %p70 = scmp.eq.s32.totalorder %s9, 0
    %p71 = por %p69, %p70
    %p72 = scmp.ne.s32.totalorder %s64, %s66
    %p73 = scmp.eq.s32.totalorder %s14, 1
    %p74 = por %p72, %p73
    %p75 = scmp.ne.s32.totalorder %s66, %s67
    %p76 = scmp.eq.s32.totalorder %s14, 0
    %p77 = por %p75, %p76
    %p78 = scmp.ne.s32.totalorder %s66, %s67
    %p79 = scmp.eq.s32.totalorder %s15, 1
    %p80 = por %p78, %p79
    %p82 = scmp.ne.s32.totalorder %s67, %s81
    %p83 = scmp.eq.s32.totalorder %s15, 0
    %p84 = por %p82, %p83
    %s85 = ssub.s32 %s9, %s16
    %p86 = scmp.eq.s32.totalorder %s85, 0
    %s88 = sadd.s32 %s87, 1
    %s89 = scalar_select %p86, %s87, %s88
    %p92 = pneg %p86
    %p93 = scmp.eq.s32.totalorder %s9, 1
    %p94 = por %p92, %p93
    %p95 = scmp.ne.s32.totalorder %s87, %s90
    %p96 = scmp.eq.s32.totalorder %s9, 0
    %p97 = por %p95, %p96
    %p98 = scmp.ne.s32.totalorder %s87, %s90
    %p99 = scmp.eq.s32.totalorder %s14, 1
    %p100 = por %p98, %p99
    %p101 = scmp.ne.s32.totalorder %s90, %s91
    %p102 = scmp.eq.s32.totalorder %s14, 0
    %p103 = por %p101, %p102
    %p104 = scmp.ne.s32.totalorder %s90, %s91
    %p105 = scmp.eq.s32.totalorder %s15, 1
    %p106 = por %p104, %p105
    %p108 = scmp.ne.s32.totalorder %s91, %s107
    %p109 = scmp.eq.s32.totalorder %s15, 0
    %p110 = por %p108, %p109
    %p111 = scmp.le.s32.totalorder 1, %s9
    %p112 = scmp.lt.s32.totalorder %s9, 3
    %p113 = pnand %p111, %p112
    %p114 = pneg %p113
    // Predicated region
    $region9: #{lenet5_forward.3} parent=5 // pred_check
      _
    $region10: #{lenet5_forward.3} parent=5 // pred_check_branch
      %116 = sbr.rel (%p113) target = $region12
    $region11: #{lenet5_forward.3} parent=5 // pred_region
      %s117 = ssub.s32 %s9, 1
      // Predicated region
      $region13: #{lenet5_forward.3} parent=11 // pred_check
        %p118 = pneg %p56
      $region14: #{lenet5_forward.3} parent=11 // pred_check_branch
        %120 = sbr.rel (%p118) target = $region16
      $region15: #{lenet5_forward.3} parent=11 // pred_region
        _
      $region16: #{lenet5_forward.3} parent=11 // pred_fallthru
        _
      // Predicated region
      $region17: #{lenet5_forward.3} parent=11 // pred_check
        %p121 = pneg %p77
      $region18: #{lenet5_forward.3} parent=11 // pred_check_branch
        %123 = sbr.rel (%p121) target = $region20
      $region19: #{lenet5_forward.3} parent=11 // pred_region
        _
      $region20: #{lenet5_forward.3} parent=11 // pred_fallthru
        _
    $region12: #{lenet5_forward.3} parent=5 // pred_fallthru
      _
    %p124 = scmp.lt.s32.totalorder %s9, 2
    // Predicated region
    $region21: #{lenet5_forward.3} parent=5 // pred_check
      %p125 = pneg %p124
    $region22: #{lenet5_forward.3} parent=5 // pred_check_branch
      %127 = sbr.rel (%p125) target = $region24
    $region23: #{lenet5_forward.3} parent=5 // pred_region
      // Predicated region
      $region25: #{lenet5_forward.3} parent=23 // pred_check
        %p128 = pneg %p29
      $region26: #{lenet5_forward.3} parent=23 // pred_check_branch
        %130 = sbr.rel (%p128) target = $region28
      $region27: #{lenet5_forward.3} parent=23 // pred_region
        %p131 = scmp.lt.s32.totalorder %s9, 1
        %s132 = scalar_select %p131, %s9, 1
        %s133 = smul.addr %s132, 112
        %s134 = smul.addr %s133, 4
        %s135 = scalar_lea.vmem %s0, %s134
      $region28: #{lenet5_forward.3} parent=23 // pred_fallthru
        _
    $region24: #{lenet5_forward.3} parent=5 // pred_fallthru
      _
    %p136 = scmp.le.s32.totalorder 1, %s9
    %p137 = scmp.lt.s32.totalorder %s9, 3
    %p138 = pnand %p136, %p137
    %p139 = pneg %p138
    // Predicated region
    $region29: #{lenet5_forward.3} parent=5 // pred_check
      _
    $region30: #{lenet5_forward.3} parent=5 // pred_check_branch
      %141 = sbr.rel (%p138) target = $region32
    $region31: #{lenet5_forward.3} parent=5 // pred_region
      %s142 = ssub.s32 %s9, 1
      %p143 = scmp.lt.s32.totalorder %s14, 1
      %s144 = scalar_select %p143, %s14, 1
      %s145 = smul.addr %s144, 112
      %s146 = smul.addr %s145, 4
      %s147 = scalar_lea.vmem %s0, %s146
      %p148 = pneg %p35
      %p149 = pneg %p32
      %p150 = pneg %p56
      %p151 = pneg %p53
      %p152 = pneg %p77
      %p153 = pneg %p74
      %p154 = pneg %p103
      %p155 = pneg %p100
      %p156 = scmp.lt.s32.totalorder %s14, 1
      %s157 = scalar_select %p156, %s14, 1
      %s158 = smul.addr %s157, 28
      %s159 = smul.addr %s158, 4
      %s160 = scalar_lea.vmem %s3, %s159
      %p161 = scmp.lt.s32.totalorder %s14, 1
      %s162 = scalar_select %p161, %s14, 1
      %s163 = smul.addr %s162, 112
      %s164 = smul.addr %s163, 4
      %s165 = scalar_lea.vmem %s0, %s164
      %p166 = scmp.lt.s32.totalorder %s14, 1
      %s167 = scalar_select %p166, %s14, 1
      %s168 = smul.addr %s167, 28
      %s169 = smul.addr %s168, 4
      %s170 = scalar_lea.vmem %s3, %s169
      %v172 = vld [vmem:[%s1] sm:$0xf]
      %v173 = vld [vmem:[%s1 + $0x4] sm:$0xf]
      %v174 = vld [vmem:[%s1 + $0x8] sm:$0xf]
      %v175 = vld [vmem:[%s1 + $0xc] sm:$0x1]
      %v176 = vld [vmem:[%s2] sm:$0x1]
      %v177 = vld [vmem:[%s165] sm:$0xf]
      %v178 = vld [vmem:[%s165 + $0x4] sm:$0xf]
      %v179 = vld [vmem:[%s165 + $0x8] sm:$0xf]
      %v180 = vld [vmem:[%s165 + $0xc] sm:$0x3]
      %v185 = vunpack.c.l.b16 %v177
      %v186 = vunpack.c.l.b16 %v178
      %v187 = vunpack.c.l.b16 %v179
      %v188 = vunpack.c.l.b16 %v180
      %v189 = vpack.c.b16 %v186, %v185
      %v190 = vpack.c.b16 %v188, %v187
      %v195 = vunpack.c.l.b16 %v172
      %v196 = vunpack.c.l.b16 %v173
      %v197 = vunpack.c.l.b16 %v174
      %v198 = vunpack.c.l.b16 %v175
      %v199 = vpack.c.b16 %v196, %v195
      %v200 = vpack.c.b16 %v198, %v197
      %vm202 = vcmask 203776
      %v204 = vsel %vm202, %v189, 0
      %v207 = vsel %vm202, %v190, 0
      %vm209 = vcmask 1043456
      %vm210 = vcmask 1044480
      %v211 = vsel %vm209, 4294967295, 65535
      %v212 = vsel %vm210, %v211, 0
      %v214 = vand.u32 %v200, %v212
      %216 = vmatpush.bf16.msra.mxu0 0
      %217 = vmatpush.bf16.msra.mxu0 0
      %218 = vmatpush.bf16.msra.mxu0 0
      %219 = vmatpush.bf16.msra.mxu0 0
      %220 = vmatpush.bf16.msra.mxu0 0
      %221 = vmatpush.bf16.msra.mxu0 0
      %222 = vmatpush.bf16.msra.mxu0 %v214
      %223 = vmatpush.bf16.msra.mxu0 %v199
      %224 = vmatmul.bf16.gmra.mxu0 %v204
      %v225 = vpop.f32.mrf.mxu0
      %v226 = vadd.f32 0.0, %v225
      %v227 = vpop.f32.mrf.mxu0
      %v228 = vadd.f32 0.0, %v227
      %229 = vmatmul.bf16.gmra.mxu0 %v207
      %v230 = vpop.f32.mrf.mxu0
      %v231 = vadd.f32 0.0, %v230
      %v232 = vpop.f32.mrf.mxu0
      %v233 = vadd.f32 0.0, %v232
      %234 = vdwg.mxu0
      %s235 = scalar_lea.vmem %s165, 16
      %v236 = vld [vmem:[%s235] sm:$0xf]
      %v237 = vld [vmem:[%s235 + $0x4] sm:$0xf]
      %v238 = vld [vmem:[%s235 + $0x8] sm:$0xf]
      %v239 = vld [vmem:[%s235 + $0xc] sm:$0x3]
      %v244 = vunpack.c.l.b16 %v236
      %v245 = vunpack.c.l.b16 %v237
      %v246 = vunpack.c.l.b16 %v238
      %v247 = vunpack.c.l.b16 %v239
      %v248 = vpack.c.b16 %v245, %v244
      %v249 = vpack.c.b16 %v247, %v246
      %v251 = vsel %vm202, %v248, 0
      %v254 = vsel %vm202, %v249, 0
      %256 = vmatpush.bf16.msra.mxu0 0
      %257 = vmatpush.bf16.msra.mxu0 0
      %258 = vmatpush.bf16.msra.mxu0 0
      %259 = vmatpush.bf16.msra.mxu0 0
      %260 = vmatpush.bf16.msra.mxu0 0
      %261 = vmatpush.bf16.msra.mxu0 0
      %262 = vmatpush.bf16.msra.mxu0 %v214
      %263 = vmatpush.bf16.msra.mxu0 %v199
      %264 = vmatmul.bf16.gmra.mxu0 %v251
      %v265 = vpop.f32.mrf.mxu0
      %v266 = vadd.f32 0.0, %v265
      %v267 = vpop.f32.mrf.mxu0
      %v268 = vadd.f32 0.0, %v267
      %269 = vmatmul.bf16.gmra.mxu0 %v254
      %v270 = vpop.f32.mrf.mxu0
      %v271 = vadd.f32 0.0, %v270
      %v272 = vpop.f32.mrf.mxu0
      %v273 = vadd.f32 0.0, %v272
      %274 = vdwg.mxu0
      %v275 = vmax.f32 %v226, %v266
      %v276 = vmax.f32 %v228, %v268
      %v277 = vmax.f32 %v231, %v271
      %v278 = vmax.f32 %v233, %v273
      %vm279 = vcmask 48128
      %280 = vst.msk [vmem:[#allocation2] sm:$0xff] %vm279, %v275
      %281 = vst.msk [vmem:[#allocation2 + $0x8] sm:$0xff] %vm279, %v276
      %282 = vst.msk [vmem:[#allocation2 + $0x10] sm:$0xff] %vm279, %v277
      %vm283 = vcmask 44032
      %284 = vst.msk [vmem:[#allocation2 + $0x18] sm:$0xf] %vm283, %v278
      %v285 = vld [vmem:[#allocation2] ss:$2 sm:$0xff]
      %s286 = scalar_lea.vmem [#allocation2], 16
      %v287 = vld [vmem:[%s286] ss:$2 sm:$0x3f]
      %s288 = scalar_lea.vmem [#allocation2], 1
      %v289 = vld [vmem:[%s288] ss:$2 sm:$0xff]
      %s290 = scalar_lea.vmem [#allocation2], 17
      %v291 = vld [vmem:[%s290] ss:$2 sm:$0x3f]
      %v292 = vmax.f32 %v285, %v289
      %v293 = vmax.f32 %v287, %v291
      %v295 = vperm.slane %v176, 0
      %v297 = vadd.f32 %v292, %v295
      %v298 = vadd.f32 %v293, %v295
      %v299 = vmax.f32 %v297, 0.0
      %v300 = vmax.f32 %v298, 0.0
      %v301 = vpack.c.bf16 %v299, %v299
      %v302 = vpack.c.bf16 %v300, %v300
      %303 = vst.msk [vmem:[%s170] sm:$0xf] %vm283, %v301
      %vm304 = vcmask 43008
      %305 = vst.msk [vmem:[%s170 + $0x4] sm:$0x7] %vm304, %v302
      %s306 = scalar_lea.vmem %s165, 32
      %v307 = vld [vmem:[%s306] sm:$0xf]
      %v308 = vld [vmem:[%s306 + $0x4] sm:$0xf]
      %v309 = vld [vmem:[%s306 + $0x8] sm:$0xf]
      %v310 = vld [vmem:[%s306 + $0xc] sm:$0x3]
      %v315 = vunpack.c.l.b16 %v307
      %v316 = vunpack.c.l.b16 %v308
      %v317 = vunpack.c.l.b16 %v309
      %v318 = vunpack.c.l.b16 %v310
      %v319 = vpack.c.b16 %v316, %v315
      %v320 = vpack.c.b16 %v318, %v317
      %v322 = vsel %vm202, %v319, 0
      %v325 = vsel %vm202, %v320, 0
      %327 = vmatpush.bf16.msra.mxu0 0
      %328 = vmatpush.bf16.msra.mxu0 0
      %329 = vmatpush.bf16.msra.mxu0 0
      %330 = vmatpush.bf16.msra.mxu0 0
      %331 = vmatpush.bf16.msra.mxu0 0
      %332 = vmatpush.bf16.msra.mxu0 0
      %333 = vmatpush.bf16.msra.mxu0 %v214
      %334 = vmatpush.bf16.msra.mxu0 %v199
      %335 = vmatmul.bf16.gmra.mxu0 %v322
      %v336 = vpop.f32.mrf.mxu0
      %v337 = vadd.f32 0.0, %v336
      %v338 = vpop.f32.mrf.mxu0
      %v339 = vadd.f32 0.0, %v338
      %340 = vmatmul.bf16.gmra.mxu0 %v325
      %v341 = vpop.f32.mrf.mxu0
      %v342 = vadd.f32 0.0, %v341
      %v343 = vpop.f32.mrf.mxu0
      %v344 = vadd.f32 0.0, %v343
      %345 = vdwg.mxu0
      %s346 = scalar_lea.vmem %s165, 48
      %v347 = vld [vmem:[%s346] sm:$0xf]
      %v348 = vld [vmem:[%s346 + $0x4] sm:$0xf]
      %v349 = vld [vmem:[%s346 + $0x8] sm:$0xf]
      %v350 = vld [vmem:[%s346 + $0xc] sm:$0x3]
      %v355 = vunpack.c.l.b16 %v347
      %v356 = vunpack.c.l.b16 %v348
      %v357 = vunpack.c.l.b16 %v349
      %v358 = vunpack.c.l.b16 %v350
      %v359 = vpack.c.b16 %v356, %v355
      %v360 = vpack.c.b16 %v358, %v357
      %v362 = vsel %vm202, %v359, 0
      %v365 = vsel %vm202, %v360, 0
      %367 = vmatpush.bf16.msra.mxu0 0
      %368 = vmatpush.bf16.msra.mxu0 0
      %369 = vmatpush.bf16.msra.mxu0 0
      %370 = vmatpush.bf16.msra.mxu0 0
      %371 = vmatpush.bf16.msra.mxu0 0
      %372 = vmatpush.bf16.msra.mxu0 0
      %373 = vmatpush.bf16.msra.mxu0 %v214
      %374 = vmatpush.bf16.msra.mxu0 %v199
      %375 = vmatmul.bf16.gmra.mxu0 %v362
      %v376 = vpop.f32.mrf.mxu0
      %v377 = vadd.f32 0.0, %v376
      %v378 = vpop.f32.mrf.mxu0
      %v379 = vadd.f32 0.0, %v378
      %380 = vmatmul.bf16.gmra.mxu0 %v365
      %v381 = vpop.f32.mrf.mxu0
      %v382 = vadd.f32 0.0, %v381
      %v383 = vpop.f32.mrf.mxu0
      %v384 = vadd.f32 0.0, %v383
      %385 = vdwg.mxu0
      %v386 = vmax.f32 %v337, %v377
      %v387 = vmax.f32 %v339, %v379
      %v388 = vmax.f32 %v342, %v382
      %v389 = vmax.f32 %v344, %v384
      %390 = vst.msk [vmem:[#allocation2] sm:$0xff] %vm279, %v386
      %391 = vst.msk [vmem:[#allocation2 + $0x8] sm:$0xff] %vm279, %v387
      %392 = vst.msk [vmem:[#allocation2 + $0x10] sm:$0xff] %vm279, %v388
      %393 = vst.msk [vmem:[#allocation2 + $0x18] sm:$0xf] %vm283, %v389
      %v394 = vld [vmem:[#allocation2] ss:$2 sm:$0xff]
      %v395 = vld [vmem:[%s286] ss:$2 sm:$0x3f]
      %v396 = vld [vmem:[%s288] ss:$2 sm:$0xff]
      %v397 = vld [vmem:[%s290] ss:$2 sm:$0x3f]
      %v398 = vmax.f32 %v394, %v396
      %v399 = vmax.f32 %v395, %v397
      %v400 = vadd.f32 %v398, %v295
      %v401 = vadd.f32 %v399, %v295
      %v402 = vmax.f32 %v400, 0.0
      %v403 = vmax.f32 %v401, 0.0
      %v404 = vpack.c.bf16 %v402, %v402
      %v405 = vpack.c.bf16 %v403, %v403
      %s406 = scalar_lea.vmem %s170, 8
      %407 = vst.msk [vmem:[%s406] sm:$0xf] %vm283, %v404
      %408 = vst.msk [vmem:[%s406 + $0x4] sm:$0x7] %vm304, %v405
      %s409 = scalar_lea.vmem %s165, 64
      %v410 = vld [vmem:[%s409] sm:$0xf]
      %v411 = vld [vmem:[%s409 + $0x4] sm:$0xf]
      %v412 = vld [vmem:[%s409 + $0x8] sm:$0xf]
      %v413 = vld [vmem:[%s409 + $0xc] sm:$0x3]
      %v418 = vunpack.c.l.b16 %v410
      %v419 = vunpack.c.l.b16 %v411
      %v420 = vunpack.c.l.b16 %v412
      %v421 = vunpack.c.l.b16 %v413
      %v422 = vpack.c.b16 %v419, %v418
      %v423 = vpack.c.b16 %v421, %v420
      %v425 = vsel %vm202, %v422, 0
      %v428 = vsel %vm202, %v423, 0
      %430 = vmatpush.bf16.msra.mxu0 0
      %431 = vmatpush.bf16.msra.mxu0 0
      %432 = vmatpush.bf16.msra.mxu0 0
      %433 = vmatpush.bf16.msra.mxu0 0
      %434 = vmatpush.bf16.msra.mxu0 0
      %435 = vmatpush.bf16.msra.mxu0 0
      %436 = vmatpush.bf16.msra.mxu0 %v214
      %437 = vmatpush.bf16.msra.mxu0 %v199
      %438 = vmatmul.bf16.gmra.mxu0 %v425
      %v439 = vpop.f32.mrf.mxu0
      %v440 = vadd.f32 0.0, %v439
      %v441 = vpop.f32.mrf.mxu0
      %v442 = vadd.f32 0.0, %v441
      %443 = vmatmul.bf16.gmra.mxu0 %v428
      %v444 = vpop.f32.mrf.mxu0
      %v445 = vadd.f32 0.0, %v444
      %v446 = vpop.f32.mrf.mxu0
      %v447 = vadd.f32 0.0, %v446
      %448 = vdwg.mxu0
      %s449 = scalar_lea.vmem %s165, 80
      %v450 = vld [vmem:[%s449] sm:$0xf]
      %v451 = vld [vmem:[%s449 + $0x4] sm:$0xf]
      %v452 = vld [vmem:[%s449 + $0x8] sm:$0xf]
      %v453 = vld [vmem:[%s449 + $0xc] sm:$0x3]
      %v458 = vunpack.c.l.b16 %v450
      %v459 = vunpack.c.l.b16 %v451
      %v460 = vunpack.c.l.b16 %v452
      %v461 = vunpack.c.l.b16 %v453
      %v462 = vpack.c.b16 %v459, %v458
      %v463 = vpack.c.b16 %v461, %v460
      %v465 = vsel %vm202, %v462, 0
      %v468 = vsel %vm202, %v463, 0
      %470 = vmatpush.bf16.msra.mxu0 0
      %471 = vmatpush.bf16.msra.mxu0 0
      %472 = vmatpush.bf16.msra.mxu0 0
      %473 = vmatpush.bf16.msra.mxu0 0
      %474 = vmatpush.bf16.msra.mxu0 0
      %475 = vmatpush.bf16.msra.mxu0 0
      %476 = vmatpush.bf16.msra.mxu0 %v214
      %477 = vmatpush.bf16.msra.mxu0 %v199
      %478 = vmatmul.bf16.gmra.mxu0 %v465
      %v479 = vpop.f32.mrf.mxu0
      %v480 = vadd.f32 0.0, %v479
      %v481 = vpop.f32.mrf.mxu0
      %v482 = vadd.f32 0.0, %v481
      %483 = vmatmul.bf16.gmra.mxu0 %v468
      %v484 = vpop.f32.mrf.mxu0
      %v485 = vadd.f32 0.0, %v484
      %v486 = vpop.f32.mrf.mxu0
      %v487 = vadd.f32 0.0, %v486
      %488 = vdwg.mxu0
      %v489 = vmax.f32 %v440, %v480
      %v490 = vmax.f32 %v442, %v482
      %v491 = vmax.f32 %v445, %v485
      %v492 = vmax.f32 %v447, %v487
      %493 = vst.msk [vmem:[#allocation2] sm:$0xff] %vm279, %v489
      %494 = vst.msk [vmem:[#allocation2 + $0x8] sm:$0xff] %vm279, %v490
      %495 = vst.msk [vmem:[#allocation2 + $0x10] sm:$0xff] %vm279, %v491
      %496 = vst.msk [vmem:[#allocation2 + $0x18] sm:$0xf] %vm283, %v492
      %v497 = vld [vmem:[#allocation2] ss:$2 sm:$0xff]
      %v498 = vld [vmem:[%s286] ss:$2 sm:$0x3f]
      %v499 = vld [vmem:[%s288] ss:$2 sm:$0xff]
      %v500 = vld [vmem:[%s290] ss:$2 sm:$0x3f]
      %v501 = vmax.f32 %v497, %v499
      %v502 = vmax.f32 %v498, %v500
      %v503 = vadd.f32 %v501, %v295
      %v504 = vadd.f32 %v502, %v295
      %v505 = vmax.f32 %v503, 0.0
      %v506 = vmax.f32 %v504, 0.0
      %v507 = vpack.c.bf16 %v505, %v505
      %v508 = vpack.c.bf16 %v506, %v506
      %s509 = scalar_lea.vmem %s170, 16
      %510 = vst.msk [vmem:[%s509] sm:$0xf] %vm283, %v507
      %511 = vst.msk [vmem:[%s509 + $0x4] sm:$0x7] %vm304, %v508
      %s512 = scalar_lea.vmem %s165, 96
      %v513 = vld [vmem:[%s512] sm:$0xf]
      %v514 = vld [vmem:[%s512 + $0x4] sm:$0xf]
      %v515 = vld [vmem:[%s512 + $0x8] sm:$0xf]
      %v516 = vld [vmem:[%s512 + $0xc] sm:$0x3]
      %v521 = vunpack.c.l.b16 %v513
      %v522 = vunpack.c.l.b16 %v514
      %v523 = vunpack.c.l.b16 %v515
      %v524 = vunpack.c.l.b16 %v516
      %v525 = vpack.c.b16 %v522, %v521
      %v526 = vpack.c.b16 %v524, %v523
      %v528 = vsel %vm202, %v525, 0
      %v531 = vsel %vm202, %v526, 0
      %533 = vmatpush.bf16.msra.mxu0 0
      %534 = vmatpush.bf16.msra.mxu0 0
      %535 = vmatpush.bf16.msra.mxu0 0
      %536 = vmatpush.bf16.msra.mxu0 0
      %537 = vmatpush.bf16.msra.mxu0 0
      %538 = vmatpush.bf16.msra.mxu0 0
      %539 = vmatpush.bf16.msra.mxu0 %v214
      %540 = vmatpush.bf16.msra.mxu0 %v199
      %541 = vmatmul.bf16.gmra.mxu0 %v528
      %v542 = vpop.f32.mrf.mxu0
      %v543 = vadd.f32 0.0, %v542
      %v544 = vpop.f32.mrf.mxu0
      %v545 = vadd.f32 0.0, %v544
      %546 = vmatmul.bf16.gmra.mxu0 %v531
      %v547 = vpop.f32.mrf.mxu0
      %v548 = vadd.f32 0.0, %v547
      %v549 = vpop.f32.mrf.mxu0
      %v550 = vadd.f32 0.0, %v549
      %551 = vdwg.mxu0
      %s552 = scalar_lea.vmem %s165, 112
      %v553 = vld [vmem:[%s552] sm:$0xf]
      %v554 = vld [vmem:[%s552 + $0x4] sm:$0xf]
      %v555 = vld [vmem:[%s552 + $0x8] sm:$0xf]
      %v556 = vld [vmem:[%s552 + $0xc] sm:$0x3]
      %v561 = vunpack.c.l.b16 %v553
      %v562 = vunpack.c.l.b16 %v554
      %v563 = vunpack.c.l.b16 %v555
      %v564 = vunpack.c.l.b16 %v556
      %v565 = vpack.c.b16 %v562, %v561
      %v566 = vpack.c.b16 %v564, %v563
      %v568 = vsel %vm202, %v565, 0
      %v571 = vsel %vm202, %v566, 0
      %573 = vmatpush.bf16.msra.mxu0 0
      %574 = vmatpush.bf16.msra.mxu0 0
      %575 = vmatpush.bf16.msra.mxu0 0
      %576 = vmatpush.bf16.msra.mxu0 0
      %577 = vmatpush.bf16.msra.mxu0 0
      %578 = vmatpush.bf16.msra.mxu0 0
      %579 = vmatpush.bf16.msra.mxu0 %v214
      %580 = vmatpush.bf16.msra.mxu0 %v199
      %581 = vmatmul.bf16.gmra.mxu0 %v568
      %v582 = vpop.f32.mrf.mxu0
      %v583 = vadd.f32 0.0, %v582
      %v584 = vpop.f32.mrf.mxu0
      %v585 = vadd.f32 0.0, %v584
      %586 = vmatmul.bf16.gmra.mxu0 %v571
      %v587 = vpop.f32.mrf.mxu0
      %v588 = vadd.f32 0.0, %v587
      %v589 = vpop.f32.mrf.mxu0
      %v590 = vadd.f32 0.0, %v589
      %591 = vdwg.mxu0
      %v592 = vmax.f32 %v543, %v583
      %v593 = vmax.f32 %v545, %v585
      %v594 = vmax.f32 %v548, %v588
      %v595 = vmax.f32 %v550, %v590
      %596 = vst.msk [vmem:[#allocation2] sm:$0xff] %vm279, %v592
      %597 = vst.msk [vmem:[#allocation2 + $0x8] sm:$0xff] %vm279, %v593
      %598 = vst.msk [vmem:[#allocation2 + $0x10] sm:$0xff] %vm279, %v594
      %599 = vst.msk [vmem:[#allocation2 + $0x18] sm:$0xf] %vm283, %v595
      %v600 = vld [vmem:[#allocation2] ss:$2 sm:$0xff]
      %v601 = vld [vmem:[%s286] ss:$2 sm:$0x3f]
      %v602 = vld [vmem:[%s288] ss:$2 sm:$0xff]
      %v603 = vld [vmem:[%s290] ss:$2 sm:$0x3f]
      %v604 = vmax.f32 %v600, %v602
      %v605 = vmax.f32 %v601, %v603
      %v606 = vadd.f32 %v604, %v295
      %v607 = vadd.f32 %v605, %v295
      %v608 = vmax.f32 %v606, 0.0
      %v609 = vmax.f32 %v607, 0.0
      %v610 = vpack.c.bf16 %v608, %v608
      %v611 = vpack.c.bf16 %v609, %v609
      %s612 = scalar_lea.vmem %s170, 24
      %613 = vst.msk [vmem:[%s612] sm:$0xf] %vm283, %v610
      %614 = vst.msk [vmem:[%s612 + $0x4] sm:$0x7] %vm304, %v611
      %s615 = scalar_lea.vmem %s165, 128
      %v616 = vld [vmem:[%s615] sm:$0xf]
      %v617 = vld [vmem:[%s615 + $0x4] sm:$0xf]
      %v618 = vld [vmem:[%s615 + $0x8] sm:$0xf]
      %v619 = vld [vmem:[%s615 + $0xc] sm:$0x3]
      %v624 = vunpack.c.l.b16 %v616
      %v625 = vunpack.c.l.b16 %v617
      %v626 = vunpack.c.l.b16 %v618
      %v627 = vunpack.c.l.b16 %v619
      %v628 = vpack.c.b16 %v625, %v624
      %v629 = vpack.c.b16 %v627, %v626
      %v631 = vsel %vm202, %v628, 0
      %v634 = vsel %vm202, %v629, 0
      %636 = vmatpush.bf16.msra.mxu0 0
      %637 = vmatpush.bf16.msra.mxu0 0
      %638 = vmatpush.bf16.msra.mxu0 0
      %639 = vmatpush.bf16.msra.mxu0 0
      %640 = vmatpush.bf16.msra.mxu0 0
      %641 = vmatpush.bf16.msra.mxu0 0
      %642 = vmatpush.bf16.msra.mxu0 %v214
      %643 = vmatpush.bf16.msra.mxu0 %v199
      %644 = vmatmul.bf16.gmra.mxu0 %v631
      %v645 = vpop.f32.mrf.mxu0
      %v646 = vadd.f32 0.0, %v645
      %v647 = vpop.f32.mrf.mxu0
      %v648 = vadd.f32 0.0, %v647
      %649 = vmatmul.bf16.gmra.mxu0 %v634
      %v650 = vpop.f32.mrf.mxu0
      %v651 = vadd.f32 0.0, %v650
      %v652 = vpop.f32.mrf.mxu0
      %v653 = vadd.f32 0.0, %v652
      %654 = vdwg.mxu0
      %s655 = scalar_lea.vmem %s165, 144
      %v656 = vld [vmem:[%s655] sm:$0xf]
      %v657 = vld [vmem:[%s655 + $0x4] sm:$0xf]
      %v658 = vld [vmem:[%s655 + $0x8] sm:$0xf]
      %v659 = vld [vmem:[%s655 + $0xc] sm:$0x3]
      %v664 = vunpack.c.l.b16 %v656
      %v665 = vunpack.c.l.b16 %v657
      %v666 = vunpack.c.l.b16 %v658
      %v667 = vunpack.c.l.b16 %v659
      %v668 = vpack.c.b16 %v665, %v664
      %v669 = vpack.c.b16 %v667, %v666
      %v671 = vsel %vm202, %v668, 0
      %v674 = vsel %vm202, %v669, 0
      %676 = vmatpush.bf16.msra.mxu0 0
      %677 = vmatpush.bf16.msra.mxu0 0
      %678 = vmatpush.bf16.msra.mxu0 0
      %679 = vmatpush.bf16.msra.mxu0 0
      %680 = vmatpush.bf16.msra.mxu0 0
      %681 = vmatpush.bf16.msra.mxu0 0
      %682 = vmatpush.bf16.msra.mxu0 %v214
      %683 = vmatpush.bf16.msra.mxu0 %v199
      %684 = vmatmul.bf16.gmra.mxu0 %v671
      %v685 = vpop.f32.mrf.mxu0
      %v686 = vadd.f32 0.0, %v685
      %v687 = vpop.f32.mrf.mxu0
      %v688 = vadd.f32 0.0, %v687
      %689 = vmatmul.bf16.gmra.mxu0 %v674
      %v690 = vpop.f32.mrf.mxu0
      %v691 = vadd.f32 0.0, %v690
      %v692 = vpop.f32.mrf.mxu0
      %v693 = vadd.f32 0.0, %v692
      %694 = vdwg.mxu0
      %v695 = vmax.f32 %v646, %v686
      %v696 = vmax.f32 %v648, %v688
      %v697 = vmax.f32 %v651, %v691
      %v698 = vmax.f32 %v653, %v693
      %699 = vst.msk [vmem:[#allocation2] sm:$0xff] %vm279, %v695
      %700 = vst.msk [vmem:[#allocation2 + $0x8] sm:$0xff] %vm279, %v696
      %701 = vst.msk [vmem:[#allocation2 + $0x10] sm:$0xff] %vm279, %v697
      %702 = vst.msk [vmem:[#allocation2 + $0x18] sm:$0xf] %vm283, %v698
      %v703 = vld [vmem:[#allocation2] ss:$2 sm:$0xff]
      %v704 = vld [vmem:[%s286] ss:$2 sm:$0x3f]
      %v705 = vld [vmem:[%s288] ss:$2 sm:$0xff]
      %v706 = vld [vmem:[%s290] ss:$2 sm:$0x3f]
      %v707 = vmax.f32 %v703, %v705
      %v708 = vmax.f32 %v704, %v706
      %v709 = vadd.f32 %v707, %v295
      %v710 = vadd.f32 %v708, %v295
      %v711 = vmax.f32 %v709, 0.0
      %v712 = vmax.f32 %v710, 0.0
      %v713 = vpack.c.bf16 %v711, %v711
      %v714 = vpack.c.bf16 %v712, %v712
      %s715 = scalar_lea.vmem %s170, 32
      %716 = vst.msk [vmem:[%s715] sm:$0xf] %vm283, %v713
      %717 = vst.msk [vmem:[%s715 + $0x4] sm:$0x7] %vm304, %v714
      %s718 = scalar_lea.vmem %s165, 160
      %v719 = vld [vmem:[%s718] sm:$0xf]
      %v720 = vld [vmem:[%s718 + $0x4] sm:$0xf]
      %v721 = vld [vmem:[%s718 + $0x8] sm:$0xf]
      %v722 = vld [vmem:[%s718 + $0xc] sm:$0x3]
      %v727 = vunpack.c.l.b16 %v719
      %v728 = vunpack.c.l.b16 %v720
      %v729 = vunpack.c.l.b16 %v721
      %v730 = vunpack.c.l.b16 %v722
      %v731 = vpack.c.b16 %v728, %v727
      %v732 = vpack.c.b16 %v730, %v729
      %v734 = vsel %vm202, %v731, 0
      %v737 = vsel %vm202, %v732, 0
      %739 = vmatpush.bf16.msra.mxu0 0
      %740 = vmatpush.bf16.msra.mxu0 0
      %741 = vmatpush.bf16.msra.mxu0 0
      %742 = vmatpush.bf16.msra.mxu0 0
      %743 = vmatpush.bf16.msra.mxu0 0
      %744 = vmatpush.bf16.msra.mxu0 0
      %745 = vmatpush.bf16.msra.mxu0 %v214
      %746 = vmatpush.bf16.msra.mxu0 %v199
      %747 = vmatmul.bf16.gmra.mxu0 %v734
      %v748 = vpop.f32.mrf.mxu0
      %v749 = vadd.f32 0.0, %v748
      %v750 = vpop.f32.mrf.mxu0
      %v751 = vadd.f32 0.0, %v750
      %752 = vmatmul.bf16.gmra.mxu0 %v737
      %v753 = vpop.f32.mrf.mxu0
      %v754 = vadd.f32 0.0, %v753
      %v755 = vpop.f32.mrf.mxu0
      %v756 = vadd.f32 0.0, %v755
      %757 = vdwg.mxu0
      %s758 = scalar_lea.vmem %s165, 176
      %v759 = vld [vmem:[%s758] sm:$0xf]
      %v760 = vld [vmem:[%s758 + $0x4] sm:$0xf]
      %v761 = vld [vmem:[%s758 + $0x8] sm:$0xf]
      %v762 = vld [vmem:[%s758 + $0xc] sm:$0x3]
      %v767 = vunpack.c.l.b16 %v759
      %v768 = vunpack.c.l.b16 %v760
      %v769 = vunpack.c.l.b16 %v761
      %v770 = vunpack.c.l.b16 %v762
      %v771 = vpack.c.b16 %v768, %v767
      %v772 = vpack.c.b16 %v770, %v769
      %v774 = vsel %vm202, %v771, 0
      %v777 = vsel %vm202, %v772, 0
      %779 = vmatpush.bf16.msra.mxu0 0
      %780 = vmatpush.bf16.msra.mxu0 0
      %781 = vmatpush.bf16.msra.mxu0 0
      %782 = vmatpush.bf16.msra.mxu0 0
      %783 = vmatpush.bf16.msra.mxu0 0
      %784 = vmatpush.bf16.msra.mxu0 0
      %785 = vmatpush.bf16.msra.mxu0 %v214
      %786 = vmatpush.bf16.msra.mxu0 %v199
      %787 = vmatmul.bf16.gmra.mxu0 %v774
      %v788 = vpop.f32.mrf.mxu0
      %v789 = vadd.f32 0.0, %v788
      %v790 = vpop.f32.mrf.mxu0
      %v791 = vadd.f32 0.0, %v790
      %792 = vmatmul.bf16.gmra.mxu0 %v777
      %v793 = vpop.f32.mrf.mxu0
      %v794 = vadd.f32 0.0, %v793
      %v795 = vpop.f32.mrf.mxu0
      %v796 = vadd.f32 0.0, %v795
      %797 = vdwg.mxu0
      %v798 = vmax.f32 %v749, %v789
      %v799 = vmax.f32 %v751, %v791
      %v800 = vmax.f32 %v754, %v794
      %v801 = vmax.f32 %v756, %v796
      %802 = vst.msk [vmem:[#allocation2] sm:$0xff] %vm279, %v798
      %803 = vst.msk [vmem:[#allocation2 + $0x8] sm:$0xff] %vm279, %v799
      %804 = vst.msk [vmem:[#allocation2 + $0x10] sm:$0xff] %vm279, %v800
      %805 = vst.msk [vmem:[#allocation2 + $0x18] sm:$0xf] %vm283, %v801
      %v806 = vld [vmem:[#allocation2] ss:$2 sm:$0xff]
      %v807 = vld [vmem:[%s286] ss:$2 sm:$0x3f]
      %v808 = vld [vmem:[%s288] ss:$2 sm:$0xff]
      %v809 = vld [vmem:[%s290] ss:$2 sm:$0x3f]
      %v810 = vmax.f32 %v806, %v808
      %v811 = vmax.f32 %v807, %v809
      %v812 = vadd.f32 %v810, %v295
      %v813 = vadd.f32 %v811, %v295
      %v814 = vmax.f32 %v812, 0.0
      %v815 = vmax.f32 %v813, 0.0
      %v816 = vpack.c.bf16 %v814, %v814
      %v817 = vpack.c.bf16 %v815, %v815
      %s818 = scalar_lea.vmem %s170, 40
      %819 = vst.msk [vmem:[%s818] sm:$0xf] %vm283, %v816
      %820 = vst.msk [vmem:[%s818 + $0x4] sm:$0x7] %vm304, %v817
      %s821 = scalar_lea.vmem %s165, 192
      %v822 = vld [vmem:[%s821] sm:$0xf]
      %v823 = vld [vmem:[%s821 + $0x4] sm:$0xf]
      %v824 = vld [vmem:[%s821 + $0x8] sm:$0xf]
      %v825 = vld [vmem:[%s821 + $0xc] sm:$0x3]
      %v830 = vunpack.c.l.b16 %v822
      %v831 = vunpack.c.l.b16 %v823
      %v832 = vunpack.c.l.b16 %v824
      %v833 = vunpack.c.l.b16 %v825
      %v834 = vpack.c.b16 %v831, %v830
      %v835 = vpack.c.b16 %v833, %v832
      %v837 = vsel %vm202, %v834, 0
      %v840 = vsel %vm202, %v835, 0
      %842 = vmatpush.bf16.msra.mxu0 0
      %843 = vmatpush.bf16.msra.mxu0 0
      %844 = vmatpush.bf16.msra.mxu0 0
      %845 = vmatpush.bf16.msra.mxu0 0
      %846 = vmatpush.bf16.msra.mxu0 0
      %847 = vmatpush.bf16.msra.mxu0 0
      %848 = vmatpush.bf16.msra.mxu0 %v214
      %849 = vmatpush.bf16.msra.mxu0 %v199
      %850 = vmatmul.bf16.gmra.mxu0 %v837
      %v851 = vpop.f32.mrf.mxu0
      %v852 = vadd.f32 0.0, %v851
      %v853 = vpop.f32.mrf.mxu0
      %v854 = vadd.f32 0.0, %v853
      %855 = vmatmul.bf16.gmra.mxu0 %v840
      %v856 = vpop.f32.mrf.mxu0
      %v857 = vadd.f32 0.0, %v856
      %v858 = vpop.f32.mrf.mxu0
      %v859 = vadd.f32 0.0, %v858
      %860 = vdwg.mxu0
      %s861 = scalar_lea.vmem %s165, 208
      %v862 = vld [vmem:[%s861] sm:$0xf]
      %v863 = vld [vmem:[%s861 + $0x4] sm:$0xf]
      %v864 = vld [vmem:[%s861 + $0x8] sm:$0xf]
      %v865 = vld [vmem:[%s861 + $0xc] sm:$0x3]
      %v870 = vunpack.c.l.b16 %v862
      %v871 = vunpack.c.l.b16 %v863
      %v872 = vunpack.c.l.b16 %v864
      %v873 = vunpack.c.l.b16 %v865
      %v874 = vpack.c.b16 %v871, %v870
      %v875 = vpack.c.b16 %v873, %v872
      %v877 = vsel %vm202, %v874, 0
      %v880 = vsel %vm202, %v875, 0
      %882 = vmatpush.bf16.msra.mxu0 0
      %883 = vmatpush.bf16.msra.mxu0 0
      %884 = vmatpush.bf16.msra.mxu0 0
      %885 = vmatpush.bf16.msra.mxu0 0
      %886 = vmatpush.bf16.msra.mxu0 0
      %887 = vmatpush.bf16.msra.mxu0 0
      %888 = vmatpush.bf16.msra.mxu0 %v214
      %889 = vmatpush.bf16.msra.mxu0 %v199
      %890 = vmatmul.bf16.gmra.mxu0 %v877
      %v891 = vpop.f32.mrf.mxu0
      %v892 = vadd.f32 0.0, %v891
      %v893 = vpop.f32.mrf.mxu0
      %v894 = vadd.f32 0.0, %v893
      %895 = vmatmul.bf16.gmra.mxu0 %v880
      %v896 = vpop.f32.mrf.mxu0
      %v897 = vadd.f32 0.0, %v896
      %v898 = vpop.f32.mrf.mxu0
      %v899 = vadd.f32 0.0, %v898
      %900 = vdwg.mxu0
      %v901 = vmax.f32 %v852, %v892
      %v902 = vmax.f32 %v854, %v894
      %v903 = vmax.f32 %v857, %v897
      %v904 = vmax.f32 %v859, %v899
      %905 = vst.msk [vmem:[#allocation2] sm:$0xff] %vm279, %v901
      %906 = vst.msk [vmem:[#allocation2 + $0x8] sm:$0xff] %vm279, %v902
      %907 = vst.msk [vmem:[#allocation2 + $0x10] sm:$0xff] %vm279, %v903
      %908 = vst.msk [vmem:[#allocation2 + $0x18] sm:$0xf] %vm283, %v904
      %v909 = vld [vmem:[#allocation2] ss:$2 sm:$0xff]
      %v910 = vld [vmem:[%s286] ss:$2 sm:$0x3f]
      %v911 = vld [vmem:[%s288] ss:$2 sm:$0xff]
      %v912 = vld [vmem:[%s290] ss:$2 sm:$0x3f]
      %v913 = vmax.f32 %v909, %v911
      %v914 = vmax.f32 %v910, %v912
      %v915 = vadd.f32 %v913, %v295
      %v916 = vadd.f32 %v914, %v295
      %v917 = vmax.f32 %v915, 0.0
      %v918 = vmax.f32 %v916, 0.0
      %v919 = vpack.c.bf16 %v917, %v917
      %v920 = vpack.c.bf16 %v918, %v918
      %s921 = scalar_lea.vmem %s170, 48
      %922 = vst.msk [vmem:[%s921] sm:$0xf] %vm283, %v919
      %923 = vst.msk [vmem:[%s921 + $0x4] sm:$0x7] %vm304, %v920
      %s924 = scalar_lea.vmem %s165, 224
      %v925 = vld [vmem:[%s924] sm:$0xf]
      %v926 = vld [vmem:[%s924 + $0x4] sm:$0xf]
      %v927 = vld [vmem:[%s924 + $0x8] sm:$0xf]
      %v928 = vld [vmem:[%s924 + $0xc] sm:$0x3]
      %v933 = vunpack.c.l.b16 %v925
      %v934 = vunpack.c.l.b16 %v926
      %v935 = vunpack.c.l.b16 %v927
      %v936 = vunpack.c.l.b16 %v928
      %v937 = vpack.c.b16 %v934, %v933
      %v938 = vpack.c.b16 %v936, %v935
      %v940 = vsel %vm202, %v937, 0
      %v943 = vsel %vm202, %v938, 0
      %945 = vmatpush.bf16.msra.mxu0 0
      %946 = vmatpush.bf16.msra.mxu0 0
      %947 = vmatpush.bf16.msra.mxu0 0
      %948 = vmatpush.bf16.msra.mxu0 0
      %949 = vmatpush.bf16.msra.mxu0 0
      %950 = vmatpush.bf16.msra.mxu0 0
      %951 = vmatpush.bf16.msra.mxu0 %v214
      %952 = vmatpush.bf16.msra.mxu0 %v199
      %953 = vmatmul.bf16.gmra.mxu0 %v940
      %v954 = vpop.f32.mrf.mxu0
      %v955 = vadd.f32 0.0, %v954
      %v956 = vpop.f32.mrf.mxu0
      %v957 = vadd.f32 0.0, %v956
      %958 = vmatmul.bf16.gmra.mxu0 %v943
      %v959 = vpop.f32.mrf.mxu0
      %v960 = vadd.f32 0.0, %v959
      %v961 = vpop.f32.mrf.mxu0
      %v962 = vadd.f32 0.0, %v961
      %963 = vdwg.mxu0
      %s964 = scalar_lea.vmem %s165, 240
      %v965 = vld [vmem:[%s964] sm:$0xf]
      %v966 = vld [vmem:[%s964 + $0x4] sm:$0xf]
      %v967 = vld [vmem:[%s964 + $0x8] sm:$0xf]
      %v968 = vld [vmem:[%s964 + $0xc] sm:$0x3]
      %v973 = vunpack.c.l.b16 %v965
      %v974 = vunpack.c.l.b16 %v966
      %v975 = vunpack.c.l.b16 %v967
      %v976 = vunpack.c.l.b16 %v968
      %v977 = vpack.c.b16 %v974, %v973
      %v978 = vpack.c.b16 %v976, %v975
      %v980 = vsel %vm202, %v977, 0
      %v983 = vsel %vm202, %v978, 0
      %985 = vmatpush.bf16.msra.mxu0 0
      %986 = vmatpush.bf16.msra.mxu0 0
      %987 = vmatpush.bf16.msra.mxu0 0
      %988 = vmatpush.bf16.msra.mxu0 0
      %989 = vmatpush.bf16.msra.mxu0 0
      %990 = vmatpush.bf16.msra.mxu0 0
      %991 = vmatpush.bf16.msra.mxu0 %v214
      %992 = vmatpush.bf16.msra.mxu0 %v199
      %993 = vmatmul.bf16.gmra.mxu0 %v980
      %v994 = vpop.f32.mrf.mxu0
      %v995 = vadd.f32 0.0, %v994
      %v996 = vpop.f32.mrf.mxu0
      %v997 = vadd.f32 0.0, %v996
      %998 = vmatmul.bf16.gmra.mxu0 %v983
      %v999 = vpop.f32.mrf.mxu0
      %v1000 = vadd.f32 0.0, %v999
      %v1001 = vpop.f32.mrf.mxu0
      %v1002 = vadd.f32 0.0, %v1001
      %1003 = vdwg.mxu0
      %v1004 = vmax.f32 %v955, %v995
      %v1005 = vmax.f32 %v957, %v997
      %v1006 = vmax.f32 %v960, %v1000
      %v1007 = vmax.f32 %v962, %v1002
      %1008 = vst.msk [vmem:[#allocation2] sm:$0xff] %vm279, %v1004
      %1009 = vst.msk [vmem:[#allocation2 + $0x8] sm:$0xff] %vm279, %v1005
      %1010 = vst.msk [vmem:[#allocation2 + $0x10] sm:$0xff] %vm279, %v1006
      %1011 = vst.msk [vmem:[#allocation2 + $0x18] sm:$0xf] %vm283, %v1007
      %v1012 = vld [vmem:[#allocation2] ss:$2 sm:$0xff]
      %v1013 = vld [vmem:[%s286] ss:$2 sm:$0x3f]
      %v1014 = vld [vmem:[%s288] ss:$2 sm:$0xff]
      %v1015 = vld [vmem:[%s290] ss:$2 sm:$0x3f]
      %v1016 = vmax.f32 %v1012, %v1014
      %v1017 = vmax.f32 %v1013, %v1015
      %v1018 = vadd.f32 %v1016, %v295
      %v1019 = vadd.f32 %v1017, %v295
      %v1020 = vmax.f32 %v1018, 0.0
      %v1021 = vmax.f32 %v1019, 0.0
      %v1022 = vpack.c.bf16 %v1020, %v1020
      %v1023 = vpack.c.bf16 %v1021, %v1021
      %s1024 = scalar_lea.vmem %s170, 56
      %1025 = vst.msk [vmem:[%s1024] sm:$0xf] %vm283, %v1022
      %1026 = vst.msk [vmem:[%s1024 + $0x4] sm:$0x7] %vm304, %v1023
      %s1027 = scalar_lea.vmem %s165, 256
      %v1028 = vld [vmem:[%s1027] sm:$0xf]
      %v1029 = vld [vmem:[%s1027 + $0x4] sm:$0xf]
      %v1030 = vld [vmem:[%s1027 + $0x8] sm:$0xf]
      %v1031 = vld [vmem:[%s1027 + $0xc] sm:$0x3]
      %v1036 = vunpack.c.l.b16 %v1028
      %v1037 = vunpack.c.l.b16 %v1029
      %v1038 = vunpack.c.l.b16 %v1030
      %v1039 = vunpack.c.l.b16 %v1031
      %v1040 = vpack.c.b16 %v1037, %v1036
      %v1041 = vpack.c.b16 %v1039, %v1038
      %v1043 = vsel %vm202, %v1040, 0
      %v1046 = vsel %vm202, %v1041, 0
      %1048 = vmatpush.bf16.msra.mxu0 0
      %1049 = vmatpush.bf16.msra.mxu0 0
      %1050 = vmatpush.bf16.msra.mxu0 0
      %1051 = vmatpush.bf16.msra.mxu0 0
      %1052 = vmatpush.bf16.msra.mxu0 0
      %1053 = vmatpush.bf16.msra.mxu0 0
      %1054 = vmatpush.bf16.msra.mxu0 %v214
      %1055 = vmatpush.bf16.msra.mxu0 %v199
      %1056 = vmatmul.bf16.gmra.mxu0 %v1043
      %v1057 = vpop.f32.mrf.mxu0
      %v1058 = vadd.f32 0.0, %v1057
      %v1059 = vpop.f32.mrf.mxu0
      %v1060 = vadd.f32 0.0, %v1059
      %1061 = vmatmul.bf16.gmra.mxu0 %v1046
      %v1062 = vpop.f32.mrf.mxu0
      %v1063 = vadd.f32 0.0, %v1062
      %v1064 = vpop.f32.mrf.mxu0
      %v1065 = vadd.f32 0.0, %v1064
      %1066 = vdwg.mxu0
      %s1067 = scalar_lea.vmem %s165, 272
      %v1068 = vld [vmem:[%s1067] sm:$0xf]
      %v1069 = vld [vmem:[%s1067 + $0x4] sm:$0xf]
      %v1070 = vld [vmem:[%s1067 + $0x8] sm:$0xf]
      %v1071 = vld [vmem:[%s1067 + $0xc] sm:$0x3]
      %v1076 = vunpack.c.l.b16 %v1068
      %v1077 = vunpack.c.l.b16 %v1069
      %v1078 = vunpack.c.l.b16 %v1070
      %v1079 = vunpack.c.l.b16 %v1071
      %v1080 = vpack.c.b16 %v1077, %v1076
      %v1081 = vpack.c.b16 %v1079, %v1078
      %v1083 = vsel %vm202, %v1080, 0
      %v1086 = vsel %vm202, %v1081, 0
      %1088 = vmatpush.bf16.msra.mxu0 0
      %1089 = vmatpush.bf16.msra.mxu0 0
      %1090 = vmatpush.bf16.msra.mxu0 0
      %1091 = vmatpush.bf16.msra.mxu0 0
      %1092 = vmatpush.bf16.msra.mxu0 0
      %1093 = vmatpush.bf16.msra.mxu0 0
      %1094 = vmatpush.bf16.msra.mxu0 %v214
      %1095 = vmatpush.bf16.msra.mxu0 %v199
      %1096 = vmatmul.bf16.gmra.mxu0 %v1083
      %v1097 = vpop.f32.mrf.mxu0
      %v1098 = vadd.f32 0.0, %v1097
      %v1099 = vpop.f32.mrf.mxu0
      %v1100 = vadd.f32 0.0, %v1099
      %1101 = vmatmul.bf16.gmra.mxu0 %v1086
      %v1102 = vpop.f32.mrf.mxu0
      %v1103 = vadd.f32 0.0, %v1102
      %v1104 = vpop.f32.mrf.mxu0
      %v1105 = vadd.f32 0.0, %v1104
      %1106 = vdwg.mxu0
      %v1107 = vmax.f32 %v1058, %v1098
      %v1108 = vmax.f32 %v1060, %v1100
      %v1109 = vmax.f32 %v1063, %v1103
      %v1110 = vmax.f32 %v1065, %v1105
      %1111 = vst.msk [vmem:[#allocation2] sm:$0xff] %vm279, %v1107
      %1112 = vst.msk [vmem:[#allocation2 + $0x8] sm:$0xff] %vm279, %v1108
      %1113 = vst.msk [vmem:[#allocation2 + $0x10] sm:$0xff] %vm279, %v1109
      %1114 = vst.msk [vmem:[#allocation2 + $0x18] sm:$0xf] %vm283, %v1110
      %v1115 = vld [vmem:[#allocation2] ss:$2 sm:$0xff]
      %v1116 = vld [vmem:[%s286] ss:$2 sm:$0x3f]
      %v1117 = vld [vmem:[%s288] ss:$2 sm:$0xff]
      %v1118 = vld [vmem:[%s290] ss:$2 sm:$0x3f]
      %v1119 = vmax.f32 %v1115, %v1117
      %v1120 = vmax.f32 %v1116, %v1118
      %v1121 = vadd.f32 %v1119, %v295
      %v1122 = vadd.f32 %v1120, %v295
      %v1123 = vmax.f32 %v1121, 0.0
      %v1124 = vmax.f32 %v1122, 0.0
      %v1125 = vpack.c.bf16 %v1123, %v1123
      %v1126 = vpack.c.bf16 %v1124, %v1124
      %s1127 = scalar_lea.vmem %s170, 64
      %1128 = vst.msk [vmem:[%s1127] sm:$0xf] %vm283, %v1125
      %1129 = vst.msk [vmem:[%s1127 + $0x4] sm:$0x7] %vm304, %v1126
      %s1130 = scalar_lea.vmem %s165, 288
      %v1131 = vld [vmem:[%s1130] sm:$0xf]
      %v1132 = vld [vmem:[%s1130 + $0x4] sm:$0xf]
      %v1133 = vld [vmem:[%s1130 + $0x8] sm:$0xf]
      %v1134 = vld [vmem:[%s1130 + $0xc] sm:$0x3]
      %v1139 = vunpack.c.l.b16 %v1131
      %v1140 = vunpack.c.l.b16 %v1132
      %v1141 = vunpack.c.l.b16 %v1133
      %v1142 = vunpack.c.l.b16 %v1134
      %v1143 = vpack.c.b16 %v1140, %v1139
      %v1144 = vpack.c.b16 %v1142, %v1141
      %v1146 = vsel %vm202, %v1143, 0
      %v1149 = vsel %vm202, %v1144, 0
      %1151 = vmatpush.bf16.msra.mxu0 0
      %1152 = vmatpush.bf16.msra.mxu0 0
      %1153 = vmatpush.bf16.msra.mxu0 0
      %1154 = vmatpush.bf16.msra.mxu0 0
      %1155 = vmatpush.bf16.msra.mxu0 0
      %1156 = vmatpush.bf16.msra.mxu0 0
      %1157 = vmatpush.bf16.msra.mxu0 %v214
      %1158 = vmatpush.bf16.msra.mxu0 %v199
      %1159 = vmatmul.bf16.gmra.mxu0 %v1146
      %v1160 = vpop.f32.mrf.mxu0
      %v1161 = vadd.f32 0.0, %v1160
      %v1162 = vpop.f32.mrf.mxu0
      %v1163 = vadd.f32 0.0, %v1162
      %1164 = vmatmul.bf16.gmra.mxu0 %v1149
      %v1165 = vpop.f32.mrf.mxu0
      %v1166 = vadd.f32 0.0, %v1165
      %v1167 = vpop.f32.mrf.mxu0
      %v1168 = vadd.f32 0.0, %v1167
      %1169 = vdwg.mxu0
      %s1170 = scalar_lea.vmem %s165, 304
      %v1171 = vld [vmem:[%s1170] sm:$0xf]
      %v1172 = vld [vmem:[%s1170 + $0x4] sm:$0xf]
      %v1173 = vld [vmem:[%s1170 + $0x8] sm:$0xf]
      %v1174 = vld [vmem:[%s1170 + $0xc] sm:$0x3]
      %v1179 = vunpack.c.l.b16 %v1171
      %v1180 = vunpack.c.l.b16 %v1172
      %v1181 = vunpack.c.l.b16 %v1173
      %v1182 = vunpack.c.l.b16 %v1174
      %v1183 = vpack.c.b16 %v1180, %v1179
      %v1184 = vpack.c.b16 %v1182, %v1181
      %v1186 = vsel %vm202, %v1183, 0
      %v1189 = vsel %vm202, %v1184, 0
      %1191 = vmatpush.bf16.msra.mxu0 0
      %1192 = vmatpush.bf16.msra.mxu0 0
      %1193 = vmatpush.bf16.msra.mxu0 0
      %1194 = vmatpush.bf16.msra.mxu0 0
      %1195 = vmatpush.bf16.msra.mxu0 0
      %1196 = vmatpush.bf16.msra.mxu0 0
      %1197 = vmatpush.bf16.msra.mxu0 %v214
      %1198 = vmatpush.bf16.msra.mxu0 %v199
      %1199 = vmatmul.bf16.gmra.mxu0 %v1186
      %v1200 = vpop.f32.mrf.mxu0
      %v1201 = vadd.f32 0.0, %v1200
      %v1202 = vpop.f32.mrf.mxu0
      %v1203 = vadd.f32 0.0, %v1202
      %1204 = vmatmul.bf16.gmra.mxu0 %v1189
      %v1205 = vpop.f32.mrf.mxu0
      %v1206 = vadd.f32 0.0, %v1205
      %v1207 = vpop.f32.mrf.mxu0
      %v1208 = vadd.f32 0.0, %v1207
      %1209 = vdwg.mxu0
      %v1210 = vmax.f32 %v1161, %v1201
      %v1211 = vmax.f32 %v1163, %v1203
      %v1212 = vmax.f32 %v1166, %v1206
      %v1213 = vmax.f32 %v1168, %v1208
      %1214 = vst.msk [vmem:[#allocation2] sm:$0xff] %vm279, %v1210
      %1215 = vst.msk [vmem:[#allocation2 + $0x8] sm:$0xff] %vm279, %v1211
      %1216 = vst.msk [vmem:[#allocation2 + $0x10] sm:$0xff] %vm279, %v1212
      %1217 = vst.msk [vmem:[#allocation2 + $0x18] sm:$0xf] %vm283, %v1213
      %v1218 = vld [vmem:[#allocation2] ss:$2 sm:$0xff]
      %v1219 = vld [vmem:[%s286] ss:$2 sm:$0x3f]
      %v1220 = vld [vmem:[%s288] ss:$2 sm:$0xff]
      %v1221 = vld [vmem:[%s290] ss:$2 sm:$0x3f]
      %v1222 = vmax.f32 %v1218, %v1220
      %v1223 = vmax.f32 %v1219, %v1221
      %v1224 = vadd.f32 %v1222, %v295
      %v1225 = vadd.f32 %v1223, %v295
      %v1226 = vmax.f32 %v1224, 0.0
      %v1227 = vmax.f32 %v1225, 0.0
      %v1228 = vpack.c.bf16 %v1226, %v1226
      %v1229 = vpack.c.bf16 %v1227, %v1227
      %s1230 = scalar_lea.vmem %s170, 72
      %1231 = vst.msk [vmem:[%s1230] sm:$0xf] %vm283, %v1228
      %1232 = vst.msk [vmem:[%s1230 + $0x4] sm:$0x7] %vm304, %v1229
      %s1233 = scalar_lea.vmem %s165, 320
      %v1234 = vld [vmem:[%s1233] sm:$0xf]
      %v1235 = vld [vmem:[%s1233 + $0x4] sm:$0xf]
      %v1236 = vld [vmem:[%s1233 + $0x8] sm:$0xf]
      %v1237 = vld [vmem:[%s1233 + $0xc] sm:$0x3]
      %v1242 = vunpack.c.l.b16 %v1234
      %v1243 = vunpack.c.l.b16 %v1235
      %v1244 = vunpack.c.l.b16 %v1236
      %v1245 = vunpack.c.l.b16 %v1237
      %v1246 = vpack.c.b16 %v1243, %v1242
      %v1247 = vpack.c.b16 %v1245, %v1244
      %v1249 = vsel %vm202, %v1246, 0
      %v1252 = vsel %vm202, %v1247, 0
      %1254 = vmatpush.bf16.msra.mxu0 0
      %1255 = vmatpush.bf16.msra.mxu0 0
      %1256 = vmatpush.bf16.msra.mxu0 0
      %1257 = vmatpush.bf16.msra.mxu0 0
      %1258 = vmatpush.bf16.msra.mxu0 0
      %1259 = vmatpush.bf16.msra.mxu0 0
      %1260 = vmatpush.bf16.msra.mxu0 %v214
      %1261 = vmatpush.bf16.msra.mxu0 %v199
      %1262 = vmatmul.bf16.gmra.mxu0 %v1249
      %v1263 = vpop.f32.mrf.mxu0
      %v1264 = vadd.f32 0.0, %v1263
      %v1265 = vpop.f32.mrf.mxu0
      %v1266 = vadd.f32 0.0, %v1265
      %1267 = vmatmul.bf16.gmra.mxu0 %v1252
      %v1268 = vpop.f32.mrf.mxu0
      %v1269 = vadd.f32 0.0, %v1268
      %v1270 = vpop.f32.mrf.mxu0
      %v1271 = vadd.f32 0.0, %v1270
      %1272 = vdwg.mxu0
      %s1273 = scalar_lea.vmem %s165, 336
      %v1274 = vld [vmem:[%s1273] sm:$0xf]
      %v1275 = vld [vmem:[%s1273 + $0x4] sm:$0xf]
      %v1276 = vld [vmem:[%s1273 + $0x8] sm:$0xf]
      %v1277 = vld [vmem:[%s1273 + $0xc] sm:$0x3]
      %v1282 = vunpack.c.l.b16 %v1274
      %v1283 = vunpack.c.l.b16 %v1275
      %v1284 = vunpack.c.l.b16 %v1276
      %v1285 = vunpack.c.l.b16 %v1277
      %v1286 = vpack.c.b16 %v1283, %v1282
      %v1287 = vpack.c.b16 %v1285, %v1284
      %v1289 = vsel %vm202, %v1286, 0
      %v1292 = vsel %vm202, %v1287, 0
      %1294 = vmatpush.bf16.msra.mxu0 0
      %1295 = vmatpush.bf16.msra.mxu0 0
      %1296 = vmatpush.bf16.msra.mxu0 0
      %1297 = vmatpush.bf16.msra.mxu0 0
      %1298 = vmatpush.bf16.msra.mxu0 0
      %1299 = vmatpush.bf16.msra.mxu0 0
      %1300 = vmatpush.bf16.msra.mxu0 %v214
      %1301 = vmatpush.bf16.msra.mxu0 %v199
      %1302 = vmatmul.bf16.gmra.mxu0 %v1289
      %v1303 = vpop.f32.mrf.mxu0
      %v1304 = vadd.f32 0.0, %v1303
      %v1305 = vpop.f32.mrf.mxu0
      %v1306 = vadd.f32 0.0, %v1305
      %1307 = vmatmul.bf16.gmra.mxu0 %v1292
      %v1308 = vpop.f32.mrf.mxu0
      %v1309 = vadd.f32 0.0, %v1308
      %v1310 = vpop.f32.mrf.mxu0
      %v1311 = vadd.f32 0.0, %v1310
      %1312 = vdwg.mxu0
      %v1313 = vmax.f32 %v1264, %v1304
      %v1314 = vmax.f32 %v1266, %v1306
      %v1315 = vmax.f32 %v1269, %v1309
      %v1316 = vmax.f32 %v1271, %v1311
      %1317 = vst.msk [vmem:[#allocation2] sm:$0xff] %vm279, %v1313
      %1318 = vst.msk [vmem:[#allocation2 + $0x8] sm:$0xff] %vm279, %v1314
      %1319 = vst.msk [vmem:[#allocation2 + $0x10] sm:$0xff] %vm279, %v1315
      %1320 = vst.msk [vmem:[#allocation2 + $0x18] sm:$0xf] %vm283, %v1316
      %v1321 = vld [vmem:[#allocation2] ss:$2 sm:$0xff]
      %v1322 = vld [vmem:[%s286] ss:$2 sm:$0x3f]
      %v1323 = vld [vmem:[%s288] ss:$2 sm:$0xff]
      %v1324 = vld [vmem:[%s290] ss:$2 sm:$0x3f]
      %v1325 = vmax.f32 %v1321, %v1323
      %v1326 = vmax.f32 %v1322, %v1324
      %v1327 = vadd.f32 %v1325, %v295
      %v1328 = vadd.f32 %v1326, %v295
      %v1329 = vmax.f32 %v1327, 0.0
      %v1330 = vmax.f32 %v1328, 0.0
      %v1331 = vpack.c.bf16 %v1329, %v1329
      %v1332 = vpack.c.bf16 %v1330, %v1330
      %s1333 = scalar_lea.vmem %s170, 80
      %1334 = vst.msk [vmem:[%s1333] sm:$0xf] %vm283, %v1331
      %1335 = vst.msk [vmem:[%s1333 + $0x4] sm:$0x7] %vm304, %v1332
      %s1336 = scalar_lea.vmem %s165, 352
      %v1337 = vld [vmem:[%s1336] sm:$0xf]
      %v1338 = vld [vmem:[%s1336 + $0x4] sm:$0xf]
      %v1339 = vld [vmem:[%s1336 + $0x8] sm:$0xf]
      %v1340 = vld [vmem:[%s1336 + $0xc] sm:$0x3]
      %v1345 = vunpack.c.l.b16 %v1337
      %v1346 = vunpack.c.l.b16 %v1338
      %v1347 = vunpack.c.l.b16 %v1339
      %v1348 = vunpack.c.l.b16 %v1340
      %v1349 = vpack.c.b16 %v1346, %v1345
      %v1350 = vpack.c.b16 %v1348, %v1347
      %v1352 = vsel %vm202, %v1349, 0
      %v1355 = vsel %vm202, %v1350, 0
      %1357 = vmatpush.bf16.msra.mxu0 0
      %1358 = vmatpush.bf16.msra.mxu0 0
      %1359 = vmatpush.bf16.msra.mxu0 0
      %1360 = vmatpush.bf16.msra.mxu0 0
      %1361 = vmatpush.bf16.msra.mxu0 0
      %1362 = vmatpush.bf16.msra.mxu0 0
      %1363 = vmatpush.bf16.msra.mxu0 %v214
      %1364 = vmatpush.bf16.msra.mxu0 %v199
      %1365 = vmatmul.bf16.gmra.mxu0 %v1352
      %v1366 = vpop.f32.mrf.mxu0
      %v1367 = vadd.f32 0.0, %v1366
      %v1368 = vpop.f32.mrf.mxu0
      %v1369 = vadd.f32 0.0, %v1368
      %1370 = vmatmul.bf16.gmra.mxu0 %v1355
      %v1371 = vpop.f32.mrf.mxu0
      %v1372 = vadd.f32 0.0, %v1371
      %v1373 = vpop.f32.mrf.mxu0
      %v1374 = vadd.f32 0.0, %v1373
      %1375 = vdwg.mxu0
      %s1376 = scalar_lea.vmem %s165, 368
      %v1377 = vld [vmem:[%s1376] sm:$0xf]
      %v1378 = vld [vmem:[%s1376 + $0x4] sm:$0xf]
      %v1379 = vld [vmem:[%s1376 + $0x8] sm:$0xf]
      %v1380 = vld [vmem:[%s1376 + $0xc] sm:$0x3]
      %v1385 = vunpack.c.l.b16 %v1377
      %v1386 = vunpack.c.l.b16 %v1378
      %v1387 = vunpack.c.l.b16 %v1379
      %v1388 = vunpack.c.l.b16 %v1380
      %v1389 = vpack.c.b16 %v1386, %v1385
      %v1390 = vpack.c.b16 %v1388, %v1387
      %v1392 = vsel %vm202, %v1389, 0
      %v1395 = vsel %vm202, %v1390, 0
      %1397 = vmatpush.bf16.msra.mxu0 0
      %1398 = vmatpush.bf16.msra.mxu0 0
      %1399 = vmatpush.bf16.msra.mxu0 0
      %1400 = vmatpush.bf16.msra.mxu0 0
      %1401 = vmatpush.bf16.msra.mxu0 0
      %1402 = vmatpush.bf16.msra.mxu0 0
      %1403 = vmatpush.bf16.msra.mxu0 %v214
      %1404 = vmatpush.bf16.msra.mxu0 %v199
      %1405 = vmatmul.bf16.gmra.mxu0 %v1392
      %v1406 = vpop.f32.mrf.mxu0
      %v1407 = vadd.f32 0.0, %v1406
      %v1408 = vpop.f32.mrf.mxu0
      %v1409 = vadd.f32 0.0, %v1408
      %1410 = vmatmul.bf16.gmra.mxu0 %v1395
      %v1411 = vpop.f32.mrf.mxu0
      %v1412 = vadd.f32 0.0, %v1411
      %v1413 = vpop.f32.mrf.mxu0
      %v1414 = vadd.f32 0.0, %v1413
      %1415 = vdwg.mxu0
      %v1416 = vmax.f32 %v1367, %v1407
      %v1417 = vmax.f32 %v1369, %v1409
      %v1418 = vmax.f32 %v1372, %v1412
      %v1419 = vmax.f32 %v1374, %v1414
      %1420 = vst.msk [vmem:[#allocation2] sm:$0xff] %vm279, %v1416
      %1421 = vst.msk [vmem:[#allocation2 + $0x8] sm:$0xff] %vm279, %v1417
      %1422 = vst.msk [vmem:[#allocation2 + $0x10] sm:$0xff] %vm279, %v1418
      %1423 = vst.msk [vmem:[#allocation2 + $0x18] sm:$0xf] %vm283, %v1419
      %v1424 = vld [vmem:[#allocation2] ss:$2 sm:$0xff]
      %v1425 = vld [vmem:[%s286] ss:$2 sm:$0x3f]
      %v1426 = vld [vmem:[%s288] ss:$2 sm:$0xff]
      %v1427 = vld [vmem:[%s290] ss:$2 sm:$0x3f]
      %v1428 = vmax.f32 %v1424, %v1426
      %v1429 = vmax.f32 %v1425, %v1427
      %v1430 = vadd.f32 %v1428, %v295
      %v1431 = vadd.f32 %v1429, %v295
      %v1432 = vmax.f32 %v1430, 0.0
      %v1433 = vmax.f32 %v1431, 0.0
      %v1434 = vpack.c.bf16 %v1432, %v1432
      %v1435 = vpack.c.bf16 %v1433, %v1433
      %s1436 = scalar_lea.vmem %s170, 88
      %1437 = vst.msk [vmem:[%s1436] sm:$0xf] %vm283, %v1434
      %1438 = vst.msk [vmem:[%s1436 + $0x4] sm:$0x7] %vm304, %v1435
      %s1439 = scalar_lea.vmem %s165, 384
      %v1440 = vld [vmem:[%s1439] sm:$0xf]
      %v1441 = vld [vmem:[%s1439 + $0x4] sm:$0xf]
      %v1442 = vld [vmem:[%s1439 + $0x8] sm:$0xf]
      %v1443 = vld [vmem:[%s1439 + $0xc] sm:$0x3]
      %v1448 = vunpack.c.l.b16 %v1440
      %v1449 = vunpack.c.l.b16 %v1441
      %v1450 = vunpack.c.l.b16 %v1442
      %v1451 = vunpack.c.l.b16 %v1443
      %v1452 = vpack.c.b16 %v1449, %v1448
      %v1453 = vpack.c.b16 %v1451, %v1450
      %v1455 = vsel %vm202, %v1452, 0
      %v1458 = vsel %vm202, %v1453, 0
      %1460 = vmatpush.bf16.msra.mxu0 0
      %1461 = vmatpush.bf16.msra.mxu0 0
      %1462 = vmatpush.bf16.msra.mxu0 0
      %1463 = vmatpush.bf16.msra.mxu0 0
      %1464 = vmatpush.bf16.msra.mxu0 0
      %1465 = vmatpush.bf16.msra.mxu0 0
      %1466 = vmatpush.bf16.msra.mxu0 %v214
      %1467 = vmatpush.bf16.msra.mxu0 %v199
      %1468 = vmatmul.bf16.gmra.mxu0 %v1455
      %v1469 = vpop.f32.mrf.mxu0
      %v1470 = vadd.f32 0.0, %v1469
      %v1471 = vpop.f32.mrf.mxu0
      %v1472 = vadd.f32 0.0, %v1471
      %1473 = vmatmul.bf16.gmra.mxu0 %v1458
      %v1474 = vpop.f32.mrf.mxu0
      %v1475 = vadd.f32 0.0, %v1474
      %v1476 = vpop.f32.mrf.mxu0
      %v1477 = vadd.f32 0.0, %v1476
      %1478 = vdwg.mxu0
      %s1479 = scalar_lea.vmem %s165, 400
      %v1480 = vld [vmem:[%s1479] sm:$0xf]
      %v1481 = vld [vmem:[%s1479 + $0x4] sm:$0xf]
      %v1482 = vld [vmem:[%s1479 + $0x8] sm:$0xf]
      %v1483 = vld [vmem:[%s1479 + $0xc] sm:$0x3]
      %v1488 = vunpack.c.l.b16 %v1480
      %v1489 = vunpack.c.l.b16 %v1481
      %v1490 = vunpack.c.l.b16 %v1482
      %v1491 = vunpack.c.l.b16 %v1483
      %v1492 = vpack.c.b16 %v1489, %v1488
      %v1493 = vpack.c.b16 %v1491, %v1490
      %v1495 = vsel %vm202, %v1492, 0
      %v1498 = vsel %vm202, %v1493, 0
      %1500 = vmatpush.bf16.msra.mxu0 0
      %1501 = vmatpush.bf16.msra.mxu0 0
      %1502 = vmatpush.bf16.msra.mxu0 0
      %1503 = vmatpush.bf16.msra.mxu0 0
      %1504 = vmatpush.bf16.msra.mxu0 0
      %1505 = vmatpush.bf16.msra.mxu0 0
      %1506 = vmatpush.bf16.msra.mxu0 %v214
      %1507 = vmatpush.bf16.msra.mxu0 %v199
      %1508 = vmatmul.bf16.gmra.mxu0 %v1495
      %v1509 = vpop.f32.mrf.mxu0
      %v1510 = vadd.f32 0.0, %v1509
      %v1511 = vpop.f32.mrf.mxu0
      %v1512 = vadd.f32 0.0, %v1511
      %1513 = vmatmul.bf16.gmra.mxu0 %v1498
      %v1514 = vpop.f32.mrf.mxu0
      %v1515 = vadd.f32 0.0, %v1514
      %v1516 = vpop.f32.mrf.mxu0
      %v1517 = vadd.f32 0.0, %v1516
      %1518 = vdwg.mxu0
      %v1519 = vmax.f32 %v1470, %v1510
      %v1520 = vmax.f32 %v1472, %v1512
      %v1521 = vmax.f32 %v1475, %v1515
      %v1522 = vmax.f32 %v1477, %v1517
      %1523 = vst.msk [vmem:[#allocation2] sm:$0xff] %vm279, %v1519
      %1524 = vst.msk [vmem:[#allocation2 + $0x8] sm:$0xff] %vm279, %v1520
      %1525 = vst.msk [vmem:[#allocation2 + $0x10] sm:$0xff] %vm279, %v1521
      %1526 = vst.msk [vmem:[#allocation2 + $0x18] sm:$0xf] %vm283, %v1522
      %v1527 = vld [vmem:[#allocation2] ss:$2 sm:$0xff]
      %v1528 = vld [vmem:[%s286] ss:$2 sm:$0x3f]
      %v1529 = vld [vmem:[%s288] ss:$2 sm:$0xff]
      %v1530 = vld [vmem:[%s290] ss:$2 sm:$0x3f]
      %v1531 = vmax.f32 %v1527, %v1529
      %v1532 = vmax.f32 %v1528, %v1530
      %v1533 = vadd.f32 %v1531, %v295
      %v1534 = vadd.f32 %v1532, %v295
      %v1535 = vmax.f32 %v1533, 0.0
      %v1536 = vmax.f32 %v1534, 0.0
      %v1537 = vpack.c.bf16 %v1535, %v1535
      %v1538 = vpack.c.bf16 %v1536, %v1536
      %s1539 = scalar_lea.vmem %s170, 96
      %1540 = vst.msk [vmem:[%s1539] sm:$0xf] %vm283, %v1537
      %1541 = vst.msk [vmem:[%s1539 + $0x4] sm:$0x7] %vm304, %v1538
      %s1542 = scalar_lea.vmem %s165, 416
      %v1543 = vld [vmem:[%s1542] sm:$0xf]
      %v1544 = vld [vmem:[%s1542 + $0x4] sm:$0xf]
      %v1545 = vld [vmem:[%s1542 + $0x8] sm:$0xf]
      %v1546 = vld [vmem:[%s1542 + $0xc] sm:$0x3]
      %v1551 = vunpack.c.l.b16 %v1543
      %v1552 = vunpack.c.l.b16 %v1544
      %v1553 = vunpack.c.l.b16 %v1545
      %v1554 = vunpack.c.l.b16 %v1546
      %v1555 = vpack.c.b16 %v1552, %v1551
      %v1556 = vpack.c.b16 %v1554, %v1553
      %v1558 = vsel %vm202, %v1555, 0
      %v1561 = vsel %vm202, %v1556, 0
      %1563 = vmatpush.bf16.msra.mxu0 0
      %1564 = vmatpush.bf16.msra.mxu0 0
      %1565 = vmatpush.bf16.msra.mxu0 0
      %1566 = vmatpush.bf16.msra.mxu0 0
      %1567 = vmatpush.bf16.msra.mxu0 0
      %1568 = vmatpush.bf16.msra.mxu0 0
      %1569 = vmatpush.bf16.msra.mxu0 %v214
      %1570 = vmatpush.bf16.msra.mxu0 %v199
      %1571 = vmatmul.bf16.gmra.mxu0 %v1558
      %v1572 = vpop.f32.mrf.mxu0
      %v1573 = vadd.f32 0.0, %v1572
      %v1574 = vpop.f32.mrf.mxu0
      %v1575 = vadd.f32 0.0, %v1574
      %1576 = vmatmul.bf16.gmra.mxu0 %v1561
      %v1577 = vpop.f32.mrf.mxu0
      %v1578 = vadd.f32 0.0, %v1577
      %v1579 = vpop.f32.mrf.mxu0
      %v1580 = vadd.f32 0.0, %v1579
      %1581 = vdwg.mxu0
      %s1582 = scalar_lea.vmem %s165, 432
      %v1583 = vld [vmem:[%s1582] sm:$0xf]
      %v1584 = vld [vmem:[%s1582 + $0x4] sm:$0xf]
      %v1585 = vld [vmem:[%s1582 + $0x8] sm:$0xf]
      %v1586 = vld [vmem:[%s1582 + $0xc] sm:$0x3]
      %v1591 = vunpack.c.l.b16 %v1583
      %v1592 = vunpack.c.l.b16 %v1584
      %v1593 = vunpack.c.l.b16 %v1585
      %v1594 = vunpack.c.l.b16 %v1586
      %v1595 = vpack.c.b16 %v1592, %v1591
      %v1596 = vpack.c.b16 %v1594, %v1593
      %v1598 = vsel %vm202, %v1595, 0
      %v1601 = vsel %vm202, %v1596, 0
      %1603 = vmatpush.bf16.msra.mxu0 0
      %1604 = vmatpush.bf16.msra.mxu0 0
      %1605 = vmatpush.bf16.msra.mxu0 0
      %1606 = vmatpush.bf16.msra.mxu0 0
      %1607 = vmatpush.bf16.msra.mxu0 0
      %1608 = vmatpush.bf16.msra.mxu0 0
      %1609 = vmatpush.bf16.msra.mxu0 %v214
      %1610 = vmatpush.bf16.msra.mxu0 %v199
      %1611 = vmatmul.bf16.gmra.mxu0 %v1598
      %v1612 = vpop.f32.mrf.mxu0
      %v1613 = vadd.f32 0.0, %v1612
      %v1614 = vpop.f32.mrf.mxu0
      %v1615 = vadd.f32 0.0, %v1614
      %1616 = vmatmul.bf16.gmra.mxu0 %v1601
      %v1617 = vpop.f32.mrf.mxu0
      %v1618 = vadd.f32 0.0, %v1617
      %v1619 = vpop.f32.mrf.mxu0
      %v1620 = vadd.f32 0.0, %v1619
      %1621 = vdwg.mxu0
      %v1622 = vmax.f32 %v1573, %v1613
      %v1623 = vmax.f32 %v1575, %v1615
      %v1624 = vmax.f32 %v1578, %v1618
      %v1625 = vmax.f32 %v1580, %v1620
      %1626 = vst.msk [vmem:[#allocation2] sm:$0xff] %vm279, %v1622
      %1627 = vst.msk [vmem:[#allocation2 + $0x8] sm:$0xff] %vm279, %v1623
      %1628 = vst.msk [vmem:[#allocation2 + $0x10] sm:$0xff] %vm279, %v1624
      %1629 = vst.msk [vmem:[#allocation2 + $0x18] sm:$0xf] %vm283, %v1625
      %v1630 = vld [vmem:[#allocation2] ss:$2 sm:$0xff]
      %v1631 = vld [vmem:[%s286] ss:$2 sm:$0x3f]
      %v1632 = vld [vmem:[%s288] ss:$2 sm:$0xff]
      %v1633 = vld [vmem:[%s290] ss:$2 sm:$0x3f]
      %v1634 = vmax.f32 %v1630, %v1632
      %v1635 = vmax.f32 %v1631, %v1633
      %v1636 = vadd.f32 %v1634, %v295
      %v1637 = vadd.f32 %v1635, %v295
      %v1638 = vmax.f32 %v1636, 0.0
      %v1639 = vmax.f32 %v1637, 0.0
      %v1640 = vpack.c.bf16 %v1638, %v1638
      %v1641 = vpack.c.bf16 %v1639, %v1639
      %s1642 = scalar_lea.vmem %s170, 104
      %1643 = vst.msk [vmem:[%s1642] sm:$0xf] %vm283, %v1640
      %1644 = vst.msk [vmem:[%s1642 + $0x4] sm:$0x7] %vm304, %v1641
      %p1645 = scmp.lt.s32.totalorder %s14, 1
      %s1646 = scalar_select %p1645, %s14, 1
      %s1647 = smul.addr %s1646, 28
      %s1648 = smul.addr %s1647, 4
      %s1649 = scalar_lea.vmem %s3, %s1648
      // Predicated region
      $region33: #{lenet5_forward.3} parent=31 // pred_check
        %p1650 = pneg %p100
      $region34: #{lenet5_forward.3} parent=31 // pred_check_branch
        %1652 = sbr.rel (%p1650) target = $region36
      $region35: #{lenet5_forward.3} parent=31 // pred_region
        _
      $region36: #{lenet5_forward.3} parent=31 // pred_fallthru
        _
    $region32: #{lenet5_forward.3} parent=5 // pred_fallthru
      _
    %p1653 = scmp.le.s32.totalorder 2, %s9
    // Predicated region
    $region37: #{lenet5_forward.3} parent=5 // pred_check
      %p1654 = pneg %p1653
    $region38: #{lenet5_forward.3} parent=5 // pred_check_branch
      %1656 = sbr.rel (%p1654) target = $region40
    $region39: #{lenet5_forward.3} parent=5 // pred_region
      %s1657 = ssub.s32 %s9, 2
      // Predicated region
      $region41: #{lenet5_forward.3} parent=39 // pred_check
        %p1658 = pneg %p106
      $region42: #{lenet5_forward.3} parent=39 // pred_check_branch
        %1660 = sbr.rel (%p1658) target = $region44
      $region43: #{lenet5_forward.3} parent=39 // pred_region
        %p1661 = scmp.lt.s32.totalorder %s15, 1
        %s1662 = scalar_select %p1661, %s15, 1
        %s1663 = smul.addr %s1662, 28
        %s1664 = smul.addr %s1663, 4
        %s1665 = scalar_lea.vmem %s3, %s1664
      $region44: #{lenet5_forward.3} parent=39 // pred_fallthru
        _
    $region40: #{lenet5_forward.3} parent=5 // pred_fallthru
      _
  $region6: #{lenet5_forward.3} parent=0 // loop_footer
    %s13 = sadd.s32 1, %s9
  $region7: #{lenet5_forward.3} parent=0 // loop_footer_branch
    %8 = sbr.rel target = $region3
  $region8: #{lenet5_forward.3} parent=0 // loop_exit
    _

// kernel: lenet5_forward.5
$region0: #{lenet5_forward.5}
  #allocation0 [shape = 'u32[]', space=smem, size = 0x4, offset = 0x4, fixed_abs, tag = 'smem constant byte address 0x4 - core index']
  #allocation1 [shape = 'u32[72,128]{1,0:T(1,128)}', space=vmem, size = 0x9000, scoped, tag = 'internal scratch']
  %s0 = inlined_call_operand.vmem [shape: bf16[2,400], index: 0, kind: input, shape index: {}]
  %s1 = inlined_call_operand.vmem [shape: bf16[400,120], index: 1, kind: input, shape index: {}]
  %s2 = inlined_call_operand.vmem [shape: f32[1,120], index: 2, kind: input, shape index: {}]
  %s3 = inlined_call_operand.vmem [shape: bf16[120,84], index: 3, kind: input, shape index: {}]
  %s4 = inlined_call_operand.vmem [shape: f32[1,84], index: 4, kind: input, shape index: {}]
  %s5 = inlined_call_operand.vmem [shape: bf16[84,10], index: 5, kind: input, shape index: {}]
  %s6 = inlined_call_operand.vmem [shape: f32[1,10], index: 6, kind: input, shape index: {}]
  %s7 = inlined_call_operand.hbm [shape: f32[2,10], index: 7, kind: output, shape index: {}]
  %s8 = sld [smem:[#allocation0]]
  $region38: #{lenet5_forward.5} parent=0
    _
  %s10 = ssub.s32 1, %s8
  %s11 = scalar_select 0, %s10, %s8
  $region1: #{lenet5_forward.5} parent=0
    #allocation2 [shape = 'u8[1024]{0}', space=vmem, size = 0x400, scoped, tag = 'output window, operand 0, single buffered']
    #allocation3 [shape = 's32[1]{0}', space=sflag, size = 0x4, scoped, tag = 'scoped memory for lenet5_forward.5']
    %12 = vsyncpa [#allocation3], 0
    // Predicated region
    $region2: #{lenet5_forward.5} parent=1 // pred_check
      _
    $region3: #{lenet5_forward.5} parent=1 // pred_check_branch
      %14 = sbr.rel (0) target = $region5
    $region4: #{lenet5_forward.5} parent=1 // pred_region
      _
    $region5: #{lenet5_forward.5} parent=1 // pred_fallthru
      _
    // Predicated region
    $region6: #{lenet5_forward.5} parent=1 // pred_check
      _
    $region7: #{lenet5_forward.5} parent=1 // pred_check_branch
      %16 = sbr.rel (0) target = $region9
    $region8: #{lenet5_forward.5} parent=1 // pred_region
      _
    $region9: #{lenet5_forward.5} parent=1 // pred_fallthru
      _
    // Predicated region
    $region10: #{lenet5_forward.5} parent=1 // pred_check
      _
    $region11: #{lenet5_forward.5} parent=1 // pred_check_branch
      %18 = sbr.rel (0) target = $region13
    $region12: #{lenet5_forward.5} parent=1 // pred_region
      _
    $region13: #{lenet5_forward.5} parent=1 // pred_fallthru
      _
    // Predicated region
    $region14: #{lenet5_forward.5} parent=1 // pred_check
      _
    $region15: #{lenet5_forward.5} parent=1 // pred_check_branch
      %20 = sbr.rel (0) target = $region17
    $region16: #{lenet5_forward.5} parent=1 // pred_region
      _
    $region17: #{lenet5_forward.5} parent=1 // pred_fallthru
      _
    // Predicated region
    $region18: #{lenet5_forward.5} parent=1 // pred_check
      _
    $region19: #{lenet5_forward.5} parent=1 // pred_check_branch
      %22 = sbr.rel (0) target = $region21
    $region20: #{lenet5_forward.5} parent=1 // pred_region
      _
    $region21: #{lenet5_forward.5} parent=1 // pred_fallthru
      _
    // Predicated region
    $region22: #{lenet5_forward.5} parent=1 // pred_check
      _
    $region23: #{lenet5_forward.5} parent=1 // pred_check_branch
      %24 = sbr.rel (0) target = $region25
    $region24: #{lenet5_forward.5} parent=1 // pred_region
      _
    $region25: #{lenet5_forward.5} parent=1 // pred_fallthru
      _
    // Predicated region
    $region26: #{lenet5_forward.5} parent=1 // pred_check
      _
    $region27: #{lenet5_forward.5} parent=1 // pred_check_branch
      %26 = sbr.rel (0) target = $region29
    $region28: #{lenet5_forward.5} parent=1 // pred_region
      _
    $region29: #{lenet5_forward.5} parent=1 // pred_fallthru
      _
    %v28 = vld [vmem:[%s0] sm:$0xf]
    %v29 = vld [vmem:[%s1] sm:$0xf]
    %v30 = vld [vmem:[%s1 + $0x4] sm:$0xf]
    %v31 = vld [vmem:[%s1 + $0x8] sm:$0xf]
    %v32 = vld [vmem:[%s1 + $0xc] sm:$0xf]
    %v33 = vld [vmem:[%s1 + $0x10] sm:$0xf]
    %v34 = vld [vmem:[%s1 + $0x14] sm:$0xf]
    %v35 = vld [vmem:[%s1 + $0x18] sm:$0xf]
    %v36 = vld [vmem:[%s1 + $0x1c] sm:$0xf]
    %v37 = vld [vmem:[%s1 + $0x20] sm:$0xf]
    %v38 = vld [vmem:[%s1 + $0x24] sm:$0xf]
    %v39 = vld [vmem:[%s1 + $0x28] sm:$0xf]
    %v40 = vld [vmem:[%s1 + $0x2c] sm:$0xf]
    %v41 = vld [vmem:[%s1 + $0x30] sm:$0xf]
    %v42 = vld [vmem:[%s1 + $0x34] sm:$0xf]
    %v43 = vld [vmem:[%s1 + $0x38] sm:$0xf]
    %v44 = vld [vmem:[%s1 + $0x3c] sm:$0xf]
    %v45 = vld [vmem:[%s1 + $0x40] sm:$0xf]
    %v46 = vld [vmem:[%s1 + $0x44] sm:$0xf]
    %v47 = vld [vmem:[%s1 + $0x48] sm:$0xf]
    %v48 = vld [vmem:[%s1 + $0x4c] sm:$0xf]
    %v49 = vld [vmem:[%s1 + $0x50] sm:$0xf]
    %v50 = vld [vmem:[%s1 + $0x54] sm:$0xf]
    %v51 = vld [vmem:[%s1 + $0x58] sm:$0xf]
    %v52 = vld [vmem:[%s1 + $0x5c] sm:$0xf]
    %v53 = vld [vmem:[%s1 + $0x60] sm:$0xf]
    %v54 = vld [vmem:[%s1 + $0x64] sm:$0xf]
    %v55 = vld [vmem:[%s1 + $0x68] sm:$0xf]
    %v56 = vld [vmem:[%s1 + $0x6c] sm:$0xf]
    %v57 = vld [vmem:[%s1 + $0x70] sm:$0xf]
    %v58 = vld [vmem:[%s1 + $0x74] sm:$0xf]
    %v59 = vld [vmem:[%s1 + $0x78] sm:$0xf]
    %v60 = vld [vmem:[%s1 + $0x7c] sm:$0xf]
    %v61 = vld [vmem:[%s1 + $0x80] sm:$0xf]
    %v62 = vld [vmem:[%s1 + $0x84] sm:$0xf]
    %v63 = vld [vmem:[%s1 + $0x88] sm:$0xf]
    %v64 = vld [vmem:[%s1 + $0x8c] sm:$0xf]
    %v65 = vld [vmem:[%s1 + $0x90] sm:$0xf]
    %v66 = vld [vmem:[%s1 + $0x94] sm:$0xf]
    %v67 = vld [vmem:[%s1 + $0x98] sm:$0xf]
    %v68 = vld [vmem:[%s1 + $0x9c] sm:$0xf]
    %v69 = vld [vmem:[%s1 + $0xa0] sm:$0xf]
    %v70 = vld [vmem:[%s1 + $0xa4] sm:$0xf]
    %v71 = vld [vmem:[%s1 + $0xa8] sm:$0xf]
    %v72 = vld [vmem:[%s1 + $0xac] sm:$0xf]
    %v73 = vld [vmem:[%s1 + $0xb0] sm:$0xf]
    %v74 = vld [vmem:[%s1 + $0xb4] sm:$0xf]
    %v75 = vld [vmem:[%s1 + $0xb8] sm:$0xf]
    %v76 = vld [vmem:[%s1 + $0xbc] sm:$0xf]
    %v77 = vld [vmem:[%s1 + $0xc0] sm:$0xf]
    %v78 = vld [vmem:[%s1 + $0xc4] sm:$0xf]
    %v79 = vld [vmem:[%s2] sm:$0x1]
    %v81 = vperm.slane %v79, 0
    %84 = vst [vmem:[#allocation1] ss:$9 sm:$0xff] %v28
    %v85 = vld [vmem:[#allocation1] sm:$0xff]
    %v86 = vld [vmem:[#allocation1 + $0x9] sm:$0xff]
    %v87 = vld [vmem:[#allocation1 + $0x12] sm:$0xff]
    %v88 = vld [vmem:[#allocation1 + $0x1b] sm:$0xff]
    %v142 = vunpack.c.l.b16 %v29
    %v143 = vunpack.c.l.b16 %v30
    %v144 = vunpack.c.l.b16 %v31
    %v145 = vunpack.c.l.b16 %v32
    %v146 = vunpack.c.l.b16 %v33
    %v147 = vunpack.c.l.b16 %v34
    %v148 = vunpack.c.l.b16 %v35
    %v149 = vunpack.c.l.b16 %v36
    %v150 = vunpack.c.l.b16 %v37
    %v151 = vunpack.c.l.b16 %v38
    %v152 = vunpack.c.l.b16 %v39
    %v153 = vunpack.c.l.b16 %v40
    %v154 = vunpack.c.l.b16 %v41
    %v155 = vunpack.c.l.b16 %v42
    %v156 = vunpack.c.l.b16 %v43
    %v157 = vunpack.c.l.b16 %v44
    %v158 = vunpack.c.l.b16 %v45
    %v159 = vunpack.c.l.b16 %v46
    %v160 = vunpack.c.l.b16 %v47
    %v161 = vunpack.c.l.b16 %v48
    %v162 = vunpack.c.l.b16 %v49
    %v163 = vunpack.c.l.b16 %v50
    %v164 = vunpack.c.l.b16 %v51
    %v165 = vunpack.c.l.b16 %v52
    %v166 = vunpack.c.l.b16 %v53
    %v167 = vunpack.c.l.b16 %v54
    %v168 = vunpack.c.l.b16 %v55
    %v169 = vunpack.c.l.b16 %v56
    %v170 = vunpack.c.l.b16 %v57
    %v171 = vunpack.c.l.b16 %v58
    %v172 = vunpack.c.l.b16 %v59
    %v173 = vunpack.c.l.b16 %v60
    %v174 = vunpack.c.l.b16 %v61
    %v175 = vunpack.c.l.b16 %v62
    %v176 = vunpack.c.l.b16 %v63
    %v177 = vunpack.c.l.b16 %v64
    %v178 = vunpack.c.l.b16 %v65
    %v179 = vunpack.c.l.b16 %v66
    %v180 = vunpack.c.l.b16 %v67
    %v181 = vunpack.c.l.b16 %v68
    %v182 = vunpack.c.l.b16 %v69
    %v183 = vunpack.c.l.b16 %v70
    %v184 = vunpack.c.l.b16 %v71
    %v185 = vunpack.c.l.b16 %v72
    %v186 = vunpack.c.l.b16 %v73
    %v187 = vunpack.c.l.b16 %v74
    %v188 = vunpack.c.l.b16 %v75
    %v189 = vunpack.c.l.b16 %v76
    %v190 = vunpack.c.l.b16 %v77
    %v191 = vunpack.c.l.b16 %v78
    %v192 = vpack.c.b16 %v143, %v142
    %v193 = vpack.c.b16 %v145, %v144
    %v194 = vpack.c.b16 %v147, %v146
    %v195 = vpack.c.b16 %v149, %v148
    %v196 = vpack.c.b16 %v151, %v150
    %v197 = vpack.c.b16 %v153, %v152
    %v198 = vpack.c.b16 %v155, %v154
    %v199 = vpack.c.b16 %v157, %v156
    %v200 = vpack.c.b16 %v159, %v158
    %v201 = vpack.c.b16 %v161, %v160
    %v202 = vpack.c.b16 %v163, %v162
    %v203 = vpack.c.b16 %v165, %v164
    %v204 = vpack.c.b16 %v167, %v166
    %v205 = vpack.c.b16 %v169, %v168
    %v206 = vpack.c.b16 %v171, %v170
    %v207 = vpack.c.b16 %v173, %v172
    %v208 = vpack.c.b16 %v175, %v174
    %v209 = vpack.c.b16 %v177, %v176
    %v210 = vpack.c.b16 %v179, %v178
    %v211 = vpack.c.b16 %v181, %v180
    %v212 = vpack.c.b16 %v183, %v182
    %v213 = vpack.c.b16 %v185, %v184
    %v214 = vpack.c.b16 %v187, %v186
    %v215 = vpack.c.b16 %v189, %v188
    %v216 = vpack.c.b16 %v191, %v190
    %vm242 = vcmask 130048
    %v243 = vsel %vm242, %v88, 0
    %245 = vmatpush.bf16.msra.mxu0 %v199
    %246 = vmatpush.bf16.msra.mxu0 %v198
    %247 = vmatpush.bf16.msra.mxu0 %v197
    %248 = vmatpush.bf16.msra.mxu0 %v196
    %249 = vmatpush.bf16.msra.mxu0 %v195
    %250 = vmatpush.bf16.msra.mxu0 %v194
    %251 = vmatpush.bf16.msra.mxu0 %v193
    %252 = vmatpush.bf16.msra.mxu0 %v192
    %253 = vmatmul.bf16.gmra.mxu0 %v85
    %v254 = vpop.f32.mrf.mxu0
    %v255 = vadd.f32 %v81, %v254
    %v256 = vpop.f32.mrf.mxu0
    %257 = vdwg.mxu0
    %258 = vmatpush.bf16.msra.mxu0 %v207
    %259 = vmatpush.bf16.msra.mxu0 %v206
    %260 = vmatpush.bf16.msra.mxu0 %v205
    %261 = vmatpush.bf16.msra.mxu0 %v204
    %262 = vmatpush.bf16.msra.mxu0 %v203
    %263 = vmatpush.bf16.msra.mxu0 %v202
    %264 = vmatpush.bf16.msra.mxu0 %v201
    %265 = vmatpush.bf16.msra.mxu0 %v200
    %266 = vmatmul.bf16.gmra.mxu0 %v86
    %v267 = vpop.f32.mrf.mxu0
    %v268 = vadd.f32 %v255, %v267
    %v269 = vpop.f32.mrf.mxu0
    %270 = vdwg.mxu0
    %271 = vmatpush.bf16.msra.mxu0 %v215
    %272 = vmatpush.bf16.msra.mxu0 %v214
    %273 = vmatpush.bf16.msra.mxu0 %v213
    %274 = vmatpush.bf16.msra.mxu0 %v212
    %275 = vmatpush.bf16.msra.mxu0 %v211
    %276 = vmatpush.bf16.msra.mxu0 %v210
    %277 = vmatpush.bf16.msra.mxu0 %v209
    %278 = vmatpush.bf16.msra.mxu0 %v208
    %279 = vmatmul.bf16.gmra.mxu0 %v87
    %v280 = vpop.f32.mrf.mxu0
    %v281 = vadd.f32 %v268, %v280
    %v282 = vpop.f32.mrf.mxu0
    %283 = vdwg.mxu0
    %284 = vmatpush.bf16.msra.mxu0 0
    %285 = vmatpush.bf16.msra.mxu0 0
    %286 = vmatpush.bf16.msra.mxu0 0
    %287 = vmatpush.bf16.msra.mxu0 0
    %288 = vmatpush.bf16.msra.mxu0 0
    %289 = vmatpush.bf16.msra.mxu0 0
    %290 = vmatpush.bf16.msra.mxu0 0
    %291 = vmatpush.bf16.msra.mxu0 %v216
    %292 = vmatmul.bf16.gmra.mxu0 %v243
    %v293 = vpop.f32.mrf.mxu0
    %v294 = vadd.f32 %v281, %v293
    %v295 = vpop.f32.mrf.mxu0
    %296 = vdwg.mxu0
    %v297 = vsub.f32 0.0, %v294
    %v298 = vmul.f32 %v297, 1.442695
    %v299 = vpow.pop %v298
    %v300 = vadd.f32 %v299, 1.0
    %v301 = vrcp.pop %v300
    %v302 = vpack.c.bf16 %v301, %v301
    %v303 = vld [vmem:[%s3] sm:$0xf]
    %v304 = vld [vmem:[%s3 + $0x4] sm:$0xf]
    %v305 = vld [vmem:[%s3 + $0x8] sm:$0xf]
    %v306 = vld [vmem:[%s3 + $0xc] sm:$0xf]
    %v307 = vld [vmem:[%s3 + $0x10] sm:$0xf]
    %v308 = vld [vmem:[%s3 + $0x14] sm:$0xf]
    %v309 = vld [vmem:[%s3 + $0x18] sm:$0xf]
    %v310 = vld [vmem:[%s3 + $0x1c] sm:$0xf]
    %v311 = vld [vmem:[%s3 + $0x20] sm:$0xf]
    %v312 = vld [vmem:[%s3 + $0x24] sm:$0xf]
    %v313 = vld [vmem:[%s3 + $0x28] sm:$0xf]
    %v314 = vld [vmem:[%s3 + $0x2c] sm:$0xf]
    %v315 = vld [vmem:[%s3 + $0x30] sm:$0xf]
    %v316 = vld [vmem:[%s3 + $0x34] sm:$0xf]
    %v317 = vld [vmem:[%s3 + $0x38] sm:$0xf]
    %v318 = vld [vmem:[%s4] sm:$0x1]
    %v320 = vperm.slane %v318, 0
    %v337 = vunpack.c.l.b16 %v303
    %v338 = vunpack.c.l.b16 %v304
    %v339 = vunpack.c.l.b16 %v305
    %v340 = vunpack.c.l.b16 %v306
    %v341 = vunpack.c.l.b16 %v307
    %v342 = vunpack.c.l.b16 %v308
    %v343 = vunpack.c.l.b16 %v309
    %v344 = vunpack.c.l.b16 %v310
    %v345 = vunpack.c.l.b16 %v311
    %v346 = vunpack.c.l.b16 %v312
    %v347 = vunpack.c.l.b16 %v313
    %v348 = vunpack.c.l.b16 %v314
    %v349 = vunpack.c.l.b16 %v315
    %v350 = vunpack.c.l.b16 %v316
    %v351 = vunpack.c.l.b16 %v317
    %v352 = vpack.c.b16 %v338, %v337
    %v353 = vpack.c.b16 %v340, %v339
    %v354 = vpack.c.b16 %v342, %v341
    %v355 = vpack.c.b16 %v344, %v343
    %v356 = vpack.c.b16 %v346, %v345
    %v357 = vpack.c.b16 %v348, %v347
    %v358 = vpack.c.b16 %v350, %v349
    %v359 = vpack.c.b16 %v351, %v351
    %vm367 = vcmask 982016
    %v369 = vsel %vm367, %v302, 0
    %vm371 = vcmask 1043456
    %v373 = vsel %vm371, %v359, 0
    %375 = vmatpush.bf16.msra.mxu0 %v373
    %376 = vmatpush.bf16.msra.mxu0 %v358
    %377 = vmatpush.bf16.msra.mxu0 %v357
    %378 = vmatpush.bf16.msra.mxu0 %v356
    %379 = vmatpush.bf16.msra.mxu0 %v355
    %380 = vmatpush.bf16.msra.mxu0 %v354
    %381 = vmatpush.bf16.msra.mxu0 %v353
    %382 = vmatpush.bf16.msra.mxu0 %v352
    %383 = vmatmul.bf16.gmra.mxu0 %v369
    %v384 = vpop.f32.mrf.mxu0
    %v385 = vadd.f32 %v320, %v384
    %v386 = vpop.f32.mrf.mxu0
    %387 = vdwg.mxu0
    %v388 = vsub.f32 0.0, %v385
    %v389 = vmul.f32 %v388, 1.442695
    %v390 = vpow.pop %v389
    %v391 = vadd.f32 %v390, 1.0
    %v392 = vrcp.pop %v391
    %v393 = vpack.c.bf16 %v392, %v392
    %v394 = vld [vmem:[%s5] sm:$0xf]
    %v395 = vld [vmem:[%s5 + $0x4] sm:$0xf]
    %v396 = vld [vmem:[%s5 + $0x8] sm:$0xf]
    %v397 = vld [vmem:[%s5 + $0xc] sm:$0xf]
    %v398 = vld [vmem:[%s5 + $0x10] sm:$0xf]
    %v399 = vld [vmem:[%s5 + $0x14] sm:$0xf]
    %v400 = vld [vmem:[%s5 + $0x18] sm:$0xf]
    %v401 = vld [vmem:[%s5 + $0x1c] sm:$0xf]
    %v402 = vld [vmem:[%s5 + $0x20] sm:$0xf]
    %v403 = vld [vmem:[%s5 + $0x24] sm:$0xf]
    %v404 = vld [vmem:[%s5 + $0x28] sm:$0x3]
    %v405 = vld [vmem:[%s6] sm:$0x1]
    %v407 = vperm.slane %v405, 0
    %v420 = vunpack.c.l.b16 %v394
    %v421 = vunpack.c.l.b16 %v395
    %v422 = vunpack.c.l.b16 %v396
    %v423 = vunpack.c.l.b16 %v397
    %v424 = vunpack.c.l.b16 %v398
    %v425 = vunpack.c.l.b16 %v399
    %v426 = vunpack.c.l.b16 %v400
    %v427 = vunpack.c.l.b16 %v401
    %v428 = vunpack.c.l.b16 %v402
    %v429 = vunpack.c.l.b16 %v403
    %v430 = vunpack.c.l.b16 %v404
    %v431 = vpack.c.b16 %v421, %v420
    %v432 = vpack.c.b16 %v423, %v422
    %v433 = vpack.c.b16 %v425, %v424
    %v434 = vpack.c.b16 %v427, %v426
    %v435 = vpack.c.b16 %v429, %v428
    %v436 = vpack.c.b16 %v430, %v430
    %vm442 = vcmask 687104
    %v444 = vsel %vm442, %v393, 0
    %vm446 = vcmask 1041408
    %v448 = vsel %vm446, %v436, 0
    %450 = vmatpush.bf16.msra.mxu0 0
    %451 = vmatpush.bf16.msra.mxu0 0
    %452 = vmatpush.bf16.msra.mxu0 %v448
    %453 = vmatpush.bf16.msra.mxu0 %v435
    %454 = vmatpush.bf16.msra.mxu0 %v434
    %455 = vmatpush.bf16.msra.mxu0 %v433
    %456 = vmatpush.bf16.msra.mxu0 %v432
    %457 = vmatpush.bf16.msra.mxu0 %v431
    %458 = vmatmul.bf16.gmra.mxu0 %v444
    %v459 = vpop.f32.mrf.mxu0
    %v460 = vadd.f32 %v407, %v459
    %v461 = vpop.f32.mrf.mxu0
    %462 = vdwg.mxu0
    %vm463 = vcmask 74752
    %464 = vst.msk [vmem:[#allocation2] sm:$0x3] %vm463, %v460
    // Predicated region
    $region30: #{lenet5_forward.5} parent=1 // pred_check
      _
    $region31: #{lenet5_forward.5} parent=1 // pred_check_branch
      %466 = sbr.rel (0) target = $region33
    $region32: #{lenet5_forward.5} parent=1 // pred_region
      %468 = vsyncadd [#allocation3], 0
      %s470 = sshll.u32 [#allocation2], 4
      %s471 = int_to_ptr.vmem [resolvable:$true] %s470
      %s472 = sshll.u32 %s7, 4
      %s473 = int_to_ptr.hbm [resolvable:$true] %s472
      %475 = dma.vmem_to_hbm [thread:$0]  %s471, 32, %s473, [#allocation3]
    $region33: #{lenet5_forward.5} parent=1 // pred_fallthru
      _
    // Predicated region
    $region34: #{lenet5_forward.5} parent=1 // pred_check
      _
    $region35: #{lenet5_forward.5} parent=1 // pred_check_branch
      %477 = sbr.rel (0) target = $region37
    $region36: #{lenet5_forward.5} parent=1 // pred_region
      %479 = dma.done [#allocation3], 32
    $region37: #{lenet5_forward.5} parent=1 // pred_fallthru
      _
    %480 = vsyncpa [#allocation3], 1

</llo_original>
